<compile_context>
chip_gen: v7x
topology: tpu7x:2x2x1
jax: 0.10.0
libtpu: 0.0.40
codegen_flags: <defaults>
</compile_context>

<pallas_src>
import jax
import jax.numpy as jnp
from jax.experimental import pallas as pl
from jax.experimental.pallas import tpu as pltpu

DIM = 256
N_LAYERS = 8           # total linear layers
N_MID = N_LAYERS - 2   # 6 middle 256->256 linears
IN_DIM = 4             # two-sphere parameterization dim
N_VEC = 1 + N_MID + 1  # packed columns: b0, bmid[0..5], wlast


def _round_up(x, m):
    return ((x + m - 1) // m) * m


# ------------------------- Pallas MLP kernel -------------------------------
def mlp_kernel(x_ref, w0_ref, vecs_ref, wmid_ref, blast_ref, o_ref):
    """Transposed-activation 8-layer MLP (rays along the lane axis).

    x_ref    : (IN_DIM, tm) f32   two-sphere params, lane-dense
    w0_ref   : (DIM, IN_DIM) f32  layer-0 weight, transposed
    vecs_ref : (DIM, N_VEC) f32   col 0 = b0, cols 1..6 = mid biases, col 7 = wlast
    wmid_ref : (N_MID, DIM, DIM) bf16  transposed mid-layer weights (resident)
    blast_ref: (1,) f32 in SMEM   last-layer bias scalar
    o_ref    : (1, tm) f32        lane-dense output row
    """
    x = x_ref[...]
    w0 = w0_ref[...]

    # Layer 0 (K=4): 4 rank-1 updates on the VPU instead of a ~96%-idle MXU pass.
    acc = w0[:, 0:1] * x[0:1, :]
    for k in range(1, IN_DIM):                       # static unroll
        acc = acc + w0[:, k:k + 1] * x[k:k + 1, :]
    h = acc + vecs_ref[:, 0:1]                       # + b0 (lane broadcast)

    # 6 middle 256x256 layers on the MXU: bf16 operands / f32 accumulation.
    # Bias-add + ReLU stay in f32 on the VPU; the loop-carried activation is
    # bf16, halving inter-layer VMEM traffic.
    hb = jnp.maximum(h, 0.0).astype(jnp.bfloat16)
    for i in range(N_MID):                           # static unroll
        h = jnp.dot(wmid_ref[i], hb, preferred_element_type=jnp.float32)
        h = jnp.maximum(h + vecs_ref[:, 1 + i:2 + i], 0.0)
        hb = h.astype(jnp.bfloat16)                  # dead in last iter (DCE)

    # Final Linear(256 -> 1): VPU broadcast-mul + sublane (XLU) reduction,
    # keeping the MXU free of a mostly-wasted K-reduction pass.
    wlast = vecs_ref[:, 1 + N_MID:2 + N_MID]         # (DIM, 1)
    o_ref[...] = jnp.sum(h * wlast, axis=0, keepdims=True) + blast_ref[0]


def mlp_pallas(x_t, params, n, *, tm_max=2048):
    """x_t: (IN_DIM, n) two-sphere params with rays along the last axis."""
    w0t, vecs, wmid_t, blast = params
    n128 = _round_up(n, 128)
    # Largest 128-aligned tile <= tm_max, capped so there are >= 2 grid steps
    # whenever possible (lets ("parallel",) use both v7x TensorCores).
    tm = min(tm_max, _round_up(pl.cdiv(n128, 2), 128))
    n_pad = _round_up(n, tm)
    if n_pad != n:
        x_t = jnp.pad(x_t, ((0, 0), (0, n_pad - n)))
    grid = (n_pad // tm,)

    out = pl.pallas_call(
        mlp_kernel,
        out_shape=jax.ShapeDtypeStruct((1, n_pad), jnp.float32),
        grid_spec=pltpu.PrefetchScalarGridSpec(
            num_scalar_prefetch=0,
            grid=grid,
            in_specs=[
                pl.BlockSpec((IN_DIM, tm), lambda i: (0, i)),          # x tile
                pl.BlockSpec((DIM, IN_DIM), lambda i: (0, 0)),         # w0^T
                pl.BlockSpec((DIM, N_VEC), lambda i: (0, 0)),          # biases+wlast
                pl.BlockSpec((N_MID, DIM, DIM), lambda i: (0, 0, 0)),  # mid weights
                pl.BlockSpec(memory_space=pltpu.MemorySpace.SMEM),     # blast scalar
            ],
            out_specs=pl.BlockSpec((1, tm), lambda i: (0, i)),
        ),
        compiler_params=pltpu.CompilerParams(
            dimension_semantics=("parallel",),
            vmem_limit_bytes=48 * 1024 * 1024),
    )(x_t, w0t, vecs, wmid_t, blast)
    return out[0, :n][:, None]                       # (n, 1)


# ------------------------- TwoSphere.ray2param (plain JAX glue) -------------
def ray2param(rays, radius=1.0):
    """Two-sphere parameterization: intersect ray with a sphere of `radius`,
    return the two hit points as normalized spherical angles (N, 4), plus the
    two ray distances d (N, 2)."""
    o, v = rays[..., :3], rays[..., 3:]
    v = v / (jnp.linalg.norm(v, axis=-1, keepdims=True) + 1e-8)
    b = jnp.sum(o * v, axis=-1)
    c = jnp.sum(o * o, axis=-1) - radius ** 2
    disc = jnp.maximum(b * b - c, 0.0)
    sq = jnp.sqrt(disc)
    t0, t1 = -b - sq, -b + sq
    p0 = o + t0[..., None] * v
    p1 = o + t1[..., None] * v

    def angles(p):
        pn = p / (jnp.linalg.norm(p, axis=-1, keepdims=True) + 1e-8)
        theta = jnp.arccos(jnp.clip(pn[..., 2], -1.0, 1.0)) / jnp.pi
        phi = (jnp.arctan2(pn[..., 1], pn[..., 0]) + jnp.pi) / (2.0 * jnp.pi)
        return jnp.stack([theta, phi], axis=-1)

    x = jnp.concatenate([angles(p0), angles(p1)], axis=-1)  # (N, 4)
    d = jnp.stack([t0, t1], axis=-1)                        # (N, 2)
    return x, d


# ------------------------- parameter init -----------------------------------
def init_params(key):
    ks = jax.random.split(key, 2 * N_LAYERS)

    def linear(kw, kb, fan_in, fan_out):
        bound = 1.0 / jnp.sqrt(fan_in)
        w = jax.random.uniform(kw, (fan_in, fan_out), jnp.float32, -bound, bound)
        b = jax.random.uniform(kb, (fan_out,), jnp.float32, -bound, bound)
        return w, b

    w0, b0 = linear(ks[0], ks[1], IN_DIM, DIM)          # (4,256), (256,)
    wmid_t, bmid = [], []
    for i in range(N_MID):
        w, b = linear(ks[2 + 2 * i], ks[3 + 2 * i], DIM, DIM)
        wmid_t.append(w.T)                              # store transposed
        bmid.append(b)
    wlast, blast = linear(ks[-2], ks[-1], DIM, 1)       # (256,1), (1,)

    w0t = w0.T                                          # (DIM, IN_DIM) f32 (VPU layer 0)
    wmid_t = jnp.stack(wmid_t).astype(jnp.bfloat16)     # (N_MID, DIM, DIM) bf16 (MXU)
    # Pack all small per-feature column vectors into one lane-padded VMEM tile:
    # col 0 = b0, cols 1..N_MID = mid biases, col N_MID+1 = last-layer weight.
    vecs = jnp.stack([b0] + bmid + [wlast[:, 0]], axis=1)  # (DIM, N_VEC) f32
    return w0t, vecs, wmid_t, blast                     # blast: (1,) f32 -> SMEM


# ------------------------- Model forward ------------------------------------
def model_forward(rays, params):
    x, _d = ray2param(rays)             # no_grad geometry glue, (N, 4)
    x_t = x.T                           # rays along lanes for the kernel
    return mlp_pallas(x_t, params, rays.shape[0])       # (N, 1)


def model_forward_ref(rays, params):
    """Pure-JAX reference using identical numerics (bf16 operands, f32 acc)."""
    w0t, vecs, wmid_t, blast = params
    x, _ = ray2param(rays)
    xt = x.T                                            # (4, N)
    acc = w0t[:, 0:1] * xt[0:1, :]
    for k in range(1, IN_DIM):
        acc = acc + w0t[:, k:k + 1] * xt[k:k + 1, :]
    h = acc + vecs[:, 0:1]
    hb = jnp.maximum(h, 0.0).astype(jnp.bfloat16)
    for i in range(N_MID):
        h = jnp.dot(wmid_t[i], hb, preferred_element_type=jnp.float32)
        h = jnp.maximum(h + vecs[:, 1 + i:2 + i], 0.0)
        hb = h.astype(jnp.bfloat16)
    out = jnp.sum(h * vecs[:, 1 + N_MID:2 + N_MID], axis=0, keepdims=True) + blast[0]
    return out[0][:, None]


if __name__ == "__main__":
    key = jax.random.PRNGKey(0)
    kp, kr = jax.random.split(key)
    params = init_params(kp)

    N = 300  # small, deliberately not a multiple of 128 to exercise padding
    origins = jax.random.normal(kr, (N, 3), jnp.float32) * 0.1
    dirs = jax.random.normal(jax.random.fold_in(kr, 1), (N, 3), jnp.float32)
    rays = jnp.concatenate([origins, dirs], axis=-1)    # (N, 6)

    fwd = jax.jit(model_forward)
    out = jax.block_until_ready(fwd(rays, params))

    ref = model_forward_ref(rays, params)
    assert out.shape == (N, 1)
    assert jnp.allclose(out, ref, atol=2e-3, rtol=2e-3), "mismatch vs reference"
    print("KERNEL_OK")
</pallas_src>

<mosaic_0001>
module attributes {stable_mosaic.version = 11 : i64} {
  func.func @mlp_kernel(%arg0: i32, %arg1: memref<4x256xf32, #tpu.memory_space<vmem>>, %arg2: memref<256x4xf32, #tpu.memory_space<vmem>>, %arg3: memref<256x8xf32, #tpu.memory_space<vmem>>, %arg4: memref<6x256x256xbf16, #tpu.memory_space<vmem>>, %arg5: memref<1xf32, #tpu.memory_space<smem>>, %arg6: memref<1x256xf32, #tpu.memory_space<vmem>>) attributes {dimension_semantics = [#tpu.dimension_semantics<parallel>], iteration_bounds = array<i64: 2>, scalar_prefetch = 0 : i64, scratch_operands = 0 : i64, tpu.core_type = #tpu.core_type<tc>, window_params = [{transform_indices = @transform_0, window_bounds = array<i64: 4, 256>}, {pipeline_mode = #tpu.pipeline_mode<synchronous>, transform_indices = @transform_1, window_bounds = array<i64: 256, 4>}, {pipeline_mode = #tpu.pipeline_mode<synchronous>, transform_indices = @transform_2, window_bounds = array<i64: 256, 8>}, {pipeline_mode = #tpu.pipeline_mode<synchronous>, transform_indices = @transform_3, window_bounds = array<i64: 6, 256, 256>}, {transform_indices = @transform_4, window_bounds = array<i64: 1>}, {transform_indices = @transform_5, window_bounds = array<i64: 1, 256>}]} {
    %c0 = arith.constant 0 : index
    %c0_0 = arith.constant 0 : index
    %0 = vector.load %arg1[%c0, %c0_0] : memref<4x256xf32, #tpu.memory_space<vmem>>, vector<4x256xf32>
    %c0_1 = arith.constant 0 : index
    %c0_2 = arith.constant 0 : index
    %1 = vector.load %arg2[%c0_1, %c0_2] : memref<256x4xf32, #tpu.memory_space<vmem>>, vector<256x4xf32>
    %2 = vector.extract_strided_slice %1 {offsets = [0, 0], sizes = [256, 1], strides = [1, 1]} : vector<256x4xf32> to vector<256x1xf32>
    %3 = vector.extract_strided_slice %0 {offsets = [0, 0], sizes = [1, 256], strides = [1, 1]} : vector<4x256xf32> to vector<1x256xf32>
    %4 = vector.broadcast %2 : vector<256x1xf32> to vector<256x256xf32>
    %5 = vector.broadcast %3 : vector<1x256xf32> to vector<256x256xf32>
    %6 = arith.mulf %4, %5 : vector<256x256xf32>
    %7 = vector.extract_strided_slice %1 {offsets = [0, 1], sizes = [256, 1], strides = [1, 1]} : vector<256x4xf32> to vector<256x1xf32>
    %8 = vector.extract_strided_slice %0 {offsets = [1, 0], sizes = [1, 256], strides = [1, 1]} : vector<4x256xf32> to vector<1x256xf32>
    %9 = vector.broadcast %7 : vector<256x1xf32> to vector<256x256xf32>
    %10 = vector.broadcast %8 : vector<1x256xf32> to vector<256x256xf32>
    %11 = arith.mulf %9, %10 : vector<256x256xf32>
    %12 = arith.addf %6, %11 : vector<256x256xf32>
    %13 = vector.extract_strided_slice %1 {offsets = [0, 2], sizes = [256, 1], strides = [1, 1]} : vector<256x4xf32> to vector<256x1xf32>
    %14 = vector.extract_strided_slice %0 {offsets = [2, 0], sizes = [1, 256], strides = [1, 1]} : vector<4x256xf32> to vector<1x256xf32>
    %15 = vector.broadcast %13 : vector<256x1xf32> to vector<256x256xf32>
    %16 = vector.broadcast %14 : vector<1x256xf32> to vector<256x256xf32>
    %17 = arith.mulf %15, %16 : vector<256x256xf32>
    %18 = arith.addf %12, %17 : vector<256x256xf32>
    %19 = vector.extract_strided_slice %1 {offsets = [0, 3], sizes = [256, 1], strides = [1, 1]} : vector<256x4xf32> to vector<256x1xf32>
    %20 = vector.extract_strided_slice %0 {offsets = [3, 0], sizes = [1, 256], strides = [1, 1]} : vector<4x256xf32> to vector<1x256xf32>
    %21 = vector.broadcast %19 : vector<256x1xf32> to vector<256x256xf32>
    %22 = vector.broadcast %20 : vector<1x256xf32> to vector<256x256xf32>
    %23 = arith.mulf %21, %22 : vector<256x256xf32>
    %24 = arith.addf %18, %23 : vector<256x256xf32>
    %c0_3 = arith.constant 0 : index
    %c0_4 = arith.constant 0 : index
    %25 = vector.load %arg3[%c0_3, %c0_4] : memref<256x8xf32, #tpu.memory_space<vmem>>, vector<256x1xf32>
    %26 = vector.broadcast %25 : vector<256x1xf32> to vector<256x256xf32>
    %27 = arith.addf %24, %26 : vector<256x256xf32>
    %cst = arith.constant 0.000000e+00 : f32
    %28 = vector.broadcast %cst : f32 to vector<256x256xf32>
    %29 = arith.maximumf %27, %28 : vector<256x256xf32>
    %30 = arith.truncf %29 : vector<256x256xf32> to vector<256x256xbf16>
    %c0_5 = arith.constant 0 : index
    %c0_6 = arith.constant 0 : index
    %c0_7 = arith.constant 0 : index
    %31 = vector.load %arg4[%c0_5, %c0_6, %c0_7] : memref<6x256x256xbf16, #tpu.memory_space<vmem>>, vector<1x256x256xbf16>
    %32 = vector.shape_cast %31 : vector<1x256x256xbf16> to vector<256x256xbf16>
    %cst_8 = arith.constant dense<0.000000e+00> : vector<256x256xf32>
    %33 = tpu.matmul %32, %30, %cst_8 {dimension_numbers = #tpu.dot_dimension_numbers<[1], [0], [0], [1], [0, 0, 1, 1], [], []>} : vector<256x256xbf16>, vector<256x256xbf16>, vector<256x256xf32> -> vector<256x256xf32>
    %c0_9 = arith.constant 0 : index
    %c1 = arith.constant 1 : index
    %34 = vector.load %arg3[%c0_9, %c1] : memref<256x8xf32, #tpu.memory_space<vmem>>, vector<256x1xf32>
    %35 = vector.broadcast %34 : vector<256x1xf32> to vector<256x256xf32>
    %36 = arith.addf %33, %35 : vector<256x256xf32>
    %cst_10 = arith.constant 0.000000e+00 : f32
    %37 = vector.broadcast %cst_10 : f32 to vector<256x256xf32>
    %38 = arith.maximumf %36, %37 : vector<256x256xf32>
    %39 = arith.truncf %38 : vector<256x256xf32> to vector<256x256xbf16>
    %c1_11 = arith.constant 1 : index
    %c0_12 = arith.constant 0 : index
    %c0_13 = arith.constant 0 : index
    %40 = vector.load %arg4[%c1_11, %c0_12, %c0_13] : memref<6x256x256xbf16, #tpu.memory_space<vmem>>, vector<1x256x256xbf16>
    %41 = vector.shape_cast %40 : vector<1x256x256xbf16> to vector<256x256xbf16>
    %cst_14 = arith.constant dense<0.000000e+00> : vector<256x256xf32>
    %42 = tpu.matmul %41, %39, %cst_14 {dimension_numbers = #tpu.dot_dimension_numbers<[1], [0], [0], [1], [0, 0, 1, 1], [], []>} : vector<256x256xbf16>, vector<256x256xbf16>, vector<256x256xf32> -> vector<256x256xf32>
    %c0_15 = arith.constant 0 : index
    %c2 = arith.constant 2 : index
    %43 = vector.load %arg3[%c0_15, %c2] : memref<256x8xf32, #tpu.memory_space<vmem>>, vector<256x1xf32>
    %44 = vector.broadcast %43 : vector<256x1xf32> to vector<256x256xf32>
    %45 = arith.addf %42, %44 : vector<256x256xf32>
    %cst_16 = arith.constant 0.000000e+00 : f32
    %46 = vector.broadcast %cst_16 : f32 to vector<256x256xf32>
    %47 = arith.maximumf %45, %46 : vector<256x256xf32>
    %48 = arith.truncf %47 : vector<256x256xf32> to vector<256x256xbf16>
    %c2_17 = arith.constant 2 : index
    %c0_18 = arith.constant 0 : index
    %c0_19 = arith.constant 0 : index
    %49 = vector.load %arg4[%c2_17, %c0_18, %c0_19] : memref<6x256x256xbf16, #tpu.memory_space<vmem>>, vector<1x256x256xbf16>
    %50 = vector.shape_cast %49 : vector<1x256x256xbf16> to vector<256x256xbf16>
    %cst_20 = arith.constant dense<0.000000e+00> : vector<256x256xf32>
    %51 = tpu.matmul %50, %48, %cst_20 {dimension_numbers = #tpu.dot_dimension_numbers<[1], [0], [0], [1], [0, 0, 1, 1], [], []>} : vector<256x256xbf16>, vector<256x256xbf16>, vector<256x256xf32> -> vector<256x256xf32>
    %c0_21 = arith.constant 0 : index
    %c3 = arith.constant 3 : index
    %52 = vector.load %arg3[%c0_21, %c3] : memref<256x8xf32, #tpu.memory_space<vmem>>, vector<256x1xf32>
    %53 = vector.broadcast %52 : vector<256x1xf32> to vector<256x256xf32>
    %54 = arith.addf %51, %53 : vector<256x256xf32>
    %cst_22 = arith.constant 0.000000e+00 : f32
    %55 = vector.broadcast %cst_22 : f32 to vector<256x256xf32>
    %56 = arith.maximumf %54, %55 : vector<256x256xf32>
    %57 = arith.truncf %56 : vector<256x256xf32> to vector<256x256xbf16>
    %c3_23 = arith.constant 3 : index
    %c0_24 = arith.constant 0 : index
    %c0_25 = arith.constant 0 : index
    %58 = vector.load %arg4[%c3_23, %c0_24, %c0_25] : memref<6x256x256xbf16, #tpu.memory_space<vmem>>, vector<1x256x256xbf16>
    %59 = vector.shape_cast %58 : vector<1x256x256xbf16> to vector<256x256xbf16>
    %cst_26 = arith.constant dense<0.000000e+00> : vector<256x256xf32>
    %60 = tpu.matmul %59, %57, %cst_26 {dimension_numbers = #tpu.dot_dimension_numbers<[1], [0], [0], [1], [0, 0, 1, 1], [], []>} : vector<256x256xbf16>, vector<256x256xbf16>, vector<256x256xf32> -> vector<256x256xf32>
    %c0_27 = arith.constant 0 : index
    %c4 = arith.constant 4 : index
    %61 = vector.load %arg3[%c0_27, %c4] : memref<256x8xf32, #tpu.memory_space<vmem>>, vector<256x1xf32>
    %62 = vector.broadcast %61 : vector<256x1xf32> to vector<256x256xf32>
    %63 = arith.addf %60, %62 : vector<256x256xf32>
    %cst_28 = arith.constant 0.000000e+00 : f32
    %64 = vector.broadcast %cst_28 : f32 to vector<256x256xf32>
    %65 = arith.maximumf %63, %64 : vector<256x256xf32>
    %66 = arith.truncf %65 : vector<256x256xf32> to vector<256x256xbf16>
    %c4_29 = arith.constant 4 : index
    %c0_30 = arith.constant 0 : index
    %c0_31 = arith.constant 0 : index
    %67 = vector.load %arg4[%c4_29, %c0_30, %c0_31] : memref<6x256x256xbf16, #tpu.memory_space<vmem>>, vector<1x256x256xbf16>
    %68 = vector.shape_cast %67 : vector<1x256x256xbf16> to vector<256x256xbf16>
    %cst_32 = arith.constant dense<0.000000e+00> : vector<256x256xf32>
    %69 = tpu.matmul %68, %66, %cst_32 {dimension_numbers = #tpu.dot_dimension_numbers<[1], [0], [0], [1], [0, 0, 1, 1], [], []>} : vector<256x256xbf16>, vector<256x256xbf16>, vector<256x256xf32> -> vector<256x256xf32>
    %c0_33 = arith.constant 0 : index
    %c5 = arith.constant 5 : index
    %70 = vector.load %arg3[%c0_33, %c5] : memref<256x8xf32, #tpu.memory_space<vmem>>, vector<256x1xf32>
    %71 = vector.broadcast %70 : vector<256x1xf32> to vector<256x256xf32>
    %72 = arith.addf %69, %71 : vector<256x256xf32>
    %cst_34 = arith.constant 0.000000e+00 : f32
    %73 = vector.broadcast %cst_34 : f32 to vector<256x256xf32>
    %74 = arith.maximumf %72, %73 : vector<256x256xf32>
    %75 = arith.truncf %74 : vector<256x256xf32> to vector<256x256xbf16>
    %c5_35 = arith.constant 5 : index
    %c0_36 = arith.constant 0 : index
    %c0_37 = arith.constant 0 : index
    %76 = vector.load %arg4[%c5_35, %c0_36, %c0_37] : memref<6x256x256xbf16, #tpu.memory_space<vmem>>, vector<1x256x256xbf16>
    %77 = vector.shape_cast %76 : vector<1x256x256xbf16> to vector<256x256xbf16>
    %cst_38 = arith.constant dense<0.000000e+00> : vector<256x256xf32>
    %78 = tpu.matmul %77, %75, %cst_38 {dimension_numbers = #tpu.dot_dimension_numbers<[1], [0], [0], [1], [0, 0, 1, 1], [], []>} : vector<256x256xbf16>, vector<256x256xbf16>, vector<256x256xf32> -> vector<256x256xf32>
    %c0_39 = arith.constant 0 : index
    %c6 = arith.constant 6 : index
    %79 = vector.load %arg3[%c0_39, %c6] : memref<256x8xf32, #tpu.memory_space<vmem>>, vector<256x1xf32>
    %80 = vector.broadcast %79 : vector<256x1xf32> to vector<256x256xf32>
    %81 = arith.addf %78, %80 : vector<256x256xf32>
    %cst_40 = arith.constant 0.000000e+00 : f32
    %82 = vector.broadcast %cst_40 : f32 to vector<256x256xf32>
    %83 = arith.maximumf %81, %82 : vector<256x256xf32>
    %c0_41 = arith.constant 0 : index
    %c7 = arith.constant 7 : index
    %84 = vector.load %arg3[%c0_41, %c7] : memref<256x8xf32, #tpu.memory_space<vmem>>, vector<256x1xf32>
    %85 = vector.broadcast %84 : vector<256x1xf32> to vector<256x256xf32>
    %86 = arith.mulf %83, %85 : vector<256x256xf32>
    %cst_42 = arith.constant dense<0.000000e+00> : vector<256xf32>
    %87 = vector.multi_reduction <add>, %86, %cst_42 [0] : vector<256x256xf32> to vector<256xf32>
    %88 = vector.shape_cast %87 : vector<256xf32> to vector<1x256xf32>
    %c0_43 = arith.constant 0 : index
    %89 = memref.load %arg5[%c0_43] : memref<1xf32, #tpu.memory_space<smem>>
    %90 = vector.broadcast %89 : f32 to vector<1x256xf32>
    %91 = arith.addf %88, %90 : vector<1x256xf32>
    %c0_44 = arith.constant 0 : index
    %c0_45 = arith.constant 0 : index
    %92 = vector.load %arg6[%c0_44, %c0_45] : memref<1x256xf32, #tpu.memory_space<vmem>>, vector<1x256xf32>
    tpu.vector_store %arg6[%c0_44, %c0_45], %91 {strides = array<i32>} : memref<1x256xf32, #tpu.memory_space<vmem>>, vector<1x256xf32>,
    return
  }
  func.func @transform_0(%arg0: i32) -> (i32, i32) {
    %c0_i32 = arith.constant 0 : i32
    %c0_i32_0 = arith.constant 0 : i32
    return %c0_i32, %arg0 : i32, i32
  }
  func.func @transform_1(%arg0: i32) -> (i32, i32) {
    %c0_i32 = arith.constant 0 : i32
    %c0_i32_0 = arith.constant 0 : i32
    %c0_i32_1 = arith.constant 0 : i32
    return %c0_i32, %c0_i32_0 : i32, i32
  }
  func.func @transform_2(%arg0: i32) -> (i32, i32) {
    %c0_i32 = arith.constant 0 : i32
    %c0_i32_0 = arith.constant 0 : i32
    %c0_i32_1 = arith.constant 0 : i32
    return %c0_i32, %c0_i32_0 : i32, i32
  }
  func.func @transform_3(%arg0: i32) -> (i32, i32, i32) {
    %c0_i32 = arith.constant 0 : i32
    %c0_i32_0 = arith.constant 0 : i32
    %c0_i32_1 = arith.constant 0 : i32
    %c0_i32_2 = arith.constant 0 : i32
    return %c0_i32, %c0_i32_0, %c0_i32_1 : i32, i32, i32
  }
  func.func @transform_4(%arg0: i32) -> i32 {
    %c0_i32 = arith.constant 0 : i32
    %c0_i32_0 = arith.constant 0 : i32
    return %c0_i32 : i32
  }
  func.func @transform_5(%arg0: i32) -> (i32, i32) {
    %c0_i32 = arith.constant 0 : i32
    %c0_i32_0 = arith.constant 0 : i32
    return %c0_i32, %arg0 : i32, i32
  }
}

</mosaic_0001>

<llo_original>
// kernel: model_forward.1
$region0: #{model_forward.1}
  #allocation0 [shape = 'u32[]', space=smem, size = 0x4, offset = 0x4, fixed_abs, tag = 'smem constant byte address 0x4 - core index']
  #allocation1 [shape = 'u32[144,128]{1,0:T(1,128)}', space=vmem, size = 0x12000, scoped, tag = 'internal scratch']
  #allocation2 [shape = 'f32[1]{0:T(128)S(6)}', space=smem, size = 0x200, scoped, tag = 'scoped memory for model_forward.1']
  %s0 = inlined_call_operand.vmem [shape: f32[4,512], index: 0, kind: input, shape index: {}]
  %s1 = inlined_call_operand.vmem [shape: f32[256,4], index: 1, kind: input, shape index: {}]
  %s2 = inlined_call_operand.vmem [shape: f32[256,8], index: 2, kind: input, shape index: {}]
  %s3 = inlined_call_operand.hbm [shape: bf16[6,256,256], index: 3, kind: input, shape index: {}]
  %s4 = inlined_call_operand.<no memory space> [shape: f32[1], index: 4, kind: input, shape index: {}]
  %s5 = inlined_call_operand.vmem [shape: f32[1,512], index: 5, kind: output, shape index: {}]
  %s6 = sld [smem:[#allocation0]]
  $region57: #{model_forward.1} parent=0
    _
  %s8 = ssub.s32 1, %s6
  %s9 = scalar_select 0, %s8, %s6
  %10 = sst [smem:[#allocation2]] %s4
  $region1: #{model_forward.1} parent=0
    #allocation3 [shape = 'u8[786432]{0}', space=vmem, size = 0xc0000, scoped, tag = 'input window, operand 3, single buffered']
    #allocation4 [shape = 's32[2]{0}', space=sflag, size = 0x8, scoped, tag = 'scoped memory for model_forward.1']
    %11 = vsyncpa [#allocation4], 0
    loop: start=0, step=1, limit=4
    $region2: #{model_forward.1} parent=1 // loop_pre_header
      _
    $region3: #{model_forward.1} parent=1 // loop_header
      %s13 = sphi 0, %s17
      %p14 = scmp.ge.s32.totalorder %s13, 4
      %s23 = sphi 0, %s25
      %s26 = sphi 0, %s23
      %s27 = sphi 0, %s26
      %s43 = sphi 0, %s27
      %s47 = sphi 0, %s47
      %s49 = sphi 0, %s47
      %s50 = sphi 0, %s49
      %s64 = sphi 0, %s50
      %s68 = sphi 0, %s68
      %s70 = sphi 0, %s68
      %s71 = sphi 0, %s70
      %s85 = sphi 0, %s71
      %s89 = sphi 0, %s89
      %s91 = sphi 0, %s89
      %s92 = sphi 0, %s91
      %s106 = sphi 0, %s92
      %s110 = sphi 0, %s110
      %s112 = sphi 0, %s110
      %s113 = sphi 0, %s112
      %s127 = sphi 0, %s113
      %s133 = sphi 0, %s135
      %s136 = sphi 0, %s133
      %s137 = sphi 0, %s136
      %s153 = sphi 0, %s137
    $region4: #{model_forward.1} parent=1 // loop_header_branch
      %16 = sbr.rel (%p14) target = $region8
    $region5: #{model_forward.1} parent=1 // loop_body
      %s18 = ssub.s32 %s13, 1
      %s19 = ssub.s32 %s13, 2
      %s20 = sadd.s32 %s13, 1
      %s21 = ssub.s32 %s13, %s20
      %p22 = scmp.eq.s32.totalorder %s21, 0
      %s24 = sadd.s32 %s23, 1
      %s25 = scalar_select %p22, %s23, %s24
      %p28 = pneg %p22
      %p29 = scmp.eq.s32.totalorder %s13, 1
      %p30 = por %p28, %p29
      %p31 = scmp.ne.s32.totalorder %s23, %s26
      %p32 = scmp.eq.s32.totalorder %s13, 0
      %p33 = por %p31, %p32
      %p34 = scmp.ne.s32.totalorder %s23, %s26
      %p35 = scmp.eq.s32.totalorder %s18, 1
      %p36 = por %p34, %p35
      %p37 = scmp.ne.s32.totalorder %s26, %s27
      %p38 = scmp.eq.s32.totalorder %s18, 0
      %p39 = por %p37, %p38
      %p40 = scmp.ne.s32.totalorder %s26, %s27
      %p41 = scmp.eq.s32.totalorder %s19, 1
      %p42 = por %p40, %p41
      %p44 = scmp.ne.s32.totalorder %s27, %s43
      %p45 = scmp.eq.s32.totalorder %s19, 0
      %p46 = por %p44, %p45
      %s48 = sadd.s32 %s47, 1
      %p51 = scmp.eq.s32.totalorder %s13, 1
      %p52 = scmp.ne.s32.totalorder %s47, %s49
      %p53 = scmp.eq.s32.totalorder %s13, 0
      %p54 = por %p52, %p53
      %p55 = scmp.ne.s32.totalorder %s47, %s49
      %p56 = scmp.eq.s32.totalorder %s18, 1
      %p57 = por %p55, %p56
      %p58 = scmp.ne.s32.totalorder %s49, %s50
      %p59 = scmp.eq.s32.totalorder %s18, 0
      %p60 = por %p58, %p59
      %p61 = scmp.ne.s32.totalorder %s49, %s50
      %p62 = scmp.eq.s32.totalorder %s19, 1
      %p63 = por %p61, %p62
      %p65 = scmp.ne.s32.totalorder %s50, %s64
      %p66 = scmp.eq.s32.totalorder %s19, 0
      %p67 = por %p65, %p66
      %s69 = sadd.s32 %s68, 1
      %p72 = scmp.eq.s32.totalorder %s13, 1
      %p73 = scmp.ne.s32.totalorder %s68, %s70
      %p74 = scmp.eq.s32.totalorder %s13, 0
      %p75 = por %p73, %p74
      %p76 = scmp.ne.s32.totalorder %s68, %s70
      %p77 = scmp.eq.s32.totalorder %s18, 1
      %p78 = por %p76, %p77
      %p79 = scmp.ne.s32.totalorder %s70, %s71
      %p80 = scmp.eq.s32.totalorder %s18, 0
      %p81 = por %p79, %p80
      %p82 = scmp.ne.s32.totalorder %s70, %s71
      %p83 = scmp.eq.s32.totalorder %s19, 1
      %p84 = por %p82, %p83
      %p86 = scmp.ne.s32.totalorder %s71, %s85
      %p87 = scmp.eq.s32.totalorder %s19, 0
      %p88 = por %p86, %p87
      %s90 = sadd.s32 %s89, 1
      %p93 = scmp.eq.s32.totalorder %s13, 1
      %p94 = scmp.ne.s32.totalorder %s89, %s91
      %p95 = scmp.eq.s32.totalorder %s13, 0
      %p96 = por %p94, %p95
      %p97 = scmp.ne.s32.totalorder %s89, %s91
      %p98 = scmp.eq.s32.totalorder %s18, 1
      %p99 = por %p97, %p98
      %p100 = scmp.ne.s32.totalorder %s91, %s92
      %p101 = scmp.eq.s32.totalorder %s18, 0
      %p102 = por %p100, %p101
      %p103 = scmp.ne.s32.totalorder %s91, %s92
      %p104 = scmp.eq.s32.totalorder %s19, 1
      %p105 = por %p103, %p104
      %p107 = scmp.ne.s32.totalorder %s92, %s106
      %p108 = scmp.eq.s32.totalorder %s19, 0
      %p109 = por %p107, %p108
      %s111 = sadd.s32 %s110, 1
      %p114 = scmp.eq.s32.totalorder %s13, 1
      %p115 = scmp.ne.s32.totalorder %s110, %s112
      %p116 = scmp.eq.s32.totalorder %s13, 0
      %p117 = por %p115, %p116
      %p118 = scmp.ne.s32.totalorder %s110, %s112
      %p119 = scmp.eq.s32.totalorder %s18, 1
      %p120 = por %p118, %p119
      %p121 = scmp.ne.s32.totalorder %s112, %s113
      %p122 = scmp.eq.s32.totalorder %s18, 0
      %p123 = por %p121, %p122
      %p124 = scmp.ne.s32.totalorder %s112, %s113
      %p125 = scmp.eq.s32.totalorder %s19, 1
      %p126 = por %p124, %p125
      %p128 = scmp.ne.s32.totalorder %s113, %s127
      %p129 = scmp.eq.s32.totalorder %s19, 0
      %p130 = por %p128, %p129
      %s131 = ssub.s32 %s13, %s20
      %p132 = scmp.eq.s32.totalorder %s131, 0
      %s134 = sadd.s32 %s133, 1
      %s135 = scalar_select %p132, %s133, %s134
      %p138 = pneg %p132
      %p139 = scmp.eq.s32.totalorder %s13, 1
      %p140 = por %p138, %p139
      %p141 = scmp.ne.s32.totalorder %s133, %s136
      %p142 = scmp.eq.s32.totalorder %s13, 0
      %p143 = por %p141, %p142
      %p144 = scmp.ne.s32.totalorder %s133, %s136
      %p145 = scmp.eq.s32.totalorder %s18, 1
      %p146 = por %p144, %p145
      %p147 = scmp.ne.s32.totalorder %s136, %s137
      %p148 = scmp.eq.s32.totalorder %s18, 0
      %p149 = por %p147, %p148
      %p150 = scmp.ne.s32.totalorder %s136, %s137
      %p151 = scmp.eq.s32.totalorder %s19, 1
      %p152 = por %p150, %p151
      %p154 = scmp.ne.s32.totalorder %s137, %s153
      %p155 = scmp.eq.s32.totalorder %s19, 0
      %p156 = por %p154, %p155
      %p157 = scmp.le.s32.totalorder 1, %s13
      %p158 = scmp.lt.s32.totalorder %s13, 3
      %p159 = pnand %p157, %p158
      %p160 = pneg %p159
      // Predicated region
      $region9: #{model_forward.1} parent=5 // pred_check
        _
      $region10: #{model_forward.1} parent=5 // pred_check_branch
        %162 = sbr.rel (%p159) target = $region12
      $region11: #{model_forward.1} parent=5 // pred_region
        %s163 = ssub.s32 %s13, 1
        // Predicated region
        $region13: #{model_forward.1} parent=11 // pred_check
          %p164 = pneg %p60
        $region14: #{model_forward.1} parent=11 // pred_check_branch
          %166 = sbr.rel (%p164) target = $region16
        $region15: #{model_forward.1} parent=11 // pred_region
          _
        $region16: #{model_forward.1} parent=11 // pred_fallthru
          _
        // Predicated region
        $region17: #{model_forward.1} parent=11 // pred_check
          %p167 = pneg %p81
        $region18: #{model_forward.1} parent=11 // pred_check_branch
          %169 = sbr.rel (%p167) target = $region20
        $region19: #{model_forward.1} parent=11 // pred_region
          _
        $region20: #{model_forward.1} parent=11 // pred_fallthru
          _
        // Predicated region
        $region21: #{model_forward.1} parent=11 // pred_check
          %p170 = pneg %p102
        $region22: #{model_forward.1} parent=11 // pred_check_branch
          %172 = sbr.rel (%p170) target = $region24
        $region23: #{model_forward.1} parent=11 // pred_region
          %s174 = ssub.s32 24576, 24576
          %175 = vsyncadd [#allocation4], %s174
          %s176 = sshll.u32 [#allocation3], 4
          %s177 = int_to_ptr.vmem [resolvable:$true] %s176
          %182 = dma.hbm_to_vmem [thread:$0]  %s3, 24576, %s177, [#allocation4], 128, 128, 8
        $region24: #{model_forward.1} parent=11 // pred_fallthru
          _
        // Predicated region
        $region25: #{model_forward.1} parent=11 // pred_check
          %p183 = pneg %p123
        $region26: #{model_forward.1} parent=11 // pred_check_branch
          %185 = sbr.rel (%p183) target = $region28
        $region27: #{model_forward.1} parent=11 // pred_region
          _
        $region28: #{model_forward.1} parent=11 // pred_fallthru
          _
      $region12: #{model_forward.1} parent=5 // pred_fallthru
        _
      %p186 = scmp.lt.s32.totalorder %s13, 2
      // Predicated region
      $region29: #{model_forward.1} parent=5 // pred_check
        %p187 = pneg %p186
      $region30: #{model_forward.1} parent=5 // pred_check_branch
        %189 = sbr.rel (%p187) target = $region32
      $region31: #{model_forward.1} parent=5 // pred_region
        // Predicated region
        $region33: #{model_forward.1} parent=31 // pred_check
          %p190 = pneg %p33
        $region34: #{model_forward.1} parent=31 // pred_check_branch
          %192 = sbr.rel (%p190) target = $region36
        $region35: #{model_forward.1} parent=31 // pred_region
          %s193 = smul.u32 2, %s13
          %p194 = scmp.lt.s32.totalorder %s193, 3
          %s195 = scalar_select %p194, %s193, 3
          %s196 = smul.addr %s195, 4
          %s197 = scalar_lea.vmem %s0, %s196
          %s198 = smul.u32 2, %s13
        $region36: #{model_forward.1} parent=31 // pred_fallthru
          _
      $region32: #{model_forward.1} parent=5 // pred_fallthru
        _
      %p199 = scmp.le.s32.totalorder 1, %s13
      %p200 = scmp.lt.s32.totalorder %s13, 3
      %p201 = pnand %p199, %p200
      %p202 = pneg %p201
      // Predicated region
      $region37: #{model_forward.1} parent=5 // pred_check
        _
      $region38: #{model_forward.1} parent=5 // pred_check_branch
        %204 = sbr.rel (%p201) target = $region40
      $region39: #{model_forward.1} parent=5 // pred_region
        %s205 = ssub.s32 %s13, 1
        // Predicated region
        $region41: #{model_forward.1} parent=39 // pred_check
          %p206 = pneg %p102
        $region42: #{model_forward.1} parent=39 // pred_check_branch
          %208 = sbr.rel (%p206) target = $region44
        $region43: #{model_forward.1} parent=39 // pred_region
          %209 = dma.done [#allocation4], 24576
        $region44: #{model_forward.1} parent=39 // pred_fallthru
          _
        %s210 = smul.u32 2, %s18
        %p211 = scmp.lt.s32.totalorder %s210, 3
        %s212 = scalar_select %p211, %s210, 3
        %s213 = smul.addr %s212, 4
        %s214 = scalar_lea.vmem %s0, %s213
        %p215 = pneg %p39
        %p216 = pneg %p36
        %p217 = pneg %p60
        %p218 = pneg %p57
        %p219 = pneg %p81
        %p220 = pneg %p78
        %p221 = pneg %p102
        %p222 = pneg %p99
        %p223 = pneg %p123
        %p224 = pneg %p120
        %p225 = pneg %p149
        %p226 = pneg %p146
        %s227 = smul.u32 2, %s18
        %p228 = scmp.lt.s32.totalorder %s227, 3
        %s229 = scalar_select %p228, %s227, 3
        %s230 = scalar_lea.vmem %s5, %s229
        %s231 = smul.u32 2, %s18
        %p232 = scmp.lt.s32.totalorder %s231, 3
        %s233 = scalar_select %p232, %s231, 3
        %s234 = smul.addr %s233, 4
        %s235 = scalar_lea.vmem %s0, %s234
        %s236 = smul.u32 2, %s18
        %s237 = smul.u32 2, %s18
        %p238 = scmp.lt.s32.totalorder %s237, 3
        %s239 = scalar_select %p238, %s237, 3
        %s240 = scalar_lea.vmem %s5, %s239
        %s241 = smul.u32 2, %s18
        %v242 = vld [vmem:[%s235] sm:$0xff]
        %v243 = vld [vmem:[%s1] sm:$0xff]
        %v244 = vld [vmem:[%s1 + $0x8] sm:$0xff]
        %v245 = vld [vmem:[%s1 + $0x10] sm:$0xff]
        %v246 = vld [vmem:[%s1 + $0x18] sm:$0xff]
        %v247 = vld [vmem:[%s1 + $0x20] sm:$0xff]
        %v248 = vld [vmem:[%s1 + $0x28] sm:$0xff]
        %v249 = vld [vmem:[%s1 + $0x30] sm:$0xff]
        %v250 = vld [vmem:[%s1 + $0x38] sm:$0xff]
        %v251 = vld [vmem:[%s1 + $0x40] sm:$0xff]
        %v252 = vld [vmem:[%s1 + $0x48] sm:$0xff]
        %v253 = vld [vmem:[%s1 + $0x50] sm:$0xff]
        %v254 = vld [vmem:[%s1 + $0x58] sm:$0xff]
        %v255 = vld [vmem:[%s1 + $0x60] sm:$0xff]
        %v256 = vld [vmem:[%s1 + $0x68] sm:$0xff]
        %v257 = vld [vmem:[%s1 + $0x70] sm:$0xff]
        %v258 = vld [vmem:[%s1 + $0x78] sm:$0xff]
        %v259 = vld [vmem:[%s1 + $0x80] sm:$0xff]
        %v260 = vld [vmem:[%s1 + $0x88] sm:$0xff]
        %v261 = vld [vmem:[%s1 + $0x90] sm:$0xff]
        %v262 = vld [vmem:[%s1 + $0x98] sm:$0xff]
        %v263 = vld [vmem:[%s1 + $0xa0] sm:$0xff]
        %v264 = vld [vmem:[%s1 + $0xa8] sm:$0xff]
        %v265 = vld [vmem:[%s1 + $0xb0] sm:$0xff]
        %v266 = vld [vmem:[%s1 + $0xb8] sm:$0xff]
        %v267 = vld [vmem:[%s1 + $0xc0] sm:$0xff]
        %v268 = vld [vmem:[%s1 + $0xc8] sm:$0xff]
        %v269 = vld [vmem:[%s1 + $0xd0] sm:$0xff]
        %v270 = vld [vmem:[%s1 + $0xd8] sm:$0xff]
        %v271 = vld [vmem:[%s1 + $0xe0] sm:$0xff]
        %v272 = vld [vmem:[%s1 + $0xe8] sm:$0xff]
        %v273 = vld [vmem:[%s1 + $0xf0] sm:$0xff]
        %v274 = vld [vmem:[%s1 + $0xf8] sm:$0xff]
        %276 = vset.pattern.permute.xlu0 0
        %277 = vperm.xlu0 %276, %v243
        %v278 = vpop.permute.xlu0 %277
        %281 = vset.pattern.permute.xlu0 0
        %282 = vperm.xlu0 %281, %v244
        %v283 = vpop.permute.xlu0 %282
        %286 = vset.pattern.permute.xlu0 0
        %287 = vperm.xlu0 %286, %v245
        %v288 = vpop.permute.xlu0 %287
        %291 = vset.pattern.permute.xlu0 0
        %292 = vperm.xlu0 %291, %v246
        %v293 = vpop.permute.xlu0 %292
        %296 = vset.pattern.permute.xlu0 0
        %297 = vperm.xlu0 %296, %v247
        %v298 = vpop.permute.xlu0 %297
        %301 = vset.pattern.permute.xlu0 0
        %302 = vperm.xlu0 %301, %v248
        %v303 = vpop.permute.xlu0 %302
        %306 = vset.pattern.permute.xlu0 0
        %307 = vperm.xlu0 %306, %v249
        %v308 = vpop.permute.xlu0 %307
        %311 = vset.pattern.permute.xlu0 0
        %312 = vperm.xlu0 %311, %v250
        %v313 = vpop.permute.xlu0 %312
        %316 = vset.pattern.permute.xlu0 0
        %317 = vperm.xlu0 %316, %v251
        %v318 = vpop.permute.xlu0 %317
        %321 = vset.pattern.permute.xlu0 0
        %322 = vperm.xlu0 %321, %v252
        %v323 = vpop.permute.xlu0 %322
        %326 = vset.pattern.permute.xlu0 0
        %327 = vperm.xlu0 %326, %v253
        %v328 = vpop.permute.xlu0 %327
        %331 = vset.pattern.permute.xlu0 0
        %332 = vperm.xlu0 %331, %v254
        %v333 = vpop.permute.xlu0 %332
        %336 = vset.pattern.permute.xlu0 0
        %337 = vperm.xlu0 %336, %v255
        %v338 = vpop.permute.xlu0 %337
        %341 = vset.pattern.permute.xlu0 0
        %342 = vperm.xlu0 %341, %v256
        %v343 = vpop.permute.xlu0 %342
        %346 = vset.pattern.permute.xlu0 0
        %347 = vperm.xlu0 %346, %v257
        %v348 = vpop.permute.xlu0 %347
        %351 = vset.pattern.permute.xlu0 0
        %352 = vperm.xlu0 %351, %v258
        %v353 = vpop.permute.xlu0 %352
        %356 = vset.pattern.permute.xlu0 0
        %357 = vperm.xlu0 %356, %v259
        %v358 = vpop.permute.xlu0 %357
        %361 = vset.pattern.permute.xlu0 0
        %362 = vperm.xlu0 %361, %v260
        %v363 = vpop.permute.xlu0 %362
        %366 = vset.pattern.permute.xlu0 0
        %367 = vperm.xlu0 %366, %v261
        %v368 = vpop.permute.xlu0 %367
        %371 = vset.pattern.permute.xlu0 0
        %372 = vperm.xlu0 %371, %v262
        %v373 = vpop.permute.xlu0 %372
        %376 = vset.pattern.permute.xlu0 0
        %377 = vperm.xlu0 %376, %v263
        %v378 = vpop.permute.xlu0 %377
        %381 = vset.pattern.permute.xlu0 0
        %382 = vperm.xlu0 %381, %v264
        %v383 = vpop.permute.xlu0 %382
        %386 = vset.pattern.permute.xlu0 0
        %387 = vperm.xlu0 %386, %v265
        %v388 = vpop.permute.xlu0 %387
        %391 = vset.pattern.permute.xlu0 0
        %392 = vperm.xlu0 %391, %v266
        %v393 = vpop.permute.xlu0 %392
        %396 = vset.pattern.permute.xlu0 0
        %397 = vperm.xlu0 %396, %v267
        %v398 = vpop.permute.xlu0 %397
        %401 = vset.pattern.permute.xlu0 0
        %402 = vperm.xlu0 %401, %v268
        %v403 = vpop.permute.xlu0 %402
        %406 = vset.pattern.permute.xlu0 0
        %407 = vperm.xlu0 %406, %v269
        %v408 = vpop.permute.xlu0 %407
        %411 = vset.pattern.permute.xlu0 0
        %412 = vperm.xlu0 %411, %v270
        %v413 = vpop.permute.xlu0 %412
        %416 = vset.pattern.permute.xlu0 0
        %417 = vperm.xlu0 %416, %v271
        %v418 = vpop.permute.xlu0 %417
        %421 = vset.pattern.permute.xlu0 0
        %422 = vperm.xlu0 %421, %v272
        %v423 = vpop.permute.xlu0 %422
        %426 = vset.pattern.permute.xlu0 0
        %427 = vperm.xlu0 %426, %v273
        %v428 = vpop.permute.xlu0 %427
        %431 = vset.pattern.permute.xlu0 0
        %432 = vperm.xlu0 %431, %v274
        %v433 = vpop.permute.xlu0 %432
        %v436 = vlaneseq
        %v437 = vshrl.u32 %v436, 7
        %v438 = vsub.s32 0, %v437
        %v439 = vrot.slane %v242, %v438
        %v440 = vlaneseq
        %v441 = vshrl.u32 %v440, 7
        %v442 = vsub.s32 4, %v441
        %v443 = vrot.slane %v242, %v442
        %v446 = vlaneseq
        %v447 = vshrl.u32 %v446, 7
        %v448 = vsub.s32 0, %v447
        %v449 = vrot.slane %v439, %v448
        %v450 = vlaneseq
        %v451 = vshrl.u32 %v450, 7
        %v452 = vsub.s32 0, %v451
        %v453 = vrot.slane %v443, %v452
        %v454 = vmul.f32 %v278, %v449
        %v455 = vmul.f32 %v278, %v453
        %v456 = vmul.f32 %v283, %v449
        %v457 = vmul.f32 %v283, %v453
        %v458 = vmul.f32 %v288, %v449
        %v459 = vmul.f32 %v288, %v453
        %v460 = vmul.f32 %v293, %v449
        %v461 = vmul.f32 %v293, %v453
        %v462 = vmul.f32 %v298, %v449
        %v463 = vmul.f32 %v298, %v453
        %v464 = vmul.f32 %v303, %v449
        %v465 = vmul.f32 %v303, %v453
        %v466 = vmul.f32 %v308, %v449
        %v467 = vmul.f32 %v308, %v453
        %v468 = vmul.f32 %v313, %v449
        %v469 = vmul.f32 %v313, %v453
        %v470 = vmul.f32 %v318, %v449
        %v471 = vmul.f32 %v318, %v453
        %v472 = vmul.f32 %v323, %v449
        %v473 = vmul.f32 %v323, %v453
        %v474 = vmul.f32 %v328, %v449
        %v475 = vmul.f32 %v328, %v453
        %v476 = vmul.f32 %v333, %v449
        %v477 = vmul.f32 %v333, %v453
        %v478 = vmul.f32 %v338, %v449
        %v479 = vmul.f32 %v338, %v453
        %v480 = vmul.f32 %v343, %v449
        %v481 = vmul.f32 %v343, %v453
        %v482 = vmul.f32 %v348, %v449
        %v483 = vmul.f32 %v348, %v453
        %v484 = vmul.f32 %v353, %v449
        %v485 = vmul.f32 %v353, %v453
        %v486 = vmul.f32 %v358, %v449
        %v487 = vmul.f32 %v358, %v453
        %v488 = vmul.f32 %v363, %v449
        %v489 = vmul.f32 %v363, %v453
        %v490 = vmul.f32 %v368, %v449
        %v491 = vmul.f32 %v368, %v453
        %v492 = vmul.f32 %v373, %v449
        %v493 = vmul.f32 %v373, %v453
        %v494 = vmul.f32 %v378, %v449
        %v495 = vmul.f32 %v378, %v453
        %v496 = vmul.f32 %v383, %v449
        %v497 = vmul.f32 %v383, %v453
        %v498 = vmul.f32 %v388, %v449
        %v499 = vmul.f32 %v388, %v453
        %v500 = vmul.f32 %v393, %v449
        %v501 = vmul.f32 %v393, %v453
        %v502 = vmul.f32 %v398, %v449
        %v503 = vmul.f32 %v398, %v453
        %v504 = vmul.f32 %v403, %v449
        %v505 = vmul.f32 %v403, %v453
        %v506 = vmul.f32 %v408, %v449
        %v507 = vmul.f32 %v408, %v453
        %v508 = vmul.f32 %v413, %v449
        %v509 = vmul.f32 %v413, %v453
        %v510 = vmul.f32 %v418, %v449
        %v511 = vmul.f32 %v418, %v453
        %v512 = vmul.f32 %v423, %v449
        %v513 = vmul.f32 %v423, %v453
        %v514 = vmul.f32 %v428, %v449
        %v515 = vmul.f32 %v428, %v453
        %v516 = vmul.f32 %v433, %v449
        %v517 = vmul.f32 %v433, %v453
        %518 = vset.pattern.permute.xlu0 1
        %519 = vperm.xlu0 %518, %v243
        %v520 = vpop.permute.xlu0 %519
        %522 = vset.pattern.permute.xlu0 1
        %523 = vperm.xlu0 %522, %v244
        %v524 = vpop.permute.xlu0 %523
        %526 = vset.pattern.permute.xlu0 1
        %527 = vperm.xlu0 %526, %v245
        %v528 = vpop.permute.xlu0 %527
        %530 = vset.pattern.permute.xlu0 1
        %531 = vperm.xlu0 %530, %v246
        %v532 = vpop.permute.xlu0 %531
        %534 = vset.pattern.permute.xlu0 1
        %535 = vperm.xlu0 %534, %v247
        %v536 = vpop.permute.xlu0 %535
        %538 = vset.pattern.permute.xlu0 1
        %539 = vperm.xlu0 %538, %v248
        %v540 = vpop.permute.xlu0 %539
        %542 = vset.pattern.permute.xlu0 1
        %543 = vperm.xlu0 %542, %v249
        %v544 = vpop.permute.xlu0 %543
        %546 = vset.pattern.permute.xlu0 1
        %547 = vperm.xlu0 %546, %v250
        %v548 = vpop.permute.xlu0 %547
        %550 = vset.pattern.permute.xlu0 1
        %551 = vperm.xlu0 %550, %v251
        %v552 = vpop.permute.xlu0 %551
        %554 = vset.pattern.permute.xlu0 1
        %555 = vperm.xlu0 %554, %v252
        %v556 = vpop.permute.xlu0 %555
        %558 = vset.pattern.permute.xlu0 1
        %559 = vperm.xlu0 %558, %v253
        %v560 = vpop.permute.xlu0 %559
        %562 = vset.pattern.permute.xlu0 1
        %563 = vperm.xlu0 %562, %v254
        %v564 = vpop.permute.xlu0 %563
        %566 = vset.pattern.permute.xlu0 1
        %567 = vperm.xlu0 %566, %v255
        %v568 = vpop.permute.xlu0 %567
        %570 = vset.pattern.permute.xlu0 1
        %571 = vperm.xlu0 %570, %v256
        %v572 = vpop.permute.xlu0 %571
        %574 = vset.pattern.permute.xlu0 1
        %575 = vperm.xlu0 %574, %v257
        %v576 = vpop.permute.xlu0 %575
        %578 = vset.pattern.permute.xlu0 1
        %579 = vperm.xlu0 %578, %v258
        %v580 = vpop.permute.xlu0 %579
        %582 = vset.pattern.permute.xlu0 1
        %583 = vperm.xlu0 %582, %v259
        %v584 = vpop.permute.xlu0 %583
        %586 = vset.pattern.permute.xlu0 1
        %587 = vperm.xlu0 %586, %v260
        %v588 = vpop.permute.xlu0 %587
        %590 = vset.pattern.permute.xlu0 1
        %591 = vperm.xlu0 %590, %v261
        %v592 = vpop.permute.xlu0 %591
        %594 = vset.pattern.permute.xlu0 1
        %595 = vperm.xlu0 %594, %v262
        %v596 = vpop.permute.xlu0 %595
        %598 = vset.pattern.permute.xlu0 1
        %599 = vperm.xlu0 %598, %v263
        %v600 = vpop.permute.xlu0 %599
        %602 = vset.pattern.permute.xlu0 1
        %603 = vperm.xlu0 %602, %v264
        %v604 = vpop.permute.xlu0 %603
        %606 = vset.pattern.permute.xlu0 1
        %607 = vperm.xlu0 %606, %v265
        %v608 = vpop.permute.xlu0 %607
        %610 = vset.pattern.permute.xlu0 1
        %611 = vperm.xlu0 %610, %v266
        %v612 = vpop.permute.xlu0 %611
        %614 = vset.pattern.permute.xlu0 1
        %615 = vperm.xlu0 %614, %v267
        %v616 = vpop.permute.xlu0 %615
        %618 = vset.pattern.permute.xlu0 1
        %619 = vperm.xlu0 %618, %v268
        %v620 = vpop.permute.xlu0 %619
        %622 = vset.pattern.permute.xlu0 1
        %623 = vperm.xlu0 %622, %v269
        %v624 = vpop.permute.xlu0 %623
        %626 = vset.pattern.permute.xlu0 1
        %627 = vperm.xlu0 %626, %v270
        %v628 = vpop.permute.xlu0 %627
        %630 = vset.pattern.permute.xlu0 1
        %631 = vperm.xlu0 %630, %v271
        %v632 = vpop.permute.xlu0 %631
        %634 = vset.pattern.permute.xlu0 1
        %635 = vperm.xlu0 %634, %v272
        %v636 = vpop.permute.xlu0 %635
        %638 = vset.pattern.permute.xlu0 1
        %639 = vperm.xlu0 %638, %v273
        %v640 = vpop.permute.xlu0 %639
        %642 = vset.pattern.permute.xlu0 1
        %643 = vperm.xlu0 %642, %v274
        %v644 = vpop.permute.xlu0 %643
        %v646 = vlaneseq
        %v647 = vshrl.u32 %v646, 7
        %v648 = vsub.s32 1, %v647
        %v649 = vrot.slane %v242, %v648
        %v650 = vlaneseq
        %v651 = vshrl.u32 %v650, 7
        %v652 = vsub.s32 5, %v651
        %v653 = vrot.slane %v242, %v652
        %v656 = vlaneseq
        %v657 = vshrl.u32 %v656, 7
        %v658 = vsub.s32 1, %v657
        %v659 = vrot.slane %v649, %v658
        %v660 = vlaneseq
        %v661 = vshrl.u32 %v660, 7
        %v662 = vsub.s32 1, %v661
        %v663 = vrot.slane %v653, %v662
        %v664 = vmul.f32 %v520, %v659
        %v665 = vmul.f32 %v520, %v663
        %v666 = vmul.f32 %v524, %v659
        %v667 = vmul.f32 %v524, %v663
        %v668 = vmul.f32 %v528, %v659
        %v669 = vmul.f32 %v528, %v663
        %v670 = vmul.f32 %v532, %v659
        %v671 = vmul.f32 %v532, %v663
        %v672 = vmul.f32 %v536, %v659
        %v673 = vmul.f32 %v536, %v663
        %v674 = vmul.f32 %v540, %v659
        %v675 = vmul.f32 %v540, %v663
        %v676 = vmul.f32 %v544, %v659
        %v677 = vmul.f32 %v544, %v663
        %v678 = vmul.f32 %v548, %v659
        %v679 = vmul.f32 %v548, %v663
        %v680 = vmul.f32 %v552, %v659
        %v681 = vmul.f32 %v552, %v663
        %v682 = vmul.f32 %v556, %v659
        %v683 = vmul.f32 %v556, %v663
        %v684 = vmul.f32 %v560, %v659
        %v685 = vmul.f32 %v560, %v663
        %v686 = vmul.f32 %v564, %v659
        %v687 = vmul.f32 %v564, %v663
        %v688 = vmul.f32 %v568, %v659
        %v689 = vmul.f32 %v568, %v663
        %v690 = vmul.f32 %v572, %v659
        %v691 = vmul.f32 %v572, %v663
        %v692 = vmul.f32 %v576, %v659
        %v693 = vmul.f32 %v576, %v663
        %v694 = vmul.f32 %v580, %v659
        %v695 = vmul.f32 %v580, %v663
        %v696 = vmul.f32 %v584, %v659
        %v697 = vmul.f32 %v584, %v663
        %v698 = vmul.f32 %v588, %v659
        %v699 = vmul.f32 %v588, %v663
        %v700 = vmul.f32 %v592, %v659
        %v701 = vmul.f32 %v592, %v663
        %v702 = vmul.f32 %v596, %v659
        %v703 = vmul.f32 %v596, %v663
        %v704 = vmul.f32 %v600, %v659
        %v705 = vmul.f32 %v600, %v663
        %v706 = vmul.f32 %v604, %v659
        %v707 = vmul.f32 %v604, %v663
        %v708 = vmul.f32 %v608, %v659
        %v709 = vmul.f32 %v608, %v663
        %v710 = vmul.f32 %v612, %v659
        %v711 = vmul.f32 %v612, %v663
        %v712 = vmul.f32 %v616, %v659
        %v713 = vmul.f32 %v616, %v663
        %v714 = vmul.f32 %v620, %v659
        %v715 = vmul.f32 %v620, %v663
        %v716 = vmul.f32 %v624, %v659
        %v717 = vmul.f32 %v624, %v663
        %v718 = vmul.f32 %v628, %v659
        %v719 = vmul.f32 %v628, %v663
        %v720 = vmul.f32 %v632, %v659
        %v721 = vmul.f32 %v632, %v663
        %v722 = vmul.f32 %v636, %v659
        %v723 = vmul.f32 %v636, %v663
        %v724 = vmul.f32 %v640, %v659
        %v725 = vmul.f32 %v640, %v663
        %v726 = vmul.f32 %v644, %v659
        %v727 = vmul.f32 %v644, %v663
        %v728 = vadd.f32 %v454, %v664
        %v729 = vadd.f32 %v455, %v665
        %v730 = vadd.f32 %v456, %v666
        %v731 = vadd.f32 %v457, %v667
        %v732 = vadd.f32 %v458, %v668
        %v733 = vadd.f32 %v459, %v669
        %v734 = vadd.f32 %v460, %v670
        %v735 = vadd.f32 %v461, %v671
        %v736 = vadd.f32 %v462, %v672
        %v737 = vadd.f32 %v463, %v673
        %v738 = vadd.f32 %v464, %v674
        %v739 = vadd.f32 %v465, %v675
        %v740 = vadd.f32 %v466, %v676
        %v741 = vadd.f32 %v467, %v677
        %v742 = vadd.f32 %v468, %v678
        %v743 = vadd.f32 %v469, %v679
        %v744 = vadd.f32 %v470, %v680
        %v745 = vadd.f32 %v471, %v681
        %v746 = vadd.f32 %v472, %v682
        %v747 = vadd.f32 %v473, %v683
        %v748 = vadd.f32 %v474, %v684
        %v749 = vadd.f32 %v475, %v685
        %v750 = vadd.f32 %v476, %v686
        %v751 = vadd.f32 %v477, %v687
        %v752 = vadd.f32 %v478, %v688
        %v753 = vadd.f32 %v479, %v689
        %v754 = vadd.f32 %v480, %v690
        %v755 = vadd.f32 %v481, %v691
        %v756 = vadd.f32 %v482, %v692
        %v757 = vadd.f32 %v483, %v693
        %v758 = vadd.f32 %v484, %v694
        %v759 = vadd.f32 %v485, %v695
        %v760 = vadd.f32 %v486, %v696
        %v761 = vadd.f32 %v487, %v697
        %v762 = vadd.f32 %v488, %v698
        %v763 = vadd.f32 %v489, %v699
        %v764 = vadd.f32 %v490, %v700
        %v765 = vadd.f32 %v491, %v701
        %v766 = vadd.f32 %v492, %v702
        %v767 = vadd.f32 %v493, %v703
        %v768 = vadd.f32 %v494, %v704
        %v769 = vadd.f32 %v495, %v705
        %v770 = vadd.f32 %v496, %v706
        %v771 = vadd.f32 %v497, %v707
        %v772 = vadd.f32 %v498, %v708
        %v773 = vadd.f32 %v499, %v709
        %v774 = vadd.f32 %v500, %v710
        %v775 = vadd.f32 %v501, %v711
        %v776 = vadd.f32 %v502, %v712
        %v777 = vadd.f32 %v503, %v713
        %v778 = vadd.f32 %v504, %v714
        %v779 = vadd.f32 %v505, %v715
        %v780 = vadd.f32 %v506, %v716
        %v781 = vadd.f32 %v507, %v717
        %v782 = vadd.f32 %v508, %v718
        %v783 = vadd.f32 %v509, %v719
        %v784 = vadd.f32 %v510, %v720
        %v785 = vadd.f32 %v511, %v721
        %v786 = vadd.f32 %v512, %v722
        %v787 = vadd.f32 %v513, %v723
        %v788 = vadd.f32 %v514, %v724
        %v789 = vadd.f32 %v515, %v725
        %v790 = vadd.f32 %v516, %v726
        %v791 = vadd.f32 %v517, %v727
        %792 = vset.pattern.permute.xlu0 2
        %793 = vperm.xlu0 %792, %v243
        %v794 = vpop.permute.xlu0 %793
        %796 = vset.pattern.permute.xlu0 2
        %797 = vperm.xlu0 %796, %v244
        %v798 = vpop.permute.xlu0 %797
        %800 = vset.pattern.permute.xlu0 2
        %801 = vperm.xlu0 %800, %v245
        %v802 = vpop.permute.xlu0 %801
        %804 = vset.pattern.permute.xlu0 2
        %805 = vperm.xlu0 %804, %v246
        %v806 = vpop.permute.xlu0 %805
        %808 = vset.pattern.permute.xlu0 2
        %809 = vperm.xlu0 %808, %v247
        %v810 = vpop.permute.xlu0 %809
        %812 = vset.pattern.permute.xlu0 2
        %813 = vperm.xlu0 %812, %v248
        %v814 = vpop.permute.xlu0 %813
        %816 = vset.pattern.permute.xlu0 2
        %817 = vperm.xlu0 %816, %v249
        %v818 = vpop.permute.xlu0 %817
        %820 = vset.pattern.permute.xlu0 2
        %821 = vperm.xlu0 %820, %v250
        %v822 = vpop.permute.xlu0 %821
        %824 = vset.pattern.permute.xlu0 2
        %825 = vperm.xlu0 %824, %v251
        %v826 = vpop.permute.xlu0 %825
        %828 = vset.pattern.permute.xlu0 2
        %829 = vperm.xlu0 %828, %v252
        %v830 = vpop.permute.xlu0 %829
        %832 = vset.pattern.permute.xlu0 2
        %833 = vperm.xlu0 %832, %v253
        %v834 = vpop.permute.xlu0 %833
        %836 = vset.pattern.permute.xlu0 2
        %837 = vperm.xlu0 %836, %v254
        %v838 = vpop.permute.xlu0 %837
        %840 = vset.pattern.permute.xlu0 2
        %841 = vperm.xlu0 %840, %v255
        %v842 = vpop.permute.xlu0 %841
        %844 = vset.pattern.permute.xlu0 2
        %845 = vperm.xlu0 %844, %v256
        %v846 = vpop.permute.xlu0 %845
        %848 = vset.pattern.permute.xlu0 2
        %849 = vperm.xlu0 %848, %v257
        %v850 = vpop.permute.xlu0 %849
        %852 = vset.pattern.permute.xlu0 2
        %853 = vperm.xlu0 %852, %v258
        %v854 = vpop.permute.xlu0 %853
        %856 = vset.pattern.permute.xlu0 2
        %857 = vperm.xlu0 %856, %v259
        %v858 = vpop.permute.xlu0 %857
        %860 = vset.pattern.permute.xlu0 2
        %861 = vperm.xlu0 %860, %v260
        %v862 = vpop.permute.xlu0 %861
        %864 = vset.pattern.permute.xlu0 2
        %865 = vperm.xlu0 %864, %v261
        %v866 = vpop.permute.xlu0 %865
        %868 = vset.pattern.permute.xlu0 2
        %869 = vperm.xlu0 %868, %v262
        %v870 = vpop.permute.xlu0 %869
        %872 = vset.pattern.permute.xlu0 2
        %873 = vperm.xlu0 %872, %v263
        %v874 = vpop.permute.xlu0 %873
        %876 = vset.pattern.permute.xlu0 2
        %877 = vperm.xlu0 %876, %v264
        %v878 = vpop.permute.xlu0 %877
        %880 = vset.pattern.permute.xlu0 2
        %881 = vperm.xlu0 %880, %v265
        %v882 = vpop.permute.xlu0 %881
        %884 = vset.pattern.permute.xlu0 2
        %885 = vperm.xlu0 %884, %v266
        %v886 = vpop.permute.xlu0 %885
        %888 = vset.pattern.permute.xlu0 2
        %889 = vperm.xlu0 %888, %v267
        %v890 = vpop.permute.xlu0 %889
        %892 = vset.pattern.permute.xlu0 2
        %893 = vperm.xlu0 %892, %v268
        %v894 = vpop.permute.xlu0 %893
        %896 = vset.pattern.permute.xlu0 2
        %897 = vperm.xlu0 %896, %v269
        %v898 = vpop.permute.xlu0 %897
        %900 = vset.pattern.permute.xlu0 2
        %901 = vperm.xlu0 %900, %v270
        %v902 = vpop.permute.xlu0 %901
        %904 = vset.pattern.permute.xlu0 2
        %905 = vperm.xlu0 %904, %v271
        %v906 = vpop.permute.xlu0 %905
        %908 = vset.pattern.permute.xlu0 2
        %909 = vperm.xlu0 %908, %v272
        %v910 = vpop.permute.xlu0 %909
        %912 = vset.pattern.permute.xlu0 2
        %913 = vperm.xlu0 %912, %v273
        %v914 = vpop.permute.xlu0 %913
        %916 = vset.pattern.permute.xlu0 2
        %917 = vperm.xlu0 %916, %v274
        %v918 = vpop.permute.xlu0 %917
        %v920 = vlaneseq
        %v921 = vshrl.u32 %v920, 7
        %v922 = vsub.s32 2, %v921
        %v923 = vrot.slane %v242, %v922
        %v924 = vlaneseq
        %v925 = vshrl.u32 %v924, 7
        %v926 = vsub.s32 6, %v925
        %v927 = vrot.slane %v242, %v926
        %v930 = vlaneseq
        %v931 = vshrl.u32 %v930, 7
        %v932 = vsub.s32 2, %v931
        %v933 = vrot.slane %v923, %v932
        %v934 = vlaneseq
        %v935 = vshrl.u32 %v934, 7
        %v936 = vsub.s32 2, %v935
        %v937 = vrot.slane %v927, %v936
        %v938 = vmul.f32 %v794, %v933
        %v939 = vmul.f32 %v794, %v937
        %v940 = vmul.f32 %v798, %v933
        %v941 = vmul.f32 %v798, %v937
        %v942 = vmul.f32 %v802, %v933
        %v943 = vmul.f32 %v802, %v937
        %v944 = vmul.f32 %v806, %v933
        %v945 = vmul.f32 %v806, %v937
        %v946 = vmul.f32 %v810, %v933
        %v947 = vmul.f32 %v810, %v937
        %v948 = vmul.f32 %v814, %v933
        %v949 = vmul.f32 %v814, %v937
        %v950 = vmul.f32 %v818, %v933
        %v951 = vmul.f32 %v818, %v937
        %v952 = vmul.f32 %v822, %v933
        %v953 = vmul.f32 %v822, %v937
        %v954 = vmul.f32 %v826, %v933
        %v955 = vmul.f32 %v826, %v937
        %v956 = vmul.f32 %v830, %v933
        %v957 = vmul.f32 %v830, %v937
        %v958 = vmul.f32 %v834, %v933
        %v959 = vmul.f32 %v834, %v937
        %v960 = vmul.f32 %v838, %v933
        %v961 = vmul.f32 %v838, %v937
        %v962 = vmul.f32 %v842, %v933
        %v963 = vmul.f32 %v842, %v937
        %v964 = vmul.f32 %v846, %v933
        %v965 = vmul.f32 %v846, %v937
        %v966 = vmul.f32 %v850, %v933
        %v967 = vmul.f32 %v850, %v937
        %v968 = vmul.f32 %v854, %v933
        %v969 = vmul.f32 %v854, %v937
        %v970 = vmul.f32 %v858, %v933
        %v971 = vmul.f32 %v858, %v937
        %v972 = vmul.f32 %v862, %v933
        %v973 = vmul.f32 %v862, %v937
        %v974 = vmul.f32 %v866, %v933
        %v975 = vmul.f32 %v866, %v937
        %v976 = vmul.f32 %v870, %v933
        %v977 = vmul.f32 %v870, %v937
        %v978 = vmul.f32 %v874, %v933
        %v979 = vmul.f32 %v874, %v937
        %v980 = vmul.f32 %v878, %v933
        %v981 = vmul.f32 %v878, %v937
        %v982 = vmul.f32 %v882, %v933
        %v983 = vmul.f32 %v882, %v937
        %v984 = vmul.f32 %v886, %v933
        %v985 = vmul.f32 %v886, %v937
        %v986 = vmul.f32 %v890, %v933
        %v987 = vmul.f32 %v890, %v937
        %v988 = vmul.f32 %v894, %v933
        %v989 = vmul.f32 %v894, %v937
        %v990 = vmul.f32 %v898, %v933
        %v991 = vmul.f32 %v898, %v937
        %v992 = vmul.f32 %v902, %v933
        %v993 = vmul.f32 %v902, %v937
        %v994 = vmul.f32 %v906, %v933
        %v995 = vmul.f32 %v906, %v937
        %v996 = vmul.f32 %v910, %v933
        %v997 = vmul.f32 %v910, %v937
        %v998 = vmul.f32 %v914, %v933
        %v999 = vmul.f32 %v914, %v937
        %v1000 = vmul.f32 %v918, %v933
        %v1001 = vmul.f32 %v918, %v937
        %v1002 = vadd.f32 %v728, %v938
        %v1003 = vadd.f32 %v729, %v939
        %v1004 = vadd.f32 %v730, %v940
        %v1005 = vadd.f32 %v731, %v941
        %v1006 = vadd.f32 %v732, %v942
        %v1007 = vadd.f32 %v733, %v943
        %v1008 = vadd.f32 %v734, %v944
        %v1009 = vadd.f32 %v735, %v945
        %v1010 = vadd.f32 %v736, %v946
        %v1011 = vadd.f32 %v737, %v947
        %v1012 = vadd.f32 %v738, %v948
        %v1013 = vadd.f32 %v739, %v949
        %v1014 = vadd.f32 %v740, %v950
        %v1015 = vadd.f32 %v741, %v951
        %v1016 = vadd.f32 %v742, %v952
        %v1017 = vadd.f32 %v743, %v953
        %v1018 = vadd.f32 %v744, %v954
        %v1019 = vadd.f32 %v745, %v955
        %v1020 = vadd.f32 %v746, %v956
        %v1021 = vadd.f32 %v747, %v957
        %v1022 = vadd.f32 %v748, %v958
        %v1023 = vadd.f32 %v749, %v959
        %v1024 = vadd.f32 %v750, %v960
        %v1025 = vadd.f32 %v751, %v961
        %v1026 = vadd.f32 %v752, %v962
        %v1027 = vadd.f32 %v753, %v963
        %v1028 = vadd.f32 %v754, %v964
        %v1029 = vadd.f32 %v755, %v965
        %v1030 = vadd.f32 %v756, %v966
        %v1031 = vadd.f32 %v757, %v967
        %v1032 = vadd.f32 %v758, %v968
        %v1033 = vadd.f32 %v759, %v969
        %v1034 = vadd.f32 %v760, %v970
        %v1035 = vadd.f32 %v761, %v971
        %v1036 = vadd.f32 %v762, %v972
        %v1037 = vadd.f32 %v763, %v973
        %v1038 = vadd.f32 %v764, %v974
        %v1039 = vadd.f32 %v765, %v975
        %v1040 = vadd.f32 %v766, %v976
        %v1041 = vadd.f32 %v767, %v977
        %v1042 = vadd.f32 %v768, %v978
        %v1043 = vadd.f32 %v769, %v979
        %v1044 = vadd.f32 %v770, %v980
        %v1045 = vadd.f32 %v771, %v981
        %v1046 = vadd.f32 %v772, %v982
        %v1047 = vadd.f32 %v773, %v983
        %v1048 = vadd.f32 %v774, %v984
        %v1049 = vadd.f32 %v775, %v985
        %v1050 = vadd.f32 %v776, %v986
        %v1051 = vadd.f32 %v777, %v987
        %v1052 = vadd.f32 %v778, %v988
        %v1053 = vadd.f32 %v779, %v989
        %v1054 = vadd.f32 %v780, %v990
        %v1055 = vadd.f32 %v781, %v991
        %v1056 = vadd.f32 %v782, %v992
        %v1057 = vadd.f32 %v783, %v993
        %v1058 = vadd.f32 %v784, %v994
        %v1059 = vadd.f32 %v785, %v995
        %v1060 = vadd.f32 %v786, %v996
        %v1061 = vadd.f32 %v787, %v997
        %v1062 = vadd.f32 %v788, %v998
        %v1063 = vadd.f32 %v789, %v999
        %v1064 = vadd.f32 %v790, %v1000
        %v1065 = vadd.f32 %v791, %v1001
        %1066 = vset.pattern.permute.xlu0 3
        %1067 = vperm.xlu0 %1066, %v243
        %v1068 = vpop.permute.xlu0 %1067
        %1070 = vset.pattern.permute.xlu0 3
        %1071 = vperm.xlu0 %1070, %v244
        %v1072 = vpop.permute.xlu0 %1071
        %1074 = vset.pattern.permute.xlu0 3
        %1075 = vperm.xlu0 %1074, %v245
        %v1076 = vpop.permute.xlu0 %1075
        %1078 = vset.pattern.permute.xlu0 3
        %1079 = vperm.xlu0 %1078, %v246
        %v1080 = vpop.permute.xlu0 %1079
        %1082 = vset.pattern.permute.xlu0 3
        %1083 = vperm.xlu0 %1082, %v247
        %v1084 = vpop.permute.xlu0 %1083
        %1086 = vset.pattern.permute.xlu0 3
        %1087 = vperm.xlu0 %1086, %v248
        %v1088 = vpop.permute.xlu0 %1087
        %1090 = vset.pattern.permute.xlu0 3
        %1091 = vperm.xlu0 %1090, %v249
        %v1092 = vpop.permute.xlu0 %1091
        %1094 = vset.pattern.permute.xlu0 3
        %1095 = vperm.xlu0 %1094, %v250
        %v1096 = vpop.permute.xlu0 %1095
        %1098 = vset.pattern.permute.xlu0 3
        %1099 = vperm.xlu0 %1098, %v251
        %v1100 = vpop.permute.xlu0 %1099
        %1102 = vset.pattern.permute.xlu0 3
        %1103 = vperm.xlu0 %1102, %v252
        %v1104 = vpop.permute.xlu0 %1103
        %1106 = vset.pattern.permute.xlu0 3
        %1107 = vperm.xlu0 %1106, %v253
        %v1108 = vpop.permute.xlu0 %1107
        %1110 = vset.pattern.permute.xlu0 3
        %1111 = vperm.xlu0 %1110, %v254
        %v1112 = vpop.permute.xlu0 %1111
        %1114 = vset.pattern.permute.xlu0 3
        %1115 = vperm.xlu0 %1114, %v255
        %v1116 = vpop.permute.xlu0 %1115
        %1118 = vset.pattern.permute.xlu0 3
        %1119 = vperm.xlu0 %1118, %v256
        %v1120 = vpop.permute.xlu0 %1119
        %1122 = vset.pattern.permute.xlu0 3
        %1123 = vperm.xlu0 %1122, %v257
        %v1124 = vpop.permute.xlu0 %1123
        %1126 = vset.pattern.permute.xlu0 3
        %1127 = vperm.xlu0 %1126, %v258
        %v1128 = vpop.permute.xlu0 %1127
        %1130 = vset.pattern.permute.xlu0 3
        %1131 = vperm.xlu0 %1130, %v259
        %v1132 = vpop.permute.xlu0 %1131
        %1134 = vset.pattern.permute.xlu0 3
        %1135 = vperm.xlu0 %1134, %v260
        %v1136 = vpop.permute.xlu0 %1135
        %1138 = vset.pattern.permute.xlu0 3
        %1139 = vperm.xlu0 %1138, %v261
        %v1140 = vpop.permute.xlu0 %1139
        %1142 = vset.pattern.permute.xlu0 3
        %1143 = vperm.xlu0 %1142, %v262
        %v1144 = vpop.permute.xlu0 %1143
        %1146 = vset.pattern.permute.xlu0 3
        %1147 = vperm.xlu0 %1146, %v263
        %v1148 = vpop.permute.xlu0 %1147
        %1150 = vset.pattern.permute.xlu0 3
        %1151 = vperm.xlu0 %1150, %v264
        %v1152 = vpop.permute.xlu0 %1151
        %1154 = vset.pattern.permute.xlu0 3
        %1155 = vperm.xlu0 %1154, %v265
        %v1156 = vpop.permute.xlu0 %1155
        %1158 = vset.pattern.permute.xlu0 3
        %1159 = vperm.xlu0 %1158, %v266
        %v1160 = vpop.permute.xlu0 %1159
        %1162 = vset.pattern.permute.xlu0 3
        %1163 = vperm.xlu0 %1162, %v267
        %v1164 = vpop.permute.xlu0 %1163
        %1166 = vset.pattern.permute.xlu0 3
        %1167 = vperm.xlu0 %1166, %v268
        %v1168 = vpop.permute.xlu0 %1167
        %1170 = vset.pattern.permute.xlu0 3
        %1171 = vperm.xlu0 %1170, %v269
        %v1172 = vpop.permute.xlu0 %1171
        %1174 = vset.pattern.permute.xlu0 3
        %1175 = vperm.xlu0 %1174, %v270
        %v1176 = vpop.permute.xlu0 %1175
        %1178 = vset.pattern.permute.xlu0 3
        %1179 = vperm.xlu0 %1178, %v271
        %v1180 = vpop.permute.xlu0 %1179
        %1182 = vset.pattern.permute.xlu0 3
        %1183 = vperm.xlu0 %1182, %v272
        %v1184 = vpop.permute.xlu0 %1183
        %1186 = vset.pattern.permute.xlu0 3
        %1187 = vperm.xlu0 %1186, %v273
        %v1188 = vpop.permute.xlu0 %1187
        %1190 = vset.pattern.permute.xlu0 3
        %1191 = vperm.xlu0 %1190, %v274
        %v1192 = vpop.permute.xlu0 %1191
        %v1194 = vlaneseq
        %v1195 = vshrl.u32 %v1194, 7
        %v1196 = vsub.s32 3, %v1195
        %v1197 = vrot.slane %v242, %v1196
        %v1198 = vlaneseq
        %v1199 = vshrl.u32 %v1198, 7
        %v1200 = vsub.s32 7, %v1199
        %v1201 = vrot.slane %v242, %v1200
        %v1204 = vlaneseq
        %v1205 = vshrl.u32 %v1204, 7
        %v1206 = vsub.s32 3, %v1205
        %v1207 = vrot.slane %v1197, %v1206
        %v1208 = vlaneseq
        %v1209 = vshrl.u32 %v1208, 7
        %v1210 = vsub.s32 3, %v1209
        %v1211 = vrot.slane %v1201, %v1210
        %v1212 = vmul.f32 %v1068, %v1207
        %v1213 = vmul.f32 %v1068, %v1211
        %v1214 = vmul.f32 %v1072, %v1207
        %v1215 = vmul.f32 %v1072, %v1211
        %v1216 = vmul.f32 %v1076, %v1207
        %v1217 = vmul.f32 %v1076, %v1211
        %v1218 = vmul.f32 %v1080, %v1207
        %v1219 = vmul.f32 %v1080, %v1211
        %v1220 = vmul.f32 %v1084, %v1207
        %v1221 = vmul.f32 %v1084, %v1211
        %v1222 = vmul.f32 %v1088, %v1207
        %v1223 = vmul.f32 %v1088, %v1211
        %v1224 = vmul.f32 %v1092, %v1207
        %v1225 = vmul.f32 %v1092, %v1211
        %v1226 = vmul.f32 %v1096, %v1207
        %v1227 = vmul.f32 %v1096, %v1211
        %v1228 = vmul.f32 %v1100, %v1207
        %v1229 = vmul.f32 %v1100, %v1211
        %v1230 = vmul.f32 %v1104, %v1207
        %v1231 = vmul.f32 %v1104, %v1211
        %v1232 = vmul.f32 %v1108, %v1207
        %v1233 = vmul.f32 %v1108, %v1211
        %v1234 = vmul.f32 %v1112, %v1207
        %v1235 = vmul.f32 %v1112, %v1211
        %v1236 = vmul.f32 %v1116, %v1207
        %v1237 = vmul.f32 %v1116, %v1211
        %v1238 = vmul.f32 %v1120, %v1207
        %v1239 = vmul.f32 %v1120, %v1211
        %v1240 = vmul.f32 %v1124, %v1207
        %v1241 = vmul.f32 %v1124, %v1211
        %v1242 = vmul.f32 %v1128, %v1207
        %v1243 = vmul.f32 %v1128, %v1211
        %v1244 = vmul.f32 %v1132, %v1207
        %v1245 = vmul.f32 %v1132, %v1211
        %v1246 = vmul.f32 %v1136, %v1207
        %v1247 = vmul.f32 %v1136, %v1211
        %v1248 = vmul.f32 %v1140, %v1207
        %v1249 = vmul.f32 %v1140, %v1211
        %v1250 = vmul.f32 %v1144, %v1207
        %v1251 = vmul.f32 %v1144, %v1211
        %v1252 = vmul.f32 %v1148, %v1207
        %v1253 = vmul.f32 %v1148, %v1211
        %v1254 = vmul.f32 %v1152, %v1207
        %v1255 = vmul.f32 %v1152, %v1211
        %v1256 = vmul.f32 %v1156, %v1207
        %v1257 = vmul.f32 %v1156, %v1211
        %v1258 = vmul.f32 %v1160, %v1207
        %v1259 = vmul.f32 %v1160, %v1211
        %v1260 = vmul.f32 %v1164, %v1207
        %v1261 = vmul.f32 %v1164, %v1211
        %v1262 = vmul.f32 %v1168, %v1207
        %v1263 = vmul.f32 %v1168, %v1211
        %v1264 = vmul.f32 %v1172, %v1207
        %v1265 = vmul.f32 %v1172, %v1211
        %v1266 = vmul.f32 %v1176, %v1207
        %v1267 = vmul.f32 %v1176, %v1211
        %v1268 = vmul.f32 %v1180, %v1207
        %v1269 = vmul.f32 %v1180, %v1211
        %v1270 = vmul.f32 %v1184, %v1207
        %v1271 = vmul.f32 %v1184, %v1211
        %v1272 = vmul.f32 %v1188, %v1207
        %v1273 = vmul.f32 %v1188, %v1211
        %v1274 = vmul.f32 %v1192, %v1207
        %v1275 = vmul.f32 %v1192, %v1211
        %v1276 = vadd.f32 %v1002, %v1212
        %v1277 = vadd.f32 %v1003, %v1213
        %v1278 = vadd.f32 %v1004, %v1214
        %v1279 = vadd.f32 %v1005, %v1215
        %v1280 = vadd.f32 %v1006, %v1216
        %v1281 = vadd.f32 %v1007, %v1217
        %v1282 = vadd.f32 %v1008, %v1218
        %v1283 = vadd.f32 %v1009, %v1219
        %v1284 = vadd.f32 %v1010, %v1220
        %v1285 = vadd.f32 %v1011, %v1221
        %v1286 = vadd.f32 %v1012, %v1222
        %v1287 = vadd.f32 %v1013, %v1223
        %v1288 = vadd.f32 %v1014, %v1224
        %v1289 = vadd.f32 %v1015, %v1225
        %v1290 = vadd.f32 %v1016, %v1226
        %v1291 = vadd.f32 %v1017, %v1227
        %v1292 = vadd.f32 %v1018, %v1228
        %v1293 = vadd.f32 %v1019, %v1229
        %v1294 = vadd.f32 %v1020, %v1230
        %v1295 = vadd.f32 %v1021, %v1231
        %v1296 = vadd.f32 %v1022, %v1232
        %v1297 = vadd.f32 %v1023, %v1233
        %v1298 = vadd.f32 %v1024, %v1234
        %v1299 = vadd.f32 %v1025, %v1235
        %v1300 = vadd.f32 %v1026, %v1236
        %v1301 = vadd.f32 %v1027, %v1237
        %v1302 = vadd.f32 %v1028, %v1238
        %v1303 = vadd.f32 %v1029, %v1239
        %v1304 = vadd.f32 %v1030, %v1240
        %v1305 = vadd.f32 %v1031, %v1241
        %v1306 = vadd.f32 %v1032, %v1242
        %v1307 = vadd.f32 %v1033, %v1243
        %v1308 = vadd.f32 %v1034, %v1244
        %v1309 = vadd.f32 %v1035, %v1245
        %v1310 = vadd.f32 %v1036, %v1246
        %v1311 = vadd.f32 %v1037, %v1247
        %v1312 = vadd.f32 %v1038, %v1248
        %v1313 = vadd.f32 %v1039, %v1249
        %v1314 = vadd.f32 %v1040, %v1250
        %v1315 = vadd.f32 %v1041, %v1251
        %v1316 = vadd.f32 %v1042, %v1252
        %v1317 = vadd.f32 %v1043, %v1253
        %v1318 = vadd.f32 %v1044, %v1254
        %v1319 = vadd.f32 %v1045, %v1255
        %v1320 = vadd.f32 %v1046, %v1256
        %v1321 = vadd.f32 %v1047, %v1257
        %v1322 = vadd.f32 %v1048, %v1258
        %v1323 = vadd.f32 %v1049, %v1259
        %v1324 = vadd.f32 %v1050, %v1260
        %v1325 = vadd.f32 %v1051, %v1261
        %v1326 = vadd.f32 %v1052, %v1262
        %v1327 = vadd.f32 %v1053, %v1263
        %v1328 = vadd.f32 %v1054, %v1264
        %v1329 = vadd.f32 %v1055, %v1265
        %v1330 = vadd.f32 %v1056, %v1266
        %v1331 = vadd.f32 %v1057, %v1267
        %v1332 = vadd.f32 %v1058, %v1268
        %v1333 = vadd.f32 %v1059, %v1269
        %v1334 = vadd.f32 %v1060, %v1270
        %v1335 = vadd.f32 %v1061, %v1271
        %v1336 = vadd.f32 %v1062, %v1272
        %v1337 = vadd.f32 %v1063, %v1273
        %v1338 = vadd.f32 %v1064, %v1274
        %v1339 = vadd.f32 %v1065, %v1275
        %v1340 = vld [vmem:[%s2] sm:$0xff]
        %v1341 = vld [vmem:[%s2 + $0x8] sm:$0xff]
        %v1342 = vld [vmem:[%s2 + $0x10] sm:$0xff]
        %v1343 = vld [vmem:[%s2 + $0x18] sm:$0xff]
        %v1344 = vld [vmem:[%s2 + $0x20] sm:$0xff]
        %v1345 = vld [vmem:[%s2 + $0x28] sm:$0xff]
        %v1346 = vld [vmem:[%s2 + $0x30] sm:$0xff]
        %v1347 = vld [vmem:[%s2 + $0x38] sm:$0xff]
        %v1348 = vld [vmem:[%s2 + $0x40] sm:$0xff]
        %v1349 = vld [vmem:[%s2 + $0x48] sm:$0xff]
        %v1350 = vld [vmem:[%s2 + $0x50] sm:$0xff]
        %v1351 = vld [vmem:[%s2 + $0x58] sm:$0xff]
        %v1352 = vld [vmem:[%s2 + $0x60] sm:$0xff]
        %v1353 = vld [vmem:[%s2 + $0x68] sm:$0xff]
        %v1354 = vld [vmem:[%s2 + $0x70] sm:$0xff]
        %v1355 = vld [vmem:[%s2 + $0x78] sm:$0xff]
        %v1356 = vld [vmem:[%s2 + $0x80] sm:$0xff]
        %v1357 = vld [vmem:[%s2 + $0x88] sm:$0xff]
        %v1358 = vld [vmem:[%s2 + $0x90] sm:$0xff]
        %v1359 = vld [vmem:[%s2 + $0x98] sm:$0xff]
        %v1360 = vld [vmem:[%s2 + $0xa0] sm:$0xff]
        %v1361 = vld [vmem:[%s2 + $0xa8] sm:$0xff]
        %v1362 = vld [vmem:[%s2 + $0xb0] sm:$0xff]
        %v1363 = vld [vmem:[%s2 + $0xb8] sm:$0xff]
        %v1364 = vld [vmem:[%s2 + $0xc0] sm:$0xff]
        %v1365 = vld [vmem:[%s2 + $0xc8] sm:$0xff]
        %v1366 = vld [vmem:[%s2 + $0xd0] sm:$0xff]
        %v1367 = vld [vmem:[%s2 + $0xd8] sm:$0xff]
        %v1368 = vld [vmem:[%s2 + $0xe0] sm:$0xff]
        %v1369 = vld [vmem:[%s2 + $0xe8] sm:$0xff]
        %v1370 = vld [vmem:[%s2 + $0xf0] sm:$0xff]
        %v1371 = vld [vmem:[%s2 + $0xf8] sm:$0xff]
        %1373 = vset.pattern.permute.xlu0 0
        %1374 = vperm.xlu0 %1373, %v1340
        %v1375 = vpop.permute.xlu0 %1374
        %1378 = vset.pattern.permute.xlu0 0
        %1379 = vperm.xlu0 %1378, %v1341
        %v1380 = vpop.permute.xlu0 %1379
        %1383 = vset.pattern.permute.xlu0 0
        %1384 = vperm.xlu0 %1383, %v1342
        %v1385 = vpop.permute.xlu0 %1384
        %1388 = vset.pattern.permute.xlu0 0
        %1389 = vperm.xlu0 %1388, %v1343
        %v1390 = vpop.permute.xlu0 %1389
        %1393 = vset.pattern.permute.xlu0 0
        %1394 = vperm.xlu0 %1393, %v1344
        %v1395 = vpop.permute.xlu0 %1394
        %1398 = vset.pattern.permute.xlu0 0
        %1399 = vperm.xlu0 %1398, %v1345
        %v1400 = vpop.permute.xlu0 %1399
        %1403 = vset.pattern.permute.xlu0 0
        %1404 = vperm.xlu0 %1403, %v1346
        %v1405 = vpop.permute.xlu0 %1404
        %1408 = vset.pattern.permute.xlu0 0
        %1409 = vperm.xlu0 %1408, %v1347
        %v1410 = vpop.permute.xlu0 %1409
        %1413 = vset.pattern.permute.xlu0 0
        %1414 = vperm.xlu0 %1413, %v1348
        %v1415 = vpop.permute.xlu0 %1414
        %1418 = vset.pattern.permute.xlu0 0
        %1419 = vperm.xlu0 %1418, %v1349
        %v1420 = vpop.permute.xlu0 %1419
        %1423 = vset.pattern.permute.xlu0 0
        %1424 = vperm.xlu0 %1423, %v1350
        %v1425 = vpop.permute.xlu0 %1424
        %1428 = vset.pattern.permute.xlu0 0
        %1429 = vperm.xlu0 %1428, %v1351
        %v1430 = vpop.permute.xlu0 %1429
        %1433 = vset.pattern.permute.xlu0 0
        %1434 = vperm.xlu0 %1433, %v1352
        %v1435 = vpop.permute.xlu0 %1434
        %1438 = vset.pattern.permute.xlu0 0
        %1439 = vperm.xlu0 %1438, %v1353
        %v1440 = vpop.permute.xlu0 %1439
        %1443 = vset.pattern.permute.xlu0 0
        %1444 = vperm.xlu0 %1443, %v1354
        %v1445 = vpop.permute.xlu0 %1444
        %1448 = vset.pattern.permute.xlu0 0
        %1449 = vperm.xlu0 %1448, %v1355
        %v1450 = vpop.permute.xlu0 %1449
        %1453 = vset.pattern.permute.xlu0 0
        %1454 = vperm.xlu0 %1453, %v1356
        %v1455 = vpop.permute.xlu0 %1454
        %1458 = vset.pattern.permute.xlu0 0
        %1459 = vperm.xlu0 %1458, %v1357
        %v1460 = vpop.permute.xlu0 %1459
        %1463 = vset.pattern.permute.xlu0 0
        %1464 = vperm.xlu0 %1463, %v1358
        %v1465 = vpop.permute.xlu0 %1464
        %1468 = vset.pattern.permute.xlu0 0
        %1469 = vperm.xlu0 %1468, %v1359
        %v1470 = vpop.permute.xlu0 %1469
        %1473 = vset.pattern.permute.xlu0 0
        %1474 = vperm.xlu0 %1473, %v1360
        %v1475 = vpop.permute.xlu0 %1474
        %1478 = vset.pattern.permute.xlu0 0
        %1479 = vperm.xlu0 %1478, %v1361
        %v1480 = vpop.permute.xlu0 %1479
        %1483 = vset.pattern.permute.xlu0 0
        %1484 = vperm.xlu0 %1483, %v1362
        %v1485 = vpop.permute.xlu0 %1484
        %1488 = vset.pattern.permute.xlu0 0
        %1489 = vperm.xlu0 %1488, %v1363
        %v1490 = vpop.permute.xlu0 %1489
        %1493 = vset.pattern.permute.xlu0 0
        %1494 = vperm.xlu0 %1493, %v1364
        %v1495 = vpop.permute.xlu0 %1494
        %1498 = vset.pattern.permute.xlu0 0
        %1499 = vperm.xlu0 %1498, %v1365
        %v1500 = vpop.permute.xlu0 %1499
        %1503 = vset.pattern.permute.xlu0 0
        %1504 = vperm.xlu0 %1503, %v1366
        %v1505 = vpop.permute.xlu0 %1504
        %1508 = vset.pattern.permute.xlu0 0
        %1509 = vperm.xlu0 %1508, %v1367
        %v1510 = vpop.permute.xlu0 %1509
        %1513 = vset.pattern.permute.xlu0 0
        %1514 = vperm.xlu0 %1513, %v1368
        %v1515 = vpop.permute.xlu0 %1514
        %1518 = vset.pattern.permute.xlu0 0
        %1519 = vperm.xlu0 %1518, %v1369
        %v1520 = vpop.permute.xlu0 %1519
        %1523 = vset.pattern.permute.xlu0 0
        %1524 = vperm.xlu0 %1523, %v1370
        %v1525 = vpop.permute.xlu0 %1524
        %1528 = vset.pattern.permute.xlu0 0
        %1529 = vperm.xlu0 %1528, %v1371
        %v1530 = vpop.permute.xlu0 %1529
        %v1532 = vadd.f32 %v1276, %v1375
        %v1533 = vadd.f32 %v1277, %v1375
        %v1534 = vadd.f32 %v1278, %v1380
        %v1535 = vadd.f32 %v1279, %v1380
        %v1536 = vadd.f32 %v1280, %v1385
        %v1537 = vadd.f32 %v1281, %v1385
        %v1538 = vadd.f32 %v1282, %v1390
        %v1539 = vadd.f32 %v1283, %v1390
        %v1540 = vadd.f32 %v1284, %v1395
        %v1541 = vadd.f32 %v1285, %v1395
        %v1542 = vadd.f32 %v1286, %v1400
        %v1543 = vadd.f32 %v1287, %v1400
        %v1544 = vadd.f32 %v1288, %v1405
        %v1545 = vadd.f32 %v1289, %v1405
        %v1546 = vadd.f32 %v1290, %v1410
        %v1547 = vadd.f32 %v1291, %v1410
        %v1548 = vadd.f32 %v1292, %v1415
        %v1549 = vadd.f32 %v1293, %v1415
        %v1550 = vadd.f32 %v1294, %v1420
        %v1551 = vadd.f32 %v1295, %v1420
        %v1552 = vadd.f32 %v1296, %v1425
        %v1553 = vadd.f32 %v1297, %v1425
        %v1554 = vadd.f32 %v1298, %v1430
        %v1555 = vadd.f32 %v1299, %v1430
        %v1556 = vadd.f32 %v1300, %v1435
        %v1557 = vadd.f32 %v1301, %v1435
        %v1558 = vadd.f32 %v1302, %v1440
        %v1559 = vadd.f32 %v1303, %v1440
        %v1560 = vadd.f32 %v1304, %v1445
        %v1561 = vadd.f32 %v1305, %v1445
        %v1562 = vadd.f32 %v1306, %v1450
        %v1563 = vadd.f32 %v1307, %v1450
        %v1564 = vadd.f32 %v1308, %v1455
        %v1565 = vadd.f32 %v1309, %v1455
        %v1566 = vadd.f32 %v1310, %v1460
        %v1567 = vadd.f32 %v1311, %v1460
        %v1568 = vadd.f32 %v1312, %v1465
        %v1569 = vadd.f32 %v1313, %v1465
        %v1570 = vadd.f32 %v1314, %v1470
        %v1571 = vadd.f32 %v1315, %v1470
        %v1572 = vadd.f32 %v1316, %v1475
        %v1573 = vadd.f32 %v1317, %v1475
        %v1574 = vadd.f32 %v1318, %v1480
        %v1575 = vadd.f32 %v1319, %v1480
        %v1576 = vadd.f32 %v1320, %v1485
        %v1577 = vadd.f32 %v1321, %v1485
        %v1578 = vadd.f32 %v1322, %v1490
        %v1579 = vadd.f32 %v1323, %v1490
        %v1580 = vadd.f32 %v1324, %v1495
        %v1581 = vadd.f32 %v1325, %v1495
        %v1582 = vadd.f32 %v1326, %v1500
        %v1583 = vadd.f32 %v1327, %v1500
        %v1584 = vadd.f32 %v1328, %v1505
        %v1585 = vadd.f32 %v1329, %v1505
        %v1586 = vadd.f32 %v1330, %v1510
        %v1587 = vadd.f32 %v1331, %v1510
        %v1588 = vadd.f32 %v1332, %v1515
        %v1589 = vadd.f32 %v1333, %v1515
        %v1590 = vadd.f32 %v1334, %v1520
        %v1591 = vadd.f32 %v1335, %v1520
        %v1592 = vadd.f32 %v1336, %v1525
        %v1593 = vadd.f32 %v1337, %v1525
        %v1594 = vadd.f32 %v1338, %v1530
        %v1595 = vadd.f32 %v1339, %v1530
        %v1596 = vmax.f32 %v1532, 0.0
        %v1597 = vmax.f32 %v1533, 0.0
        %v1598 = vmax.f32 %v1534, 0.0
        %v1599 = vmax.f32 %v1535, 0.0
        %v1600 = vmax.f32 %v1536, 0.0
        %v1601 = vmax.f32 %v1537, 0.0
        %v1602 = vmax.f32 %v1538, 0.0
        %v1603 = vmax.f32 %v1539, 0.0
        %v1604 = vmax.f32 %v1540, 0.0
        %v1605 = vmax.f32 %v1541, 0.0
        %v1606 = vmax.f32 %v1542, 0.0
        %v1607 = vmax.f32 %v1543, 0.0
        %v1608 = vmax.f32 %v1544, 0.0
        %v1609 = vmax.f32 %v1545, 0.0
        %v1610 = vmax.f32 %v1546, 0.0
        %v1611 = vmax.f32 %v1547, 0.0
        %v1612 = vmax.f32 %v1548, 0.0
        %v1613 = vmax.f32 %v1549, 0.0
        %v1614 = vmax.f32 %v1550, 0.0
        %v1615 = vmax.f32 %v1551, 0.0
        %v1616 = vmax.f32 %v1552, 0.0
        %v1617 = vmax.f32 %v1553, 0.0
        %v1618 = vmax.f32 %v1554, 0.0
        %v1619 = vmax.f32 %v1555, 0.0
        %v1620 = vmax.f32 %v1556, 0.0
        %v1621 = vmax.f32 %v1557, 0.0
        %v1622 = vmax.f32 %v1558, 0.0
        %v1623 = vmax.f32 %v1559, 0.0
        %v1624 = vmax.f32 %v1560, 0.0
        %v1625 = vmax.f32 %v1561, 0.0
        %v1626 = vmax.f32 %v1562, 0.0
        %v1627 = vmax.f32 %v1563, 0.0
        %v1628 = vmax.f32 %v1564, 0.0
        %v1629 = vmax.f32 %v1565, 0.0
        %v1630 = vmax.f32 %v1566, 0.0
        %v1631 = vmax.f32 %v1567, 0.0
        %v1632 = vmax.f32 %v1568, 0.0
        %v1633 = vmax.f32 %v1569, 0.0
        %v1634 = vmax.f32 %v1570, 0.0
        %v1635 = vmax.f32 %v1571, 0.0
        %v1636 = vmax.f32 %v1572, 0.0
        %v1637 = vmax.f32 %v1573, 0.0
        %v1638 = vmax.f32 %v1574, 0.0
        %v1639 = vmax.f32 %v1575, 0.0
        %v1640 = vmax.f32 %v1576, 0.0
        %v1641 = vmax.f32 %v1577, 0.0
        %v1642 = vmax.f32 %v1578, 0.0
        %v1643 = vmax.f32 %v1579, 0.0
        %v1644 = vmax.f32 %v1580, 0.0
        %v1645 = vmax.f32 %v1581, 0.0
        %v1646 = vmax.f32 %v1582, 0.0
        %v1647 = vmax.f32 %v1583, 0.0
        %v1648 = vmax.f32 %v1584, 0.0
        %v1649 = vmax.f32 %v1585, 0.0
        %v1650 = vmax.f32 %v1586, 0.0
        %v1651 = vmax.f32 %v1587, 0.0
        %v1652 = vmax.f32 %v1588, 0.0
        %v1653 = vmax.f32 %v1589, 0.0
        %v1654 = vmax.f32 %v1590, 0.0
        %v1655 = vmax.f32 %v1591, 0.0
        %v1656 = vmax.f32 %v1592, 0.0
        %v1657 = vmax.f32 %v1593, 0.0
        %v1658 = vmax.f32 %v1594, 0.0
        %v1659 = vmax.f32 %v1595, 0.0
        %v1660 = vpack.c.bf16 %v1598, %v1596
        %v1661 = vpack.c.bf16 %v1599, %v1597
        %v1662 = vpack.c.bf16 %v1602, %v1600
        %v1663 = vpack.c.bf16 %v1603, %v1601
        %v1664 = vpack.c.bf16 %v1606, %v1604
        %v1665 = vpack.c.bf16 %v1607, %v1605
        %v1666 = vpack.c.bf16 %v1610, %v1608
        %v1667 = vpack.c.bf16 %v1611, %v1609
        %v1668 = vpack.c.bf16 %v1614, %v1612
        %v1669 = vpack.c.bf16 %v1615, %v1613
        %v1670 = vpack.c.bf16 %v1618, %v1616
        %v1671 = vpack.c.bf16 %v1619, %v1617
        %v1672 = vpack.c.bf16 %v1622, %v1620
        %v1673 = vpack.c.bf16 %v1623, %v1621
        %v1674 = vpack.c.bf16 %v1626, %v1624
        %v1675 = vpack.c.bf16 %v1627, %v1625
        %v1676 = vpack.c.bf16 %v1630, %v1628
        %v1677 = vpack.c.bf16 %v1631, %v1629
        %v1678 = vpack.c.bf16 %v1634, %v1632
        %v1679 = vpack.c.bf16 %v1635, %v1633
        %v1680 = vpack.c.bf16 %v1638, %v1636
        %v1681 = vpack.c.bf16 %v1639, %v1637
        %v1682 = vpack.c.bf16 %v1642, %v1640
        %v1683 = vpack.c.bf16 %v1643, %v1641
        %v1684 = vpack.c.bf16 %v1646, %v1644
        %v1685 = vpack.c.bf16 %v1647, %v1645
        %v1686 = vpack.c.bf16 %v1650, %v1648
        %v1687 = vpack.c.bf16 %v1651, %v1649
        %v1688 = vpack.c.bf16 %v1654, %v1652
        %v1689 = vpack.c.bf16 %v1655, %v1653
        %v1690 = vpack.c.bf16 %v1658, %v1656
        %v1691 = vpack.c.bf16 %v1659, %v1657
        %v1692 = vld [vmem:[#allocation3] sm:$0xff]
        %v1693 = vld [vmem:[#allocation3 + $0x8] sm:$0xff]
        %v1694 = vld [vmem:[#allocation3 + $0x10] sm:$0xff]
        %v1695 = vld [vmem:[#allocation3 + $0x18] sm:$0xff]
        %v1696 = vld [vmem:[#allocation3 + $0x20] sm:$0xff]
        %v1697 = vld [vmem:[#allocation3 + $0x28] sm:$0xff]
        %v1698 = vld [vmem:[#allocation3 + $0x30] sm:$0xff]
        %v1699 = vld [vmem:[#allocation3 + $0x38] sm:$0xff]
        %v1700 = vld [vmem:[#allocation3 + $0x40] sm:$0xff]
        %v1701 = vld [vmem:[#allocation3 + $0x48] sm:$0xff]
        %v1702 = vld [vmem:[#allocation3 + $0x50] sm:$0xff]
        %v1703 = vld [vmem:[#allocation3 + $0x58] sm:$0xff]
        %v1704 = vld [vmem:[#allocation3 + $0x60] sm:$0xff]
        %v1705 = vld [vmem:[#allocation3 + $0x68] sm:$0xff]
        %v1706 = vld [vmem:[#allocation3 + $0x70] sm:$0xff]
        %v1707 = vld [vmem:[#allocation3 + $0x78] sm:$0xff]
        %v1708 = vld [vmem:[#allocation3 + $0x80] sm:$0xff]
        %v1709 = vld [vmem:[#allocation3 + $0x88] sm:$0xff]
        %v1710 = vld [vmem:[#allocation3 + $0x90] sm:$0xff]
        %v1711 = vld [vmem:[#allocation3 + $0x98] sm:$0xff]
        %v1712 = vld [vmem:[#allocation3 + $0xa0] sm:$0xff]
        %v1713 = vld [vmem:[#allocation3 + $0xa8] sm:$0xff]
        %v1714 = vld [vmem:[#allocation3 + $0xb0] sm:$0xff]
        %v1715 = vld [vmem:[#allocation3 + $0xb8] sm:$0xff]
        %v1716 = vld [vmem:[#allocation3 + $0xc0] sm:$0xff]
        %v1717 = vld [vmem:[#allocation3 + $0xc8] sm:$0xff]
        %v1718 = vld [vmem:[#allocation3 + $0xd0] sm:$0xff]
        %v1719 = vld [vmem:[#allocation3 + $0xd8] sm:$0xff]
        %v1720 = vld [vmem:[#allocation3 + $0xe0] sm:$0xff]
        %v1721 = vld [vmem:[#allocation3 + $0xe8] sm:$0xff]
        %v1722 = vld [vmem:[#allocation3 + $0xf0] sm:$0xff]
        %v1723 = vld [vmem:[#allocation3 + $0xf8] sm:$0xff]
        %1724 = vset.pattern.permute.xlu0 1
        %1725 = vperm.xlu0 %1724, %v1340
        %v1726 = vpop.permute.xlu0 %1725
        %1728 = vset.pattern.permute.xlu0 1
        %1729 = vperm.xlu0 %1728, %v1341
        %v1730 = vpop.permute.xlu0 %1729
        %1732 = vset.pattern.permute.xlu0 1
        %1733 = vperm.xlu0 %1732, %v1342
        %v1734 = vpop.permute.xlu0 %1733
        %1736 = vset.pattern.permute.xlu0 1
        %1737 = vperm.xlu0 %1736, %v1343
        %v1738 = vpop.permute.xlu0 %1737
        %1740 = vset.pattern.permute.xlu0 1
        %1741 = vperm.xlu0 %1740, %v1344
        %v1742 = vpop.permute.xlu0 %1741
        %1744 = vset.pattern.permute.xlu0 1
        %1745 = vperm.xlu0 %1744, %v1345
        %v1746 = vpop.permute.xlu0 %1745
        %1748 = vset.pattern.permute.xlu0 1
        %1749 = vperm.xlu0 %1748, %v1346
        %v1750 = vpop.permute.xlu0 %1749
        %1752 = vset.pattern.permute.xlu0 1
        %1753 = vperm.xlu0 %1752, %v1347
        %v1754 = vpop.permute.xlu0 %1753
        %1756 = vset.pattern.permute.xlu0 1
        %1757 = vperm.xlu0 %1756, %v1348
        %v1758 = vpop.permute.xlu0 %1757
        %1760 = vset.pattern.permute.xlu0 1
        %1761 = vperm.xlu0 %1760, %v1349
        %v1762 = vpop.permute.xlu0 %1761
        %1764 = vset.pattern.permute.xlu0 1
        %1765 = vperm.xlu0 %1764, %v1350
        %v1766 = vpop.permute.xlu0 %1765
        %1768 = vset.pattern.permute.xlu0 1
        %1769 = vperm.xlu0 %1768, %v1351
        %v1770 = vpop.permute.xlu0 %1769
        %1772 = vset.pattern.permute.xlu0 1
        %1773 = vperm.xlu0 %1772, %v1352
        %v1774 = vpop.permute.xlu0 %1773
        %1776 = vset.pattern.permute.xlu0 1
        %1777 = vperm.xlu0 %1776, %v1353
        %v1778 = vpop.permute.xlu0 %1777
        %1780 = vset.pattern.permute.xlu0 1
        %1781 = vperm.xlu0 %1780, %v1354
        %v1782 = vpop.permute.xlu0 %1781
        %1784 = vset.pattern.permute.xlu0 1
        %1785 = vperm.xlu0 %1784, %v1355
        %v1786 = vpop.permute.xlu0 %1785
        %1788 = vset.pattern.permute.xlu0 1
        %1789 = vperm.xlu0 %1788, %v1356
        %v1790 = vpop.permute.xlu0 %1789
        %1792 = vset.pattern.permute.xlu0 1
        %1793 = vperm.xlu0 %1792, %v1357
        %v1794 = vpop.permute.xlu0 %1793
        %1796 = vset.pattern.permute.xlu0 1
        %1797 = vperm.xlu0 %1796, %v1358
        %v1798 = vpop.permute.xlu0 %1797
        %1800 = vset.pattern.permute.xlu0 1
        %1801 = vperm.xlu0 %1800, %v1359
        %v1802 = vpop.permute.xlu0 %1801
        %1804 = vset.pattern.permute.xlu0 1
        %1805 = vperm.xlu0 %1804, %v1360
        %v1806 = vpop.permute.xlu0 %1805
        %1808 = vset.pattern.permute.xlu0 1
        %1809 = vperm.xlu0 %1808, %v1361
        %v1810 = vpop.permute.xlu0 %1809
        %1812 = vset.pattern.permute.xlu0 1
        %1813 = vperm.xlu0 %1812, %v1362
        %v1814 = vpop.permute.xlu0 %1813
        %1816 = vset.pattern.permute.xlu0 1
        %1817 = vperm.xlu0 %1816, %v1363
        %v1818 = vpop.permute.xlu0 %1817
        %1820 = vset.pattern.permute.xlu0 1
        %1821 = vperm.xlu0 %1820, %v1364
        %v1822 = vpop.permute.xlu0 %1821
        %1824 = vset.pattern.permute.xlu0 1
        %1825 = vperm.xlu0 %1824, %v1365
        %v1826 = vpop.permute.xlu0 %1825
        %1828 = vset.pattern.permute.xlu0 1
        %1829 = vperm.xlu0 %1828, %v1366
        %v1830 = vpop.permute.xlu0 %1829
        %1832 = vset.pattern.permute.xlu0 1
        %1833 = vperm.xlu0 %1832, %v1367
        %v1834 = vpop.permute.xlu0 %1833
        %1836 = vset.pattern.permute.xlu0 1
        %1837 = vperm.xlu0 %1836, %v1368
        %v1838 = vpop.permute.xlu0 %1837
        %1840 = vset.pattern.permute.xlu0 1
        %1841 = vperm.xlu0 %1840, %v1369
        %v1842 = vpop.permute.xlu0 %1841
        %1844 = vset.pattern.permute.xlu0 1
        %1845 = vperm.xlu0 %1844, %v1370
        %v1846 = vpop.permute.xlu0 %1845
        %1848 = vset.pattern.permute.xlu0 1
        %1849 = vperm.xlu0 %1848, %v1371
        %v1850 = vpop.permute.xlu0 %1849
        %v1884 = vunpack.c.l.b16 %v1692
        %v1885 = vunpack.c.h.b16 %v1692
        %v1886 = vunpack.c.l.b16 %v1693
        %v1887 = vunpack.c.h.b16 %v1693
        %v1888 = vunpack.c.l.b16 %v1694
        %v1889 = vunpack.c.h.b16 %v1694
        %v1890 = vunpack.c.l.b16 %v1695
        %v1891 = vunpack.c.h.b16 %v1695
        %v1892 = vunpack.c.l.b16 %v1696
        %v1893 = vunpack.c.h.b16 %v1696
        %v1894 = vunpack.c.l.b16 %v1697
        %v1895 = vunpack.c.h.b16 %v1697
        %v1896 = vunpack.c.l.b16 %v1698
        %v1897 = vunpack.c.h.b16 %v1698
        %v1898 = vunpack.c.l.b16 %v1699
        %v1899 = vunpack.c.h.b16 %v1699
        %v1900 = vunpack.c.l.b16 %v1700
        %v1901 = vunpack.c.h.b16 %v1700
        %v1902 = vunpack.c.l.b16 %v1701
        %v1903 = vunpack.c.h.b16 %v1701
        %v1904 = vunpack.c.l.b16 %v1702
        %v1905 = vunpack.c.h.b16 %v1702
        %v1906 = vunpack.c.l.b16 %v1703
        %v1907 = vunpack.c.h.b16 %v1703
        %v1908 = vunpack.c.l.b16 %v1704
        %v1909 = vunpack.c.h.b16 %v1704
        %v1910 = vunpack.c.l.b16 %v1705
        %v1911 = vunpack.c.h.b16 %v1705
        %v1912 = vunpack.c.l.b16 %v1706
        %v1913 = vunpack.c.h.b16 %v1706
        %v1914 = vunpack.c.l.b16 %v1707
        %v1915 = vunpack.c.h.b16 %v1707
        %v1916 = vunpack.c.l.b16 %v1708
        %v1917 = vunpack.c.h.b16 %v1708
        %v1918 = vunpack.c.l.b16 %v1709
        %v1919 = vunpack.c.h.b16 %v1709
        %v1920 = vunpack.c.l.b16 %v1710
        %v1921 = vunpack.c.h.b16 %v1710
        %v1922 = vunpack.c.l.b16 %v1711
        %v1923 = vunpack.c.h.b16 %v1711
        %v1924 = vunpack.c.l.b16 %v1712
        %v1925 = vunpack.c.h.b16 %v1712
        %v1926 = vunpack.c.l.b16 %v1713
        %v1927 = vunpack.c.h.b16 %v1713
        %v1928 = vunpack.c.l.b16 %v1714
        %v1929 = vunpack.c.h.b16 %v1714
        %v1930 = vunpack.c.l.b16 %v1715
        %v1931 = vunpack.c.h.b16 %v1715
        %v1932 = vunpack.c.l.b16 %v1716
        %v1933 = vunpack.c.h.b16 %v1716
        %v1934 = vunpack.c.l.b16 %v1717
        %v1935 = vunpack.c.h.b16 %v1717
        %v1936 = vunpack.c.l.b16 %v1718
        %v1937 = vunpack.c.h.b16 %v1718
        %v1938 = vunpack.c.l.b16 %v1719
        %v1939 = vunpack.c.h.b16 %v1719
        %v1940 = vunpack.c.l.b16 %v1720
        %v1941 = vunpack.c.h.b16 %v1720
        %v1942 = vunpack.c.l.b16 %v1721
        %v1943 = vunpack.c.h.b16 %v1721
        %v1944 = vunpack.c.l.b16 %v1722
        %v1945 = vunpack.c.h.b16 %v1722
        %v1946 = vunpack.c.l.b16 %v1723
        %v1947 = vunpack.c.h.b16 %v1723
        %v1948 = vpack.c.b16 %v1886, %v1884
        %v1949 = vpack.c.b16 %v1887, %v1885
        %v1950 = vpack.c.b16 %v1890, %v1888
        %v1951 = vpack.c.b16 %v1891, %v1889
        %v1952 = vpack.c.b16 %v1894, %v1892
        %v1953 = vpack.c.b16 %v1895, %v1893
        %v1954 = vpack.c.b16 %v1898, %v1896
        %v1955 = vpack.c.b16 %v1899, %v1897
        %v1956 = vpack.c.b16 %v1902, %v1900
        %v1957 = vpack.c.b16 %v1903, %v1901
        %v1958 = vpack.c.b16 %v1906, %v1904
        %v1959 = vpack.c.b16 %v1907, %v1905
        %v1960 = vpack.c.b16 %v1910, %v1908
        %v1961 = vpack.c.b16 %v1911, %v1909
        %v1962 = vpack.c.b16 %v1914, %v1912
        %v1963 = vpack.c.b16 %v1915, %v1913
        %v1964 = vpack.c.b16 %v1918, %v1916
        %v1965 = vpack.c.b16 %v1919, %v1917
        %v1966 = vpack.c.b16 %v1922, %v1920
        %v1967 = vpack.c.b16 %v1923, %v1921
        %v1968 = vpack.c.b16 %v1926, %v1924
        %v1969 = vpack.c.b16 %v1927, %v1925
        %v1970 = vpack.c.b16 %v1930, %v1928
        %v1971 = vpack.c.b16 %v1931, %v1929
        %v1972 = vpack.c.b16 %v1934, %v1932
        %v1973 = vpack.c.b16 %v1935, %v1933
        %v1974 = vpack.c.b16 %v1938, %v1936
        %v1975 = vpack.c.b16 %v1939, %v1937
        %v1976 = vpack.c.b16 %v1942, %v1940
        %v1977 = vpack.c.b16 %v1943, %v1941
        %v1978 = vpack.c.b16 %v1946, %v1944
        %v1979 = vpack.c.b16 %v1947, %v1945
        %2012 = vmatprep.subr.bf16.mxu0 %v1661
        %2013 = vmatpush1.bf16.msra.mxu0 %v1660
        %2014 = vmatprep.subr.bf16.mxu0 %v1663
        %2015 = vmatpush1.bf16.msra.mxu0 %v1662
        %2016 = vmatprep.subr.bf16.mxu0 %v1665
        %2017 = vmatpush1.bf16.msra.mxu0 %v1664
        %2018 = vmatprep.subr.bf16.mxu0 %v1667
        %2019 = vmatpush1.bf16.msra.mxu0 %v1666
        %2020 = vmatprep.subr.bf16.mxu0 %v1669
        %2021 = vmatpush1.bf16.msra.mxu0 %v1668
        %2022 = vmatprep.subr.bf16.mxu0 %v1671
        %2023 = vmatpush1.bf16.msra.mxu0 %v1670
        %2024 = vmatprep.subr.bf16.mxu0 %v1673
        %2025 = vmatpush1.bf16.msra.mxu0 %v1672
        %2026 = vmatprep.subr.bf16.mxu0 %v1675
        %2027 = vmatpush1.bf16.msra.mxu0 %v1674
        %2028 = vmatprep.subr.bf16.mxu0 %v1677
        %2029 = vmatpush1.bf16.msra.mxu0 %v1676
        %2030 = vmatprep.subr.bf16.mxu0 %v1679
        %2031 = vmatpush1.bf16.msra.mxu0 %v1678
        %2032 = vmatprep.subr.bf16.mxu0 %v1681
        %2033 = vmatpush1.bf16.msra.mxu0 %v1680
        %2034 = vmatprep.subr.bf16.mxu0 %v1683
        %2035 = vmatpush1.bf16.msra.mxu0 %v1682
        %2036 = vmatprep.subr.bf16.mxu0 %v1685
        %2037 = vmatpush1.bf16.msra.mxu0 %v1684
        %2038 = vmatprep.subr.bf16.mxu0 %v1687
        %2039 = vmatpush1.bf16.msra.mxu0 %v1686
        %2040 = vmatprep.subr.bf16.mxu0 %v1689
        %2041 = vmatpush1.bf16.msra.mxu0 %v1688
        %2042 = vmatprep.subr.bf16.mxu0 %v1691
        %2043 = vmatpush1.bf16.msra.mxu0 %v1690
        %2044 = vmatprep.mubr.bf16.mxu0 %v1949
        %2045 = vmatmul.mubr.bf16.gmra.mrb[0].mxu0 %v1948
        %v2046 = vpop.f32.mrb[0].mxu0
        %v2047 = vadd.f32 %v1726, %v2046
        %v2048 = vpop.f32.mrb[0].mxu0
        %v2049 = vadd.f32 %v1726, %v2048
        %v2050 = vpop.f32.mrb[0].mxu0
        %v2051 = vadd.f32 %v1730, %v2050
        %v2052 = vpop.f32.mrb[0].mxu0
        %v2053 = vadd.f32 %v1730, %v2052
        %2054 = vmatprep.mubr.bf16.mxu0 %v1951
        %2055 = vmatmul.mubr.bf16.gmra.mrb[0].mxu0 %v1950
        %v2056 = vpop.f32.mrb[0].mxu0
        %v2057 = vadd.f32 %v1734, %v2056
        %v2058 = vpop.f32.mrb[0].mxu0
        %v2059 = vadd.f32 %v1734, %v2058
        %v2060 = vpop.f32.mrb[0].mxu0
        %v2061 = vadd.f32 %v1738, %v2060
        %v2062 = vpop.f32.mrb[0].mxu0
        %v2063 = vadd.f32 %v1738, %v2062
        %2064 = vmatprep.mubr.bf16.mxu0 %v1953
        %2065 = vmatmul.mubr.bf16.gmra.mrb[0].mxu0 %v1952
        %v2066 = vpop.f32.mrb[0].mxu0
        %v2067 = vadd.f32 %v1742, %v2066
        %v2068 = vpop.f32.mrb[0].mxu0
        %v2069 = vadd.f32 %v1742, %v2068
        %v2070 = vpop.f32.mrb[0].mxu0
        %v2071 = vadd.f32 %v1746, %v2070
        %v2072 = vpop.f32.mrb[0].mxu0
        %v2073 = vadd.f32 %v1746, %v2072
        %2074 = vmatprep.mubr.bf16.mxu0 %v1955
        %2075 = vmatmul.mubr.bf16.gmra.mrb[0].mxu0 %v1954
        %v2076 = vpop.f32.mrb[0].mxu0
        %v2077 = vadd.f32 %v1750, %v2076
        %v2078 = vpop.f32.mrb[0].mxu0
        %v2079 = vadd.f32 %v1750, %v2078
        %v2080 = vpop.f32.mrb[0].mxu0
        %v2081 = vadd.f32 %v1754, %v2080
        %v2082 = vpop.f32.mrb[0].mxu0
        %v2083 = vadd.f32 %v1754, %v2082
        %2084 = vmatprep.mubr.bf16.mxu0 %v1957
        %2085 = vmatmul.mubr.bf16.gmra.mrb[0].mxu0 %v1956
        %v2086 = vpop.f32.mrb[0].mxu0
        %v2087 = vadd.f32 %v1758, %v2086
        %v2088 = vpop.f32.mrb[0].mxu0
        %v2089 = vadd.f32 %v1758, %v2088
        %v2090 = vpop.f32.mrb[0].mxu0
        %v2091 = vadd.f32 %v1762, %v2090
        %v2092 = vpop.f32.mrb[0].mxu0
        %v2093 = vadd.f32 %v1762, %v2092
        %2094 = vmatprep.mubr.bf16.mxu0 %v1959
        %2095 = vmatmul.mubr.bf16.gmra.mrb[0].mxu0 %v1958
        %v2096 = vpop.f32.mrb[0].mxu0
        %v2097 = vadd.f32 %v1766, %v2096
        %v2098 = vpop.f32.mrb[0].mxu0
        %v2099 = vadd.f32 %v1766, %v2098
        %v2100 = vpop.f32.mrb[0].mxu0
        %v2101 = vadd.f32 %v1770, %v2100
        %v2102 = vpop.f32.mrb[0].mxu0
        %v2103 = vadd.f32 %v1770, %v2102
        %2104 = vmatprep.mubr.bf16.mxu0 %v1961
        %2105 = vmatmul.mubr.bf16.gmra.mrb[0].mxu0 %v1960
        %v2106 = vpop.f32.mrb[0].mxu0
        %v2107 = vadd.f32 %v1774, %v2106
        %v2108 = vpop.f32.mrb[0].mxu0
        %v2109 = vadd.f32 %v1774, %v2108
        %v2110 = vpop.f32.mrb[0].mxu0
        %v2111 = vadd.f32 %v1778, %v2110
        %v2112 = vpop.f32.mrb[0].mxu0
        %v2113 = vadd.f32 %v1778, %v2112
        %2114 = vmatprep.mubr.bf16.mxu0 %v1963
        %2115 = vmatmul.mubr.bf16.gmra.mrb[0].mxu0 %v1962
        %v2116 = vpop.f32.mrb[0].mxu0
        %v2117 = vadd.f32 %v1782, %v2116
        %v2118 = vpop.f32.mrb[0].mxu0
        %v2119 = vadd.f32 %v1782, %v2118
        %v2120 = vpop.f32.mrb[0].mxu0
        %v2121 = vadd.f32 %v1786, %v2120
        %v2122 = vpop.f32.mrb[0].mxu0
        %v2123 = vadd.f32 %v1786, %v2122
        %2124 = vmatprep.mubr.bf16.mxu0 %v1965
        %2125 = vmatmul.mubr.bf16.gmra.mrb[0].mxu0 %v1964
        %v2126 = vpop.f32.mrb[0].mxu0
        %v2127 = vadd.f32 %v1790, %v2126
        %v2128 = vpop.f32.mrb[0].mxu0
        %v2129 = vadd.f32 %v1790, %v2128
        %v2130 = vpop.f32.mrb[0].mxu0
        %v2131 = vadd.f32 %v1794, %v2130
        %v2132 = vpop.f32.mrb[0].mxu0
        %v2133 = vadd.f32 %v1794, %v2132
        %2134 = vmatprep.mubr.bf16.mxu0 %v1967
        %2135 = vmatmul.mubr.bf16.gmra.mrb[0].mxu0 %v1966
        %v2136 = vpop.f32.mrb[0].mxu0
        %v2137 = vadd.f32 %v1798, %v2136
        %v2138 = vpop.f32.mrb[0].mxu0
        %v2139 = vadd.f32 %v1798, %v2138
        %v2140 = vpop.f32.mrb[0].mxu0
        %v2141 = vadd.f32 %v1802, %v2140
        %v2142 = vpop.f32.mrb[0].mxu0
        %v2143 = vadd.f32 %v1802, %v2142
        %2144 = vmatprep.mubr.bf16.mxu0 %v1969
        %2145 = vmatmul.mubr.bf16.gmra.mrb[0].mxu0 %v1968
        %v2146 = vpop.f32.mrb[0].mxu0
        %v2147 = vadd.f32 %v1806, %v2146
        %v2148 = vpop.f32.mrb[0].mxu0
        %v2149 = vadd.f32 %v1806, %v2148
        %v2150 = vpop.f32.mrb[0].mxu0
        %v2151 = vadd.f32 %v1810, %v2150
        %v2152 = vpop.f32.mrb[0].mxu0
        %v2153 = vadd.f32 %v1810, %v2152
        %2154 = vmatprep.mubr.bf16.mxu0 %v1971
        %2155 = vmatmul.mubr.bf16.gmra.mrb[0].mxu0 %v1970
        %v2156 = vpop.f32.mrb[0].mxu0
        %v2157 = vadd.f32 %v1814, %v2156
        %v2158 = vpop.f32.mrb[0].mxu0
        %v2159 = vadd.f32 %v1814, %v2158
        %v2160 = vpop.f32.mrb[0].mxu0
        %v2161 = vadd.f32 %v1818, %v2160
        %v2162 = vpop.f32.mrb[0].mxu0
        %v2163 = vadd.f32 %v1818, %v2162
        %2164 = vmatprep.mubr.bf16.mxu0 %v1973
        %2165 = vmatmul.mubr.bf16.gmra.mrb[0].mxu0 %v1972
        %v2166 = vpop.f32.mrb[0].mxu0
        %v2167 = vadd.f32 %v1822, %v2166
        %v2168 = vpop.f32.mrb[0].mxu0
        %v2169 = vadd.f32 %v1822, %v2168
        %v2170 = vpop.f32.mrb[0].mxu0
        %v2171 = vadd.f32 %v1826, %v2170
        %v2172 = vpop.f32.mrb[0].mxu0
        %v2173 = vadd.f32 %v1826, %v2172
        %2174 = vmatprep.mubr.bf16.mxu0 %v1975
        %2175 = vmatmul.mubr.bf16.gmra.mrb[0].mxu0 %v1974
        %v2176 = vpop.f32.mrb[0].mxu0
        %v2177 = vadd.f32 %v1830, %v2176
        %v2178 = vpop.f32.mrb[0].mxu0
        %v2179 = vadd.f32 %v1830, %v2178
        %v2180 = vpop.f32.mrb[0].mxu0
        %v2181 = vadd.f32 %v1834, %v2180
        %v2182 = vpop.f32.mrb[0].mxu0
        %v2183 = vadd.f32 %v1834, %v2182
        %2184 = vmatprep.mubr.bf16.mxu0 %v1977
        %2185 = vmatmul.mubr.bf16.gmra.mrb[0].mxu0 %v1976
        %v2186 = vpop.f32.mrb[0].mxu0
        %v2187 = vadd.f32 %v1838, %v2186
        %v2188 = vpop.f32.mrb[0].mxu0
        %v2189 = vadd.f32 %v1838, %v2188
        %v2190 = vpop.f32.mrb[0].mxu0
        %v2191 = vadd.f32 %v1842, %v2190
        %v2192 = vpop.f32.mrb[0].mxu0
        %v2193 = vadd.f32 %v1842, %v2192
        %2194 = vmatprep.mubr.bf16.mxu0 %v1979
        %2195 = vmatmul.mubr.bf16.gmra.mrb[0].mxu0 %v1978
        %v2196 = vpop.f32.mrb[0].mxu0
        %v2197 = vadd.f32 %v1846, %v2196
        %v2198 = vpop.f32.mrb[0].mxu0
        %v2199 = vadd.f32 %v1846, %v2198
        %v2200 = vpop.f32.mrb[0].mxu0
        %v2201 = vadd.f32 %v1850, %v2200
        %v2202 = vpop.f32.mrb[0].mxu0
        %v2203 = vadd.f32 %v1850, %v2202
        %2204 = vdwg.mxu0
        %v2205 = vmax.f32 %v2047, 0.0
        %v2206 = vmax.f32 %v2049, 0.0
        %v2207 = vmax.f32 %v2051, 0.0
        %v2208 = vmax.f32 %v2053, 0.0
        %v2209 = vmax.f32 %v2057, 0.0
        %v2210 = vmax.f32 %v2059, 0.0
        %v2211 = vmax.f32 %v2061, 0.0
        %v2212 = vmax.f32 %v2063, 0.0
        %v2213 = vmax.f32 %v2067, 0.0
        %v2214 = vmax.f32 %v2069, 0.0
        %v2215 = vmax.f32 %v2071, 0.0
        %v2216 = vmax.f32 %v2073, 0.0
        %v2217 = vmax.f32 %v2077, 0.0
        %v2218 = vmax.f32 %v2079, 0.0
        %v2219 = vmax.f32 %v2081, 0.0
        %v2220 = vmax.f32 %v2083, 0.0
        %v2221 = vmax.f32 %v2087, 0.0
        %v2222 = vmax.f32 %v2089, 0.0
        %v2223 = vmax.f32 %v2091, 0.0
        %v2224 = vmax.f32 %v2093, 0.0
        %v2225 = vmax.f32 %v2097, 0.0
        %v2226 = vmax.f32 %v2099, 0.0
        %v2227 = vmax.f32 %v2101, 0.0
        %v2228 = vmax.f32 %v2103, 0.0
        %v2229 = vmax.f32 %v2107, 0.0
        %v2230 = vmax.f32 %v2109, 0.0
        %v2231 = vmax.f32 %v2111, 0.0
        %v2232 = vmax.f32 %v2113, 0.0
        %v2233 = vmax.f32 %v2117, 0.0
        %v2234 = vmax.f32 %v2119, 0.0
        %v2235 = vmax.f32 %v2121, 0.0
        %v2236 = vmax.f32 %v2123, 0.0
        %v2237 = vmax.f32 %v2127, 0.0
        %v2238 = vmax.f32 %v2129, 0.0
        %v2239 = vmax.f32 %v2131, 0.0
        %v2240 = vmax.f32 %v2133, 0.0
        %v2241 = vmax.f32 %v2137, 0.0
        %v2242 = vmax.f32 %v2139, 0.0
        %v2243 = vmax.f32 %v2141, 0.0
        %v2244 = vmax.f32 %v2143, 0.0
        %v2245 = vmax.f32 %v2147, 0.0
        %v2246 = vmax.f32 %v2149, 0.0
        %v2247 = vmax.f32 %v2151, 0.0
        %v2248 = vmax.f32 %v2153, 0.0
        %v2249 = vmax.f32 %v2157, 0.0
        %v2250 = vmax.f32 %v2159, 0.0
        %v2251 = vmax.f32 %v2161, 0.0
        %v2252 = vmax.f32 %v2163, 0.0
        %v2253 = vmax.f32 %v2167, 0.0
        %v2254 = vmax.f32 %v2169, 0.0
        %v2255 = vmax.f32 %v2171, 0.0
        %v2256 = vmax.f32 %v2173, 0.0
        %v2257 = vmax.f32 %v2177, 0.0
        %v2258 = vmax.f32 %v2179, 0.0
        %v2259 = vmax.f32 %v2181, 0.0
        %v2260 = vmax.f32 %v2183, 0.0
        %v2261 = vmax.f32 %v2187, 0.0
        %v2262 = vmax.f32 %v2189, 0.0
        %v2263 = vmax.f32 %v2191, 0.0
        %v2264 = vmax.f32 %v2193, 0.0
        %v2265 = vmax.f32 %v2197, 0.0
        %v2266 = vmax.f32 %v2199, 0.0
        %v2267 = vmax.f32 %v2201, 0.0
        %v2268 = vmax.f32 %v2203, 0.0
        %v2269 = vpack.c.bf16 %v2207, %v2205
        %v2270 = vpack.c.bf16 %v2208, %v2206
        %v2271 = vpack.c.bf16 %v2211, %v2209
        %v2272 = vpack.c.bf16 %v2212, %v2210
        %v2273 = vpack.c.bf16 %v2215, %v2213
        %v2274 = vpack.c.bf16 %v2216, %v2214
        %v2275 = vpack.c.bf16 %v2219, %v2217
        %v2276 = vpack.c.bf16 %v2220, %v2218
        %v2277 = vpack.c.bf16 %v2223, %v2221
        %v2278 = vpack.c.bf16 %v2224, %v2222
        %v2279 = vpack.c.bf16 %v2227, %v2225
        %v2280 = vpack.c.bf16 %v2228, %v2226
        %v2281 = vpack.c.bf16 %v2231, %v2229
        %v2282 = vpack.c.bf16 %v2232, %v2230
        %v2283 = vpack.c.bf16 %v2235, %v2233
        %v2284 = vpack.c.bf16 %v2236, %v2234
        %v2285 = vpack.c.bf16 %v2239, %v2237
        %v2286 = vpack.c.bf16 %v2240, %v2238
        %v2287 = vpack.c.bf16 %v2243, %v2241
        %v2288 = vpack.c.bf16 %v2244, %v2242
        %v2289 = vpack.c.bf16 %v2247, %v2245
        %v2290 = vpack.c.bf16 %v2248, %v2246
        %v2291 = vpack.c.bf16 %v2251, %v2249
        %v2292 = vpack.c.bf16 %v2252, %v2250
        %v2293 = vpack.c.bf16 %v2255, %v2253
        %v2294 = vpack.c.bf16 %v2256, %v2254
        %v2295 = vpack.c.bf16 %v2259, %v2257
        %v2296 = vpack.c.bf16 %v2260, %v2258
        %v2297 = vpack.c.bf16 %v2263, %v2261
        %v2298 = vpack.c.bf16 %v2264, %v2262
        %v2299 = vpack.c.bf16 %v2267, %v2265
        %v2300 = vpack.c.bf16 %v2268, %v2266
        %s2301 = scalar_lea.vmem [#allocation3], 256
        %v2302 = vld [vmem:[%s2301] sm:$0xff]
        %v2303 = vld [vmem:[%s2301 + $0x8] sm:$0xff]
        %v2304 = vld [vmem:[%s2301 + $0x10] sm:$0xff]
        %v2305 = vld [vmem:[%s2301 + $0x18] sm:$0xff]
        %v2306 = vld [vmem:[%s2301 + $0x20] sm:$0xff]
        %v2307 = vld [vmem:[%s2301 + $0x28] sm:$0xff]
        %v2308 = vld [vmem:[%s2301 + $0x30] sm:$0xff]
        %v2309 = vld [vmem:[%s2301 + $0x38] sm:$0xff]
        %v2310 = vld [vmem:[%s2301 + $0x40] sm:$0xff]
        %v2311 = vld [vmem:[%s2301 + $0x48] sm:$0xff]
        %v2312 = vld [vmem:[%s2301 + $0x50] sm:$0xff]
        %v2313 = vld [vmem:[%s2301 + $0x58] sm:$0xff]
        %v2314 = vld [vmem:[%s2301 + $0x60] sm:$0xff]
        %v2315 = vld [vmem:[%s2301 + $0x68] sm:$0xff]
        %v2316 = vld [vmem:[%s2301 + $0x70] sm:$0xff]
        %v2317 = vld [vmem:[%s2301 + $0x78] sm:$0xff]
        %v2318 = vld [vmem:[%s2301 + $0x80] sm:$0xff]
        %v2319 = vld [vmem:[%s2301 + $0x88] sm:$0xff]
        %v2320 = vld [vmem:[%s2301 + $0x90] sm:$0xff]
        %v2321 = vld [vmem:[%s2301 + $0x98] sm:$0xff]
        %v2322 = vld [vmem:[%s2301 + $0xa0] sm:$0xff]
        %v2323 = vld [vmem:[%s2301 + $0xa8] sm:$0xff]
        %v2324 = vld [vmem:[%s2301 + $0xb0] sm:$0xff]
        %v2325 = vld [vmem:[%s2301 + $0xb8] sm:$0xff]
        %v2326 = vld [vmem:[%s2301 + $0xc0] sm:$0xff]
        %v2327 = vld [vmem:[%s2301 + $0xc8] sm:$0xff]
        %v2328 = vld [vmem:[%s2301 + $0xd0] sm:$0xff]
        %v2329 = vld [vmem:[%s2301 + $0xd8] sm:$0xff]
        %v2330 = vld [vmem:[%s2301 + $0xe0] sm:$0xff]
        %v2331 = vld [vmem:[%s2301 + $0xe8] sm:$0xff]
        %v2332 = vld [vmem:[%s2301 + $0xf0] sm:$0xff]
        %v2333 = vld [vmem:[%s2301 + $0xf8] sm:$0xff]
        %2334 = vset.pattern.permute.xlu0 2
        %2335 = vperm.xlu0 %2334, %v1340
        %v2336 = vpop.permute.xlu0 %2335
        %2338 = vset.pattern.permute.xlu0 2
        %2339 = vperm.xlu0 %2338, %v1341
        %v2340 = vpop.permute.xlu0 %2339
        %2342 = vset.pattern.permute.xlu0 2
        %2343 = vperm.xlu0 %2342, %v1342
        %v2344 = vpop.permute.xlu0 %2343
        %2346 = vset.pattern.permute.xlu0 2
        %2347 = vperm.xlu0 %2346, %v1343
        %v2348 = vpop.permute.xlu0 %2347
        %2350 = vset.pattern.permute.xlu0 2
        %2351 = vperm.xlu0 %2350, %v1344
        %v2352 = vpop.permute.xlu0 %2351
        %2354 = vset.pattern.permute.xlu0 2
        %2355 = vperm.xlu0 %2354, %v1345
        %v2356 = vpop.permute.xlu0 %2355
        %2358 = vset.pattern.permute.xlu0 2
        %2359 = vperm.xlu0 %2358, %v1346
        %v2360 = vpop.permute.xlu0 %2359
        %2362 = vset.pattern.permute.xlu0 2
        %2363 = vperm.xlu0 %2362, %v1347
        %v2364 = vpop.permute.xlu0 %2363
        %2366 = vset.pattern.permute.xlu0 2
        %2367 = vperm.xlu0 %2366, %v1348
        %v2368 = vpop.permute.xlu0 %2367
        %2370 = vset.pattern.permute.xlu0 2
        %2371 = vperm.xlu0 %2370, %v1349
        %v2372 = vpop.permute.xlu0 %2371
        %2374 = vset.pattern.permute.xlu0 2
        %2375 = vperm.xlu0 %2374, %v1350
        %v2376 = vpop.permute.xlu0 %2375
        %2378 = vset.pattern.permute.xlu0 2
        %2379 = vperm.xlu0 %2378, %v1351
        %v2380 = vpop.permute.xlu0 %2379
        %2382 = vset.pattern.permute.xlu0 2
        %2383 = vperm.xlu0 %2382, %v1352
        %v2384 = vpop.permute.xlu0 %2383
        %2386 = vset.pattern.permute.xlu0 2
        %2387 = vperm.xlu0 %2386, %v1353
        %v2388 = vpop.permute.xlu0 %2387
        %2390 = vset.pattern.permute.xlu0 2
        %2391 = vperm.xlu0 %2390, %v1354
        %v2392 = vpop.permute.xlu0 %2391
        %2394 = vset.pattern.permute.xlu0 2
        %2395 = vperm.xlu0 %2394, %v1355
        %v2396 = vpop.permute.xlu0 %2395
        %2398 = vset.pattern.permute.xlu0 2
        %2399 = vperm.xlu0 %2398, %v1356
        %v2400 = vpop.permute.xlu0 %2399
        %2402 = vset.pattern.permute.xlu0 2
        %2403 = vperm.xlu0 %2402, %v1357
        %v2404 = vpop.permute.xlu0 %2403
        %2406 = vset.pattern.permute.xlu0 2
        %2407 = vperm.xlu0 %2406, %v1358
        %v2408 = vpop.permute.xlu0 %2407
        %2410 = vset.pattern.permute.xlu0 2
        %2411 = vperm.xlu0 %2410, %v1359
        %v2412 = vpop.permute.xlu0 %2411
        %2414 = vset.pattern.permute.xlu0 2
        %2415 = vperm.xlu0 %2414, %v1360
        %v2416 = vpop.permute.xlu0 %2415
        %2418 = vset.pattern.permute.xlu0 2
        %2419 = vperm.xlu0 %2418, %v1361
        %v2420 = vpop.permute.xlu0 %2419
        %2422 = vset.pattern.permute.xlu0 2
        %2423 = vperm.xlu0 %2422, %v1362
        %v2424 = vpop.permute.xlu0 %2423
        %2426 = vset.pattern.permute.xlu0 2
        %2427 = vperm.xlu0 %2426, %v1363
        %v2428 = vpop.permute.xlu0 %2427
        %2430 = vset.pattern.permute.xlu0 2
        %2431 = vperm.xlu0 %2430, %v1364
        %v2432 = vpop.permute.xlu0 %2431
        %2434 = vset.pattern.permute.xlu0 2
        %2435 = vperm.xlu0 %2434, %v1365
        %v2436 = vpop.permute.xlu0 %2435
        %2438 = vset.pattern.permute.xlu0 2
        %2439 = vperm.xlu0 %2438, %v1366
        %v2440 = vpop.permute.xlu0 %2439
        %2442 = vset.pattern.permute.xlu0 2
        %2443 = vperm.xlu0 %2442, %v1367
        %v2444 = vpop.permute.xlu0 %2443
        %2446 = vset.pattern.permute.xlu0 2
        %2447 = vperm.xlu0 %2446, %v1368
        %v2448 = vpop.permute.xlu0 %2447
        %2450 = vset.pattern.permute.xlu0 2
        %2451 = vperm.xlu0 %2450, %v1369
        %v2452 = vpop.permute.xlu0 %2451
        %2454 = vset.pattern.permute.xlu0 2
        %2455 = vperm.xlu0 %2454, %v1370
        %v2456 = vpop.permute.xlu0 %2455
        %2458 = vset.pattern.permute.xlu0 2
        %2459 = vperm.xlu0 %2458, %v1371
        %v2460 = vpop.permute.xlu0 %2459
        %v2494 = vunpack.c.l.b16 %v2302
        %v2495 = vunpack.c.h.b16 %v2302
        %v2496 = vunpack.c.l.b16 %v2303
        %v2497 = vunpack.c.h.b16 %v2303
        %v2498 = vunpack.c.l.b16 %v2304
        %v2499 = vunpack.c.h.b16 %v2304
        %v2500 = vunpack.c.l.b16 %v2305
        %v2501 = vunpack.c.h.b16 %v2305
        %v2502 = vunpack.c.l.b16 %v2306
        %v2503 = vunpack.c.h.b16 %v2306
        %v2504 = vunpack.c.l.b16 %v2307
        %v2505 = vunpack.c.h.b16 %v2307
        %v2506 = vunpack.c.l.b16 %v2308
        %v2507 = vunpack.c.h.b16 %v2308
        %v2508 = vunpack.c.l.b16 %v2309
        %v2509 = vunpack.c.h.b16 %v2309
        %v2510 = vunpack.c.l.b16 %v2310
        %v2511 = vunpack.c.h.b16 %v2310
        %v2512 = vunpack.c.l.b16 %v2311
        %v2513 = vunpack.c.h.b16 %v2311
        %v2514 = vunpack.c.l.b16 %v2312
        %v2515 = vunpack.c.h.b16 %v2312
        %v2516 = vunpack.c.l.b16 %v2313
        %v2517 = vunpack.c.h.b16 %v2313
        %v2518 = vunpack.c.l.b16 %v2314
        %v2519 = vunpack.c.h.b16 %v2314
        %v2520 = vunpack.c.l.b16 %v2315
        %v2521 = vunpack.c.h.b16 %v2315
        %v2522 = vunpack.c.l.b16 %v2316
        %v2523 = vunpack.c.h.b16 %v2316
        %v2524 = vunpack.c.l.b16 %v2317
        %v2525 = vunpack.c.h.b16 %v2317
        %v2526 = vunpack.c.l.b16 %v2318
        %v2527 = vunpack.c.h.b16 %v2318
        %v2528 = vunpack.c.l.b16 %v2319
        %v2529 = vunpack.c.h.b16 %v2319
        %v2530 = vunpack.c.l.b16 %v2320
        %v2531 = vunpack.c.h.b16 %v2320
        %v2532 = vunpack.c.l.b16 %v2321
        %v2533 = vunpack.c.h.b16 %v2321
        %v2534 = vunpack.c.l.b16 %v2322
        %v2535 = vunpack.c.h.b16 %v2322
        %v2536 = vunpack.c.l.b16 %v2323
        %v2537 = vunpack.c.h.b16 %v2323
        %v2538 = vunpack.c.l.b16 %v2324
        %v2539 = vunpack.c.h.b16 %v2324
        %v2540 = vunpack.c.l.b16 %v2325
        %v2541 = vunpack.c.h.b16 %v2325
        %v2542 = vunpack.c.l.b16 %v2326
        %v2543 = vunpack.c.h.b16 %v2326
        %v2544 = vunpack.c.l.b16 %v2327
        %v2545 = vunpack.c.h.b16 %v2327
        %v2546 = vunpack.c.l.b16 %v2328
        %v2547 = vunpack.c.h.b16 %v2328
        %v2548 = vunpack.c.l.b16 %v2329
        %v2549 = vunpack.c.h.b16 %v2329
        %v2550 = vunpack.c.l.b16 %v2330
        %v2551 = vunpack.c.h.b16 %v2330
        %v2552 = vunpack.c.l.b16 %v2331
        %v2553 = vunpack.c.h.b16 %v2331
        %v2554 = vunpack.c.l.b16 %v2332
        %v2555 = vunpack.c.h.b16 %v2332
        %v2556 = vunpack.c.l.b16 %v2333
        %v2557 = vunpack.c.h.b16 %v2333
        %v2558 = vpack.c.b16 %v2496, %v2494
        %v2559 = vpack.c.b16 %v2497, %v2495
        %v2560 = vpack.c.b16 %v2500, %v2498
        %v2561 = vpack.c.b16 %v2501, %v2499
        %v2562 = vpack.c.b16 %v2504, %v2502
        %v2563 = vpack.c.b16 %v2505, %v2503
        %v2564 = vpack.c.b16 %v2508, %v2506
        %v2565 = vpack.c.b16 %v2509, %v2507
        %v2566 = vpack.c.b16 %v2512, %v2510
        %v2567 = vpack.c.b16 %v2513, %v2511
        %v2568 = vpack.c.b16 %v2516, %v2514
        %v2569 = vpack.c.b16 %v2517, %v2515
        %v2570 = vpack.c.b16 %v2520, %v2518
        %v2571 = vpack.c.b16 %v2521, %v2519
        %v2572 = vpack.c.b16 %v2524, %v2522
        %v2573 = vpack.c.b16 %v2525, %v2523
        %v2574 = vpack.c.b16 %v2528, %v2526
        %v2575 = vpack.c.b16 %v2529, %v2527
        %v2576 = vpack.c.b16 %v2532, %v2530
        %v2577 = vpack.c.b16 %v2533, %v2531
        %v2578 = vpack.c.b16 %v2536, %v2534
        %v2579 = vpack.c.b16 %v2537, %v2535
        %v2580 = vpack.c.b16 %v2540, %v2538
        %v2581 = vpack.c.b16 %v2541, %v2539
        %v2582 = vpack.c.b16 %v2544, %v2542
        %v2583 = vpack.c.b16 %v2545, %v2543
        %v2584 = vpack.c.b16 %v2548, %v2546
        %v2585 = vpack.c.b16 %v2549, %v2547
        %v2586 = vpack.c.b16 %v2552, %v2550
        %v2587 = vpack.c.b16 %v2553, %v2551
        %v2588 = vpack.c.b16 %v2556, %v2554
        %v2589 = vpack.c.b16 %v2557, %v2555
        %2622 = vmatprep.subr.bf16.mxu0 %v2270
        %2623 = vmatpush1.bf16.msra.mxu0 %v2269
        %2624 = vmatprep.subr.bf16.mxu0 %v2272
        %2625 = vmatpush1.bf16.msra.mxu0 %v2271
        %2626 = vmatprep.subr.bf16.mxu0 %v2274
        %2627 = vmatpush1.bf16.msra.mxu0 %v2273
        %2628 = vmatprep.subr.bf16.mxu0 %v2276
        %2629 = vmatpush1.bf16.msra.mxu0 %v2275
        %2630 = vmatprep.subr.bf16.mxu0 %v2278
        %2631 = vmatpush1.bf16.msra.mxu0 %v2277
        %2632 = vmatprep.subr.bf16.mxu0 %v2280
        %2633 = vmatpush1.bf16.msra.mxu0 %v2279
        %2634 = vmatprep.subr.bf16.mxu0 %v2282
        %2635 = vmatpush1.bf16.msra.mxu0 %v2281
        %2636 = vmatprep.subr.bf16.mxu0 %v2284
        %2637 = vmatpush1.bf16.msra.mxu0 %v2283
        %2638 = vmatprep.subr.bf16.mxu0 %v2286
        %2639 = vmatpush1.bf16.msra.mxu0 %v2285
        %2640 = vmatprep.subr.bf16.mxu0 %v2288
        %2641 = vmatpush1.bf16.msra.mxu0 %v2287
        %2642 = vmatprep.subr.bf16.mxu0 %v2290
        %2643 = vmatpush1.bf16.msra.mxu0 %v2289
        %2644 = vmatprep.subr.bf16.mxu0 %v2292
        %2645 = vmatpush1.bf16.msra.mxu0 %v2291
        %2646 = vmatprep.subr.bf16.mxu0 %v2294
        %2647 = vmatpush1.bf16.msra.mxu0 %v2293
        %2648 = vmatprep.subr.bf16.mxu0 %v2296
        %2649 = vmatpush1.bf16.msra.mxu0 %v2295
        %2650 = vmatprep.subr.bf16.mxu0 %v2298
        %2651 = vmatpush1.bf16.msra.mxu0 %v2297
        %2652 = vmatprep.subr.bf16.mxu0 %v2300
        %2653 = vmatpush1.bf16.msra.mxu0 %v2299
        %2654 = vmatprep.mubr.bf16.mxu0 %v2559
        %2655 = vmatmul.mubr.bf16.gmra.mrb[0].mxu0 %v2558
        %v2656 = vpop.f32.mrb[0].mxu0
        %v2657 = vadd.f32 %v2336, %v2656
        %v2658 = vpop.f32.mrb[0].mxu0
        %v2659 = vadd.f32 %v2336, %v2658
        %v2660 = vpop.f32.mrb[0].mxu0
        %v2661 = vadd.f32 %v2340, %v2660
        %v2662 = vpop.f32.mrb[0].mxu0
        %v2663 = vadd.f32 %v2340, %v2662
        %2664 = vmatprep.mubr.bf16.mxu0 %v2561
        %2665 = vmatmul.mubr.bf16.gmra.mrb[0].mxu0 %v2560
        %v2666 = vpop.f32.mrb[0].mxu0
        %v2667 = vadd.f32 %v2344, %v2666
        %v2668 = vpop.f32.mrb[0].mxu0
        %v2669 = vadd.f32 %v2344, %v2668
        %v2670 = vpop.f32.mrb[0].mxu0
        %v2671 = vadd.f32 %v2348, %v2670
        %v2672 = vpop.f32.mrb[0].mxu0
        %v2673 = vadd.f32 %v2348, %v2672
        %2674 = vmatprep.mubr.bf16.mxu0 %v2563
        %2675 = vmatmul.mubr.bf16.gmra.mrb[0].mxu0 %v2562
        %v2676 = vpop.f32.mrb[0].mxu0
        %v2677 = vadd.f32 %v2352, %v2676
        %v2678 = vpop.f32.mrb[0].mxu0
        %v2679 = vadd.f32 %v2352, %v2678
        %v2680 = vpop.f32.mrb[0].mxu0
        %v2681 = vadd.f32 %v2356, %v2680
        %v2682 = vpop.f32.mrb[0].mxu0
        %v2683 = vadd.f32 %v2356, %v2682
        %2684 = vmatprep.mubr.bf16.mxu0 %v2565
        %2685 = vmatmul.mubr.bf16.gmra.mrb[0].mxu0 %v2564
        %v2686 = vpop.f32.mrb[0].mxu0
        %v2687 = vadd.f32 %v2360, %v2686
        %v2688 = vpop.f32.mrb[0].mxu0
        %v2689 = vadd.f32 %v2360, %v2688
        %v2690 = vpop.f32.mrb[0].mxu0
        %v2691 = vadd.f32 %v2364, %v2690
        %v2692 = vpop.f32.mrb[0].mxu0
        %v2693 = vadd.f32 %v2364, %v2692
        %2694 = vmatprep.mubr.bf16.mxu0 %v2567
        %2695 = vmatmul.mubr.bf16.gmra.mrb[0].mxu0 %v2566
        %v2696 = vpop.f32.mrb[0].mxu0
        %v2697 = vadd.f32 %v2368, %v2696
        %v2698 = vpop.f32.mrb[0].mxu0
        %v2699 = vadd.f32 %v2368, %v2698
        %v2700 = vpop.f32.mrb[0].mxu0
        %v2701 = vadd.f32 %v2372, %v2700
        %v2702 = vpop.f32.mrb[0].mxu0
        %v2703 = vadd.f32 %v2372, %v2702
        %2704 = vmatprep.mubr.bf16.mxu0 %v2569
        %2705 = vmatmul.mubr.bf16.gmra.mrb[0].mxu0 %v2568
        %v2706 = vpop.f32.mrb[0].mxu0
        %v2707 = vadd.f32 %v2376, %v2706
        %v2708 = vpop.f32.mrb[0].mxu0
        %v2709 = vadd.f32 %v2376, %v2708
        %v2710 = vpop.f32.mrb[0].mxu0
        %v2711 = vadd.f32 %v2380, %v2710
        %v2712 = vpop.f32.mrb[0].mxu0
        %v2713 = vadd.f32 %v2380, %v2712
        %2714 = vmatprep.mubr.bf16.mxu0 %v2571
        %2715 = vmatmul.mubr.bf16.gmra.mrb[0].mxu0 %v2570
        %v2716 = vpop.f32.mrb[0].mxu0
        %v2717 = vadd.f32 %v2384, %v2716
        %v2718 = vpop.f32.mrb[0].mxu0
        %v2719 = vadd.f32 %v2384, %v2718
        %v2720 = vpop.f32.mrb[0].mxu0
        %v2721 = vadd.f32 %v2388, %v2720
        %v2722 = vpop.f32.mrb[0].mxu0
        %v2723 = vadd.f32 %v2388, %v2722
        %2724 = vmatprep.mubr.bf16.mxu0 %v2573
        %2725 = vmatmul.mubr.bf16.gmra.mrb[0].mxu0 %v2572
        %v2726 = vpop.f32.mrb[0].mxu0
        %v2727 = vadd.f32 %v2392, %v2726
        %v2728 = vpop.f32.mrb[0].mxu0
        %v2729 = vadd.f32 %v2392, %v2728
        %v2730 = vpop.f32.mrb[0].mxu0
        %v2731 = vadd.f32 %v2396, %v2730
        %v2732 = vpop.f32.mrb[0].mxu0
        %v2733 = vadd.f32 %v2396, %v2732
        %2734 = vmatprep.mubr.bf16.mxu0 %v2575
        %2735 = vmatmul.mubr.bf16.gmra.mrb[0].mxu0 %v2574
        %v2736 = vpop.f32.mrb[0].mxu0
        %v2737 = vadd.f32 %v2400, %v2736
        %v2738 = vpop.f32.mrb[0].mxu0
        %v2739 = vadd.f32 %v2400, %v2738
        %v2740 = vpop.f32.mrb[0].mxu0
        %v2741 = vadd.f32 %v2404, %v2740
        %v2742 = vpop.f32.mrb[0].mxu0
        %v2743 = vadd.f32 %v2404, %v2742
        %2744 = vmatprep.mubr.bf16.mxu0 %v2577
        %2745 = vmatmul.mubr.bf16.gmra.mrb[0].mxu0 %v2576
        %v2746 = vpop.f32.mrb[0].mxu0
        %v2747 = vadd.f32 %v2408, %v2746
        %v2748 = vpop.f32.mrb[0].mxu0
        %v2749 = vadd.f32 %v2408, %v2748
        %v2750 = vpop.f32.mrb[0].mxu0
        %v2751 = vadd.f32 %v2412, %v2750
        %v2752 = vpop.f32.mrb[0].mxu0
        %v2753 = vadd.f32 %v2412, %v2752
        %2754 = vmatprep.mubr.bf16.mxu0 %v2579
        %2755 = vmatmul.mubr.bf16.gmra.mrb[0].mxu0 %v2578
        %v2756 = vpop.f32.mrb[0].mxu0
        %v2757 = vadd.f32 %v2416, %v2756
        %v2758 = vpop.f32.mrb[0].mxu0
        %v2759 = vadd.f32 %v2416, %v2758
        %v2760 = vpop.f32.mrb[0].mxu0
        %v2761 = vadd.f32 %v2420, %v2760
        %v2762 = vpop.f32.mrb[0].mxu0
        %v2763 = vadd.f32 %v2420, %v2762
        %2764 = vmatprep.mubr.bf16.mxu0 %v2581
        %2765 = vmatmul.mubr.bf16.gmra.mrb[0].mxu0 %v2580
        %v2766 = vpop.f32.mrb[0].mxu0
        %v2767 = vadd.f32 %v2424, %v2766
        %v2768 = vpop.f32.mrb[0].mxu0
        %v2769 = vadd.f32 %v2424, %v2768
        %v2770 = vpop.f32.mrb[0].mxu0
        %v2771 = vadd.f32 %v2428, %v2770
        %v2772 = vpop.f32.mrb[0].mxu0
        %v2773 = vadd.f32 %v2428, %v2772
        %2774 = vmatprep.mubr.bf16.mxu0 %v2583
        %2775 = vmatmul.mubr.bf16.gmra.mrb[0].mxu0 %v2582
        %v2776 = vpop.f32.mrb[0].mxu0
        %v2777 = vadd.f32 %v2432, %v2776
        %v2778 = vpop.f32.mrb[0].mxu0
        %v2779 = vadd.f32 %v2432, %v2778
        %v2780 = vpop.f32.mrb[0].mxu0
        %v2781 = vadd.f32 %v2436, %v2780
        %v2782 = vpop.f32.mrb[0].mxu0
        %v2783 = vadd.f32 %v2436, %v2782
        %2784 = vmatprep.mubr.bf16.mxu0 %v2585
        %2785 = vmatmul.mubr.bf16.gmra.mrb[0].mxu0 %v2584
        %v2786 = vpop.f32.mrb[0].mxu0
        %v2787 = vadd.f32 %v2440, %v2786
        %v2788 = vpop.f32.mrb[0].mxu0
        %v2789 = vadd.f32 %v2440, %v2788
        %v2790 = vpop.f32.mrb[0].mxu0
        %v2791 = vadd.f32 %v2444, %v2790
        %v2792 = vpop.f32.mrb[0].mxu0
        %v2793 = vadd.f32 %v2444, %v2792
        %2794 = vmatprep.mubr.bf16.mxu0 %v2587
        %2795 = vmatmul.mubr.bf16.gmra.mrb[0].mxu0 %v2586
        %v2796 = vpop.f32.mrb[0].mxu0
        %v2797 = vadd.f32 %v2448, %v2796
        %v2798 = vpop.f32.mrb[0].mxu0
        %v2799 = vadd.f32 %v2448, %v2798
        %v2800 = vpop.f32.mrb[0].mxu0
        %v2801 = vadd.f32 %v2452, %v2800
        %v2802 = vpop.f32.mrb[0].mxu0
        %v2803 = vadd.f32 %v2452, %v2802
        %2804 = vmatprep.mubr.bf16.mxu0 %v2589
        %2805 = vmatmul.mubr.bf16.gmra.mrb[0].mxu0 %v2588
        %v2806 = vpop.f32.mrb[0].mxu0
        %v2807 = vadd.f32 %v2456, %v2806
        %v2808 = vpop.f32.mrb[0].mxu0
        %v2809 = vadd.f32 %v2456, %v2808
        %v2810 = vpop.f32.mrb[0].mxu0
        %v2811 = vadd.f32 %v2460, %v2810
        %v2812 = vpop.f32.mrb[0].mxu0
        %v2813 = vadd.f32 %v2460, %v2812
        %2814 = vdwg.mxu0
        %v2815 = vmax.f32 %v2657, 0.0
        %v2816 = vmax.f32 %v2659, 0.0
        %v2817 = vmax.f32 %v2661, 0.0
        %v2818 = vmax.f32 %v2663, 0.0
        %v2819 = vmax.f32 %v2667, 0.0
        %v2820 = vmax.f32 %v2669, 0.0
        %v2821 = vmax.f32 %v2671, 0.0
        %v2822 = vmax.f32 %v2673, 0.0
        %v2823 = vmax.f32 %v2677, 0.0
        %v2824 = vmax.f32 %v2679, 0.0
        %v2825 = vmax.f32 %v2681, 0.0
        %v2826 = vmax.f32 %v2683, 0.0
        %v2827 = vmax.f32 %v2687, 0.0
        %v2828 = vmax.f32 %v2689, 0.0
        %v2829 = vmax.f32 %v2691, 0.0
        %v2830 = vmax.f32 %v2693, 0.0
        %v2831 = vmax.f32 %v2697, 0.0
        %v2832 = vmax.f32 %v2699, 0.0
        %v2833 = vmax.f32 %v2701, 0.0
        %v2834 = vmax.f32 %v2703, 0.0
        %v2835 = vmax.f32 %v2707, 0.0
        %v2836 = vmax.f32 %v2709, 0.0
        %v2837 = vmax.f32 %v2711, 0.0
        %v2838 = vmax.f32 %v2713, 0.0
        %v2839 = vmax.f32 %v2717, 0.0
        %v2840 = vmax.f32 %v2719, 0.0
        %v2841 = vmax.f32 %v2721, 0.0
        %v2842 = vmax.f32 %v2723, 0.0
        %v2843 = vmax.f32 %v2727, 0.0
        %v2844 = vmax.f32 %v2729, 0.0
        %v2845 = vmax.f32 %v2731, 0.0
        %v2846 = vmax.f32 %v2733, 0.0
        %v2847 = vmax.f32 %v2737, 0.0
        %v2848 = vmax.f32 %v2739, 0.0
        %v2849 = vmax.f32 %v2741, 0.0
        %v2850 = vmax.f32 %v2743, 0.0
        %v2851 = vmax.f32 %v2747, 0.0
        %v2852 = vmax.f32 %v2749, 0.0
        %v2853 = vmax.f32 %v2751, 0.0
        %v2854 = vmax.f32 %v2753, 0.0
        %v2855 = vmax.f32 %v2757, 0.0
        %v2856 = vmax.f32 %v2759, 0.0
        %v2857 = vmax.f32 %v2761, 0.0
        %v2858 = vmax.f32 %v2763, 0.0
        %v2859 = vmax.f32 %v2767, 0.0
        %v2860 = vmax.f32 %v2769, 0.0
        %v2861 = vmax.f32 %v2771, 0.0
        %v2862 = vmax.f32 %v2773, 0.0
        %v2863 = vmax.f32 %v2777, 0.0
        %v2864 = vmax.f32 %v2779, 0.0
        %v2865 = vmax.f32 %v2781, 0.0
        %v2866 = vmax.f32 %v2783, 0.0
        %v2867 = vmax.f32 %v2787, 0.0
        %v2868 = vmax.f32 %v2789, 0.0
        %v2869 = vmax.f32 %v2791, 0.0
        %v2870 = vmax.f32 %v2793, 0.0
        %v2871 = vmax.f32 %v2797, 0.0
        %v2872 = vmax.f32 %v2799, 0.0
        %v2873 = vmax.f32 %v2801, 0.0
        %v2874 = vmax.f32 %v2803, 0.0
        %v2875 = vmax.f32 %v2807, 0.0
        %v2876 = vmax.f32 %v2809, 0.0
        %v2877 = vmax.f32 %v2811, 0.0
        %v2878 = vmax.f32 %v2813, 0.0
        %v2879 = vpack.c.bf16 %v2817, %v2815
        %v2880 = vpack.c.bf16 %v2818, %v2816
        %v2881 = vpack.c.bf16 %v2821, %v2819
        %v2882 = vpack.c.bf16 %v2822, %v2820
        %v2883 = vpack.c.bf16 %v2825, %v2823
        %v2884 = vpack.c.bf16 %v2826, %v2824
        %v2885 = vpack.c.bf16 %v2829, %v2827
        %v2886 = vpack.c.bf16 %v2830, %v2828
        %v2887 = vpack.c.bf16 %v2833, %v2831
        %v2888 = vpack.c.bf16 %v2834, %v2832
        %v2889 = vpack.c.bf16 %v2837, %v2835
        %v2890 = vpack.c.bf16 %v2838, %v2836
        %v2891 = vpack.c.bf16 %v2841, %v2839
        %v2892 = vpack.c.bf16 %v2842, %v2840
        %v2893 = vpack.c.bf16 %v2845, %v2843
        %v2894 = vpack.c.bf16 %v2846, %v2844
        %v2895 = vpack.c.bf16 %v2849, %v2847
        %v2896 = vpack.c.bf16 %v2850, %v2848
        %v2897 = vpack.c.bf16 %v2853, %v2851
        %v2898 = vpack.c.bf16 %v2854, %v2852
        %v2899 = vpack.c.bf16 %v2857, %v2855
        %v2900 = vpack.c.bf16 %v2858, %v2856
        %v2901 = vpack.c.bf16 %v2861, %v2859
        %v2902 = vpack.c.bf16 %v2862, %v2860
        %v2903 = vpack.c.bf16 %v2865, %v2863
        %v2904 = vpack.c.bf16 %v2866, %v2864
        %v2905 = vpack.c.bf16 %v2869, %v2867
        %v2906 = vpack.c.bf16 %v2870, %v2868
        %v2907 = vpack.c.bf16 %v2873, %v2871
        %v2908 = vpack.c.bf16 %v2874, %v2872
        %v2909 = vpack.c.bf16 %v2877, %v2875
        %v2910 = vpack.c.bf16 %v2878, %v2876
        %s2911 = scalar_lea.vmem [#allocation3], 512
        %v2912 = vld [vmem:[%s2911] sm:$0xff]
        %v2913 = vld [vmem:[%s2911 + $0x8] sm:$0xff]
        %v2914 = vld [vmem:[%s2911 + $0x10] sm:$0xff]
        %v2915 = vld [vmem:[%s2911 + $0x18] sm:$0xff]
        %v2916 = vld [vmem:[%s2911 + $0x20] sm:$0xff]
        %v2917 = vld [vmem:[%s2911 + $0x28] sm:$0xff]
        %v2918 = vld [vmem:[%s2911 + $0x30] sm:$0xff]
        %v2919 = vld [vmem:[%s2911 + $0x38] sm:$0xff]
        %v2920 = vld [vmem:[%s2911 + $0x40] sm:$0xff]
        %v2921 = vld [vmem:[%s2911 + $0x48] sm:$0xff]
        %v2922 = vld [vmem:[%s2911 + $0x50] sm:$0xff]
        %v2923 = vld [vmem:[%s2911 + $0x58] sm:$0xff]
        %v2924 = vld [vmem:[%s2911 + $0x60] sm:$0xff]
        %v2925 = vld [vmem:[%s2911 + $0x68] sm:$0xff]
        %v2926 = vld [vmem:[%s2911 + $0x70] sm:$0xff]
        %v2927 = vld [vmem:[%s2911 + $0x78] sm:$0xff]
        %v2928 = vld [vmem:[%s2911 + $0x80] sm:$0xff]
        %v2929 = vld [vmem:[%s2911 + $0x88] sm:$0xff]
        %v2930 = vld [vmem:[%s2911 + $0x90] sm:$0xff]
        %v2931 = vld [vmem:[%s2911 + $0x98] sm:$0xff]
        %v2932 = vld [vmem:[%s2911 + $0xa0] sm:$0xff]
        %v2933 = vld [vmem:[%s2911 + $0xa8] sm:$0xff]
        %v2934 = vld [vmem:[%s2911 + $0xb0] sm:$0xff]
        %v2935 = vld [vmem:[%s2911 + $0xb8] sm:$0xff]
        %v2936 = vld [vmem:[%s2911 + $0xc0] sm:$0xff]
        %v2937 = vld [vmem:[%s2911 + $0xc8] sm:$0xff]
        %v2938 = vld [vmem:[%s2911 + $0xd0] sm:$0xff]
        %v2939 = vld [vmem:[%s2911 + $0xd8] sm:$0xff]
        %v2940 = vld [vmem:[%s2911 + $0xe0] sm:$0xff]
        %v2941 = vld [vmem:[%s2911 + $0xe8] sm:$0xff]
        %v2942 = vld [vmem:[%s2911 + $0xf0] sm:$0xff]
        %v2943 = vld [vmem:[%s2911 + $0xf8] sm:$0xff]
        %2944 = vset.pattern.permute.xlu0 3
        %2945 = vperm.xlu0 %2944, %v1340
        %v2946 = vpop.permute.xlu0 %2945
        %2948 = vset.pattern.permute.xlu0 3
        %2949 = vperm.xlu0 %2948, %v1341
        %v2950 = vpop.permute.xlu0 %2949
        %2952 = vset.pattern.permute.xlu0 3
        %2953 = vperm.xlu0 %2952, %v1342
        %v2954 = vpop.permute.xlu0 %2953
        %2956 = vset.pattern.permute.xlu0 3
        %2957 = vperm.xlu0 %2956, %v1343
        %v2958 = vpop.permute.xlu0 %2957
        %2960 = vset.pattern.permute.xlu0 3
        %2961 = vperm.xlu0 %2960, %v1344
        %v2962 = vpop.permute.xlu0 %2961
        %2964 = vset.pattern.permute.xlu0 3
        %2965 = vperm.xlu0 %2964, %v1345
        %v2966 = vpop.permute.xlu0 %2965
        %2968 = vset.pattern.permute.xlu0 3
        %2969 = vperm.xlu0 %2968, %v1346
        %v2970 = vpop.permute.xlu0 %2969
        %2972 = vset.pattern.permute.xlu0 3
        %2973 = vperm.xlu0 %2972, %v1347
        %v2974 = vpop.permute.xlu0 %2973
        %2976 = vset.pattern.permute.xlu0 3
        %2977 = vperm.xlu0 %2976, %v1348
        %v2978 = vpop.permute.xlu0 %2977
        %2980 = vset.pattern.permute.xlu0 3
        %2981 = vperm.xlu0 %2980, %v1349
        %v2982 = vpop.permute.xlu0 %2981
        %2984 = vset.pattern.permute.xlu0 3
        %2985 = vperm.xlu0 %2984, %v1350
        %v2986 = vpop.permute.xlu0 %2985
        %2988 = vset.pattern.permute.xlu0 3
        %2989 = vperm.xlu0 %2988, %v1351
        %v2990 = vpop.permute.xlu0 %2989
        %2992 = vset.pattern.permute.xlu0 3
        %2993 = vperm.xlu0 %2992, %v1352
        %v2994 = vpop.permute.xlu0 %2993
        %2996 = vset.pattern.permute.xlu0 3
        %2997 = vperm.xlu0 %2996, %v1353
        %v2998 = vpop.permute.xlu0 %2997
        %3000 = vset.pattern.permute.xlu0 3
        %3001 = vperm.xlu0 %3000, %v1354
        %v3002 = vpop.permute.xlu0 %3001
        %3004 = vset.pattern.permute.xlu0 3
        %3005 = vperm.xlu0 %3004, %v1355
        %v3006 = vpop.permute.xlu0 %3005
        %3008 = vset.pattern.permute.xlu0 3
        %3009 = vperm.xlu0 %3008, %v1356
        %v3010 = vpop.permute.xlu0 %3009
        %3012 = vset.pattern.permute.xlu0 3
        %3013 = vperm.xlu0 %3012, %v1357
        %v3014 = vpop.permute.xlu0 %3013
        %3016 = vset.pattern.permute.xlu0 3
        %3017 = vperm.xlu0 %3016, %v1358
        %v3018 = vpop.permute.xlu0 %3017
        %3020 = vset.pattern.permute.xlu0 3
        %3021 = vperm.xlu0 %3020, %v1359
        %v3022 = vpop.permute.xlu0 %3021
        %3024 = vset.pattern.permute.xlu0 3
        %3025 = vperm.xlu0 %3024, %v1360
        %v3026 = vpop.permute.xlu0 %3025
        %3028 = vset.pattern.permute.xlu0 3
        %3029 = vperm.xlu0 %3028, %v1361
        %v3030 = vpop.permute.xlu0 %3029
        %3032 = vset.pattern.permute.xlu0 3
        %3033 = vperm.xlu0 %3032, %v1362
        %v3034 = vpop.permute.xlu0 %3033
        %3036 = vset.pattern.permute.xlu0 3
        %3037 = vperm.xlu0 %3036, %v1363
        %v3038 = vpop.permute.xlu0 %3037
        %3040 = vset.pattern.permute.xlu0 3
        %3041 = vperm.xlu0 %3040, %v1364
        %v3042 = vpop.permute.xlu0 %3041
        %3044 = vset.pattern.permute.xlu0 3
        %3045 = vperm.xlu0 %3044, %v1365
        %v3046 = vpop.permute.xlu0 %3045
        %3048 = vset.pattern.permute.xlu0 3
        %3049 = vperm.xlu0 %3048, %v1366
        %v3050 = vpop.permute.xlu0 %3049
        %3052 = vset.pattern.permute.xlu0 3
        %3053 = vperm.xlu0 %3052, %v1367
        %v3054 = vpop.permute.xlu0 %3053
        %3056 = vset.pattern.permute.xlu0 3
        %3057 = vperm.xlu0 %3056, %v1368
        %v3058 = vpop.permute.xlu0 %3057
        %3060 = vset.pattern.permute.xlu0 3
        %3061 = vperm.xlu0 %3060, %v1369
        %v3062 = vpop.permute.xlu0 %3061
        %3064 = vset.pattern.permute.xlu0 3
        %3065 = vperm.xlu0 %3064, %v1370
        %v3066 = vpop.permute.xlu0 %3065
        %3068 = vset.pattern.permute.xlu0 3
        %3069 = vperm.xlu0 %3068, %v1371
        %v3070 = vpop.permute.xlu0 %3069
        %v3104 = vunpack.c.l.b16 %v2912
        %v3105 = vunpack.c.h.b16 %v2912
        %v3106 = vunpack.c.l.b16 %v2913
        %v3107 = vunpack.c.h.b16 %v2913
        %v3108 = vunpack.c.l.b16 %v2914
        %v3109 = vunpack.c.h.b16 %v2914
        %v3110 = vunpack.c.l.b16 %v2915
        %v3111 = vunpack.c.h.b16 %v2915
        %v3112 = vunpack.c.l.b16 %v2916
        %v3113 = vunpack.c.h.b16 %v2916
        %v3114 = vunpack.c.l.b16 %v2917
        %v3115 = vunpack.c.h.b16 %v2917
        %v3116 = vunpack.c.l.b16 %v2918
        %v3117 = vunpack.c.h.b16 %v2918
        %v3118 = vunpack.c.l.b16 %v2919
        %v3119 = vunpack.c.h.b16 %v2919
        %v3120 = vunpack.c.l.b16 %v2920
        %v3121 = vunpack.c.h.b16 %v2920
        %v3122 = vunpack.c.l.b16 %v2921
        %v3123 = vunpack.c.h.b16 %v2921
        %v3124 = vunpack.c.l.b16 %v2922
        %v3125 = vunpack.c.h.b16 %v2922
        %v3126 = vunpack.c.l.b16 %v2923
        %v3127 = vunpack.c.h.b16 %v2923
        %v3128 = vunpack.c.l.b16 %v2924
        %v3129 = vunpack.c.h.b16 %v2924
        %v3130 = vunpack.c.l.b16 %v2925
        %v3131 = vunpack.c.h.b16 %v2925
        %v3132 = vunpack.c.l.b16 %v2926
        %v3133 = vunpack.c.h.b16 %v2926
        %v3134 = vunpack.c.l.b16 %v2927
        %v3135 = vunpack.c.h.b16 %v2927
        %v3136 = vunpack.c.l.b16 %v2928
        %v3137 = vunpack.c.h.b16 %v2928
        %v3138 = vunpack.c.l.b16 %v2929
        %v3139 = vunpack.c.h.b16 %v2929
        %v3140 = vunpack.c.l.b16 %v2930
        %v3141 = vunpack.c.h.b16 %v2930
        %v3142 = vunpack.c.l.b16 %v2931
        %v3143 = vunpack.c.h.b16 %v2931
        %v3144 = vunpack.c.l.b16 %v2932
        %v3145 = vunpack.c.h.b16 %v2932
        %v3146 = vunpack.c.l.b16 %v2933
        %v3147 = vunpack.c.h.b16 %v2933
        %v3148 = vunpack.c.l.b16 %v2934
        %v3149 = vunpack.c.h.b16 %v2934
        %v3150 = vunpack.c.l.b16 %v2935
        %v3151 = vunpack.c.h.b16 %v2935
        %v3152 = vunpack.c.l.b16 %v2936
        %v3153 = vunpack.c.h.b16 %v2936
        %v3154 = vunpack.c.l.b16 %v2937
        %v3155 = vunpack.c.h.b16 %v2937
        %v3156 = vunpack.c.l.b16 %v2938
        %v3157 = vunpack.c.h.b16 %v2938
        %v3158 = vunpack.c.l.b16 %v2939
        %v3159 = vunpack.c.h.b16 %v2939
        %v3160 = vunpack.c.l.b16 %v2940
        %v3161 = vunpack.c.h.b16 %v2940
        %v3162 = vunpack.c.l.b16 %v2941
        %v3163 = vunpack.c.h.b16 %v2941
        %v3164 = vunpack.c.l.b16 %v2942
        %v3165 = vunpack.c.h.b16 %v2942
        %v3166 = vunpack.c.l.b16 %v2943
        %v3167 = vunpack.c.h.b16 %v2943
        %v3168 = vpack.c.b16 %v3106, %v3104
        %v3169 = vpack.c.b16 %v3107, %v3105
        %v3170 = vpack.c.b16 %v3110, %v3108
        %v3171 = vpack.c.b16 %v3111, %v3109
        %v3172 = vpack.c.b16 %v3114, %v3112
        %v3173 = vpack.c.b16 %v3115, %v3113
        %v3174 = vpack.c.b16 %v3118, %v3116
        %v3175 = vpack.c.b16 %v3119, %v3117
        %v3176 = vpack.c.b16 %v3122, %v3120
        %v3177 = vpack.c.b16 %v3123, %v3121
        %v3178 = vpack.c.b16 %v3126, %v3124
        %v3179 = vpack.c.b16 %v3127, %v3125
        %v3180 = vpack.c.b16 %v3130, %v3128
        %v3181 = vpack.c.b16 %v3131, %v3129
        %v3182 = vpack.c.b16 %v3134, %v3132
        %v3183 = vpack.c.b16 %v3135, %v3133
        %v3184 = vpack.c.b16 %v3138, %v3136
        %v3185 = vpack.c.b16 %v3139, %v3137
        %v3186 = vpack.c.b16 %v3142, %v3140
        %v3187 = vpack.c.b16 %v3143, %v3141
        %v3188 = vpack.c.b16 %v3146, %v3144
        %v3189 = vpack.c.b16 %v3147, %v3145
        %v3190 = vpack.c.b16 %v3150, %v3148
        %v3191 = vpack.c.b16 %v3151, %v3149
        %v3192 = vpack.c.b16 %v3154, %v3152
        %v3193 = vpack.c.b16 %v3155, %v3153
        %v3194 = vpack.c.b16 %v3158, %v3156
        %v3195 = vpack.c.b16 %v3159, %v3157
        %v3196 = vpack.c.b16 %v3162, %v3160
        %v3197 = vpack.c.b16 %v3163, %v3161
        %v3198 = vpack.c.b16 %v3166, %v3164
        %v3199 = vpack.c.b16 %v3167, %v3165
        %3232 = vmatprep.subr.bf16.mxu0 %v2880
        %3233 = vmatpush1.bf16.msra.mxu0 %v2879
        %3234 = vmatprep.subr.bf16.mxu0 %v2882
        %3235 = vmatpush1.bf16.msra.mxu0 %v2881
        %3236 = vmatprep.subr.bf16.mxu0 %v2884
        %3237 = vmatpush1.bf16.msra.mxu0 %v2883
        %3238 = vmatprep.subr.bf16.mxu0 %v2886
        %3239 = vmatpush1.bf16.msra.mxu0 %v2885
        %3240 = vmatprep.subr.bf16.mxu0 %v2888
        %3241 = vmatpush1.bf16.msra.mxu0 %v2887
        %3242 = vmatprep.subr.bf16.mxu0 %v2890
        %3243 = vmatpush1.bf16.msra.mxu0 %v2889
        %3244 = vmatprep.subr.bf16.mxu0 %v2892
        %3245 = vmatpush1.bf16.msra.mxu0 %v2891
        %3246 = vmatprep.subr.bf16.mxu0 %v2894
        %3247 = vmatpush1.bf16.msra.mxu0 %v2893
        %3248 = vmatprep.subr.bf16.mxu0 %v2896
        %3249 = vmatpush1.bf16.msra.mxu0 %v2895
        %3250 = vmatprep.subr.bf16.mxu0 %v2898
        %3251 = vmatpush1.bf16.msra.mxu0 %v2897
        %3252 = vmatprep.subr.bf16.mxu0 %v2900
        %3253 = vmatpush1.bf16.msra.mxu0 %v2899
        %3254 = vmatprep.subr.bf16.mxu0 %v2902
        %3255 = vmatpush1.bf16.msra.mxu0 %v2901
        %3256 = vmatprep.subr.bf16.mxu0 %v2904
        %3257 = vmatpush1.bf16.msra.mxu0 %v2903
        %3258 = vmatprep.subr.bf16.mxu0 %v2906
        %3259 = vmatpush1.bf16.msra.mxu0 %v2905
        %3260 = vmatprep.subr.bf16.mxu0 %v2908
        %3261 = vmatpush1.bf16.msra.mxu0 %v2907
        %3262 = vmatprep.subr.bf16.mxu0 %v2910
        %3263 = vmatpush1.bf16.msra.mxu0 %v2909
        %3264 = vmatprep.mubr.bf16.mxu0 %v3169
        %3265 = vmatmul.mubr.bf16.gmra.mrb[0].mxu0 %v3168
        %v3266 = vpop.f32.mrb[0].mxu0
        %v3267 = vadd.f32 %v2946, %v3266
        %v3268 = vpop.f32.mrb[0].mxu0
        %v3269 = vadd.f32 %v2946, %v3268
        %v3270 = vpop.f32.mrb[0].mxu0
        %v3271 = vadd.f32 %v2950, %v3270
        %v3272 = vpop.f32.mrb[0].mxu0
        %v3273 = vadd.f32 %v2950, %v3272
        %3274 = vmatprep.mubr.bf16.mxu0 %v3171
        %3275 = vmatmul.mubr.bf16.gmra.mrb[0].mxu0 %v3170
        %v3276 = vpop.f32.mrb[0].mxu0
        %v3277 = vadd.f32 %v2954, %v3276
        %v3278 = vpop.f32.mrb[0].mxu0
        %v3279 = vadd.f32 %v2954, %v3278
        %v3280 = vpop.f32.mrb[0].mxu0
        %v3281 = vadd.f32 %v2958, %v3280
        %v3282 = vpop.f32.mrb[0].mxu0
        %v3283 = vadd.f32 %v2958, %v3282
        %3284 = vmatprep.mubr.bf16.mxu0 %v3173
        %3285 = vmatmul.mubr.bf16.gmra.mrb[0].mxu0 %v3172
        %v3286 = vpop.f32.mrb[0].mxu0
        %v3287 = vadd.f32 %v2962, %v3286
        %v3288 = vpop.f32.mrb[0].mxu0
        %v3289 = vadd.f32 %v2962, %v3288
        %v3290 = vpop.f32.mrb[0].mxu0
        %v3291 = vadd.f32 %v2966, %v3290
        %v3292 = vpop.f32.mrb[0].mxu0
        %v3293 = vadd.f32 %v2966, %v3292
        %3294 = vmatprep.mubr.bf16.mxu0 %v3175
        %3295 = vmatmul.mubr.bf16.gmra.mrb[0].mxu0 %v3174
        %v3296 = vpop.f32.mrb[0].mxu0
        %v3297 = vadd.f32 %v2970, %v3296
        %v3298 = vpop.f32.mrb[0].mxu0
        %v3299 = vadd.f32 %v2970, %v3298
        %v3300 = vpop.f32.mrb[0].mxu0
        %v3301 = vadd.f32 %v2974, %v3300
        %v3302 = vpop.f32.mrb[0].mxu0
        %v3303 = vadd.f32 %v2974, %v3302
        %3304 = vmatprep.mubr.bf16.mxu0 %v3177
        %3305 = vmatmul.mubr.bf16.gmra.mrb[0].mxu0 %v3176
        %v3306 = vpop.f32.mrb[0].mxu0
        %v3307 = vadd.f32 %v2978, %v3306
        %v3308 = vpop.f32.mrb[0].mxu0
        %v3309 = vadd.f32 %v2978, %v3308
        %v3310 = vpop.f32.mrb[0].mxu0
        %v3311 = vadd.f32 %v2982, %v3310
        %v3312 = vpop.f32.mrb[0].mxu0
        %v3313 = vadd.f32 %v2982, %v3312
        %3314 = vmatprep.mubr.bf16.mxu0 %v3179
        %3315 = vmatmul.mubr.bf16.gmra.mrb[0].mxu0 %v3178
        %v3316 = vpop.f32.mrb[0].mxu0
        %v3317 = vadd.f32 %v2986, %v3316
        %v3318 = vpop.f32.mrb[0].mxu0
        %v3319 = vadd.f32 %v2986, %v3318
        %v3320 = vpop.f32.mrb[0].mxu0
        %v3321 = vadd.f32 %v2990, %v3320
        %v3322 = vpop.f32.mrb[0].mxu0
        %v3323 = vadd.f32 %v2990, %v3322
        %3324 = vmatprep.mubr.bf16.mxu0 %v3181
        %3325 = vmatmul.mubr.bf16.gmra.mrb[0].mxu0 %v3180
        %v3326 = vpop.f32.mrb[0].mxu0
        %v3327 = vadd.f32 %v2994, %v3326
        %v3328 = vpop.f32.mrb[0].mxu0
        %v3329 = vadd.f32 %v2994, %v3328
        %v3330 = vpop.f32.mrb[0].mxu0
        %v3331 = vadd.f32 %v2998, %v3330
        %v3332 = vpop.f32.mrb[0].mxu0
        %v3333 = vadd.f32 %v2998, %v3332
        %3334 = vmatprep.mubr.bf16.mxu0 %v3183
        %3335 = vmatmul.mubr.bf16.gmra.mrb[0].mxu0 %v3182
        %v3336 = vpop.f32.mrb[0].mxu0
        %v3337 = vadd.f32 %v3002, %v3336
        %v3338 = vpop.f32.mrb[0].mxu0
        %v3339 = vadd.f32 %v3002, %v3338
        %v3340 = vpop.f32.mrb[0].mxu0
        %v3341 = vadd.f32 %v3006, %v3340
        %v3342 = vpop.f32.mrb[0].mxu0
        %v3343 = vadd.f32 %v3006, %v3342
        %3344 = vmatprep.mubr.bf16.mxu0 %v3185
        %3345 = vmatmul.mubr.bf16.gmra.mrb[0].mxu0 %v3184
        %v3346 = vpop.f32.mrb[0].mxu0
        %v3347 = vadd.f32 %v3010, %v3346
        %v3348 = vpop.f32.mrb[0].mxu0
        %v3349 = vadd.f32 %v3010, %v3348
        %v3350 = vpop.f32.mrb[0].mxu0
        %v3351 = vadd.f32 %v3014, %v3350
        %v3352 = vpop.f32.mrb[0].mxu0
        %v3353 = vadd.f32 %v3014, %v3352
        %3354 = vmatprep.mubr.bf16.mxu0 %v3187
        %3355 = vmatmul.mubr.bf16.gmra.mrb[0].mxu0 %v3186
        %v3356 = vpop.f32.mrb[0].mxu0
        %v3357 = vadd.f32 %v3018, %v3356
        %v3358 = vpop.f32.mrb[0].mxu0
        %v3359 = vadd.f32 %v3018, %v3358
        %v3360 = vpop.f32.mrb[0].mxu0
        %v3361 = vadd.f32 %v3022, %v3360
        %v3362 = vpop.f32.mrb[0].mxu0
        %v3363 = vadd.f32 %v3022, %v3362
        %3364 = vmatprep.mubr.bf16.mxu0 %v3189
        %3365 = vmatmul.mubr.bf16.gmra.mrb[0].mxu0 %v3188
        %v3366 = vpop.f32.mrb[0].mxu0
        %v3367 = vadd.f32 %v3026, %v3366
        %v3368 = vpop.f32.mrb[0].mxu0
        %v3369 = vadd.f32 %v3026, %v3368
        %v3370 = vpop.f32.mrb[0].mxu0
        %v3371 = vadd.f32 %v3030, %v3370
        %v3372 = vpop.f32.mrb[0].mxu0
        %v3373 = vadd.f32 %v3030, %v3372
        %3374 = vmatprep.mubr.bf16.mxu0 %v3191
        %3375 = vmatmul.mubr.bf16.gmra.mrb[0].mxu0 %v3190
        %v3376 = vpop.f32.mrb[0].mxu0
        %v3377 = vadd.f32 %v3034, %v3376
        %v3378 = vpop.f32.mrb[0].mxu0
        %v3379 = vadd.f32 %v3034, %v3378
        %v3380 = vpop.f32.mrb[0].mxu0
        %v3381 = vadd.f32 %v3038, %v3380
        %v3382 = vpop.f32.mrb[0].mxu0
        %v3383 = vadd.f32 %v3038, %v3382
        %3384 = vmatprep.mubr.bf16.mxu0 %v3193
        %3385 = vmatmul.mubr.bf16.gmra.mrb[0].mxu0 %v3192
        %v3386 = vpop.f32.mrb[0].mxu0
        %v3387 = vadd.f32 %v3042, %v3386
        %v3388 = vpop.f32.mrb[0].mxu0
        %v3389 = vadd.f32 %v3042, %v3388
        %v3390 = vpop.f32.mrb[0].mxu0
        %v3391 = vadd.f32 %v3046, %v3390
        %v3392 = vpop.f32.mrb[0].mxu0
        %v3393 = vadd.f32 %v3046, %v3392
        %3394 = vmatprep.mubr.bf16.mxu0 %v3195
        %3395 = vmatmul.mubr.bf16.gmra.mrb[0].mxu0 %v3194
        %v3396 = vpop.f32.mrb[0].mxu0
        %v3397 = vadd.f32 %v3050, %v3396
        %v3398 = vpop.f32.mrb[0].mxu0
        %v3399 = vadd.f32 %v3050, %v3398
        %v3400 = vpop.f32.mrb[0].mxu0
        %v3401 = vadd.f32 %v3054, %v3400
        %v3402 = vpop.f32.mrb[0].mxu0
        %v3403 = vadd.f32 %v3054, %v3402
        %3404 = vmatprep.mubr.bf16.mxu0 %v3197
        %3405 = vmatmul.mubr.bf16.gmra.mrb[0].mxu0 %v3196
        %v3406 = vpop.f32.mrb[0].mxu0
        %v3407 = vadd.f32 %v3058, %v3406
        %v3408 = vpop.f32.mrb[0].mxu0
        %v3409 = vadd.f32 %v3058, %v3408
        %v3410 = vpop.f32.mrb[0].mxu0
        %v3411 = vadd.f32 %v3062, %v3410
        %v3412 = vpop.f32.mrb[0].mxu0
        %v3413 = vadd.f32 %v3062, %v3412
        %3414 = vmatprep.mubr.bf16.mxu0 %v3199
        %3415 = vmatmul.mubr.bf16.gmra.mrb[0].mxu0 %v3198
        %v3416 = vpop.f32.mrb[0].mxu0
        %v3417 = vadd.f32 %v3066, %v3416
        %v3418 = vpop.f32.mrb[0].mxu0
        %v3419 = vadd.f32 %v3066, %v3418
        %v3420 = vpop.f32.mrb[0].mxu0
        %v3421 = vadd.f32 %v3070, %v3420
        %v3422 = vpop.f32.mrb[0].mxu0
        %v3423 = vadd.f32 %v3070, %v3422
        %3424 = vdwg.mxu0
        %v3425 = vmax.f32 %v3267, 0.0
        %v3426 = vmax.f32 %v3269, 0.0
        %v3427 = vmax.f32 %v3271, 0.0
        %v3428 = vmax.f32 %v3273, 0.0
        %v3429 = vmax.f32 %v3277, 0.0
        %v3430 = vmax.f32 %v3279, 0.0
        %v3431 = vmax.f32 %v3281, 0.0
        %v3432 = vmax.f32 %v3283, 0.0
        %v3433 = vmax.f32 %v3287, 0.0
        %v3434 = vmax.f32 %v3289, 0.0
        %v3435 = vmax.f32 %v3291, 0.0
        %v3436 = vmax.f32 %v3293, 0.0
        %v3437 = vmax.f32 %v3297, 0.0
        %v3438 = vmax.f32 %v3299, 0.0
        %v3439 = vmax.f32 %v3301, 0.0
        %v3440 = vmax.f32 %v3303, 0.0
        %v3441 = vmax.f32 %v3307, 0.0
        %v3442 = vmax.f32 %v3309, 0.0
        %v3443 = vmax.f32 %v3311, 0.0
        %v3444 = vmax.f32 %v3313, 0.0
        %v3445 = vmax.f32 %v3317, 0.0
        %v3446 = vmax.f32 %v3319, 0.0
        %v3447 = vmax.f32 %v3321, 0.0
        %v3448 = vmax.f32 %v3323, 0.0
        %v3449 = vmax.f32 %v3327, 0.0
        %v3450 = vmax.f32 %v3329, 0.0
        %v3451 = vmax.f32 %v3331, 0.0
        %v3452 = vmax.f32 %v3333, 0.0
        %v3453 = vmax.f32 %v3337, 0.0
        %v3454 = vmax.f32 %v3339, 0.0
        %v3455 = vmax.f32 %v3341, 0.0
        %v3456 = vmax.f32 %v3343, 0.0
        %v3457 = vmax.f32 %v3347, 0.0
        %v3458 = vmax.f32 %v3349, 0.0
        %v3459 = vmax.f32 %v3351, 0.0
        %v3460 = vmax.f32 %v3353, 0.0
        %v3461 = vmax.f32 %v3357, 0.0
        %v3462 = vmax.f32 %v3359, 0.0
        %v3463 = vmax.f32 %v3361, 0.0
        %v3464 = vmax.f32 %v3363, 0.0
        %v3465 = vmax.f32 %v3367, 0.0
        %v3466 = vmax.f32 %v3369, 0.0
        %v3467 = vmax.f32 %v3371, 0.0
        %v3468 = vmax.f32 %v3373, 0.0
        %v3469 = vmax.f32 %v3377, 0.0
        %v3470 = vmax.f32 %v3379, 0.0
        %v3471 = vmax.f32 %v3381, 0.0
        %v3472 = vmax.f32 %v3383, 0.0
        %v3473 = vmax.f32 %v3387, 0.0
        %v3474 = vmax.f32 %v3389, 0.0
        %v3475 = vmax.f32 %v3391, 0.0
        %v3476 = vmax.f32 %v3393, 0.0
        %v3477 = vmax.f32 %v3397, 0.0
        %v3478 = vmax.f32 %v3399, 0.0
        %v3479 = vmax.f32 %v3401, 0.0
        %v3480 = vmax.f32 %v3403, 0.0
        %v3481 = vmax.f32 %v3407, 0.0
        %v3482 = vmax.f32 %v3409, 0.0
        %v3483 = vmax.f32 %v3411, 0.0
        %v3484 = vmax.f32 %v3413, 0.0
        %v3485 = vmax.f32 %v3417, 0.0
        %v3486 = vmax.f32 %v3419, 0.0
        %v3487 = vmax.f32 %v3421, 0.0
        %v3488 = vmax.f32 %v3423, 0.0
        %v3489 = vpack.c.bf16 %v3427, %v3425
        %v3490 = vpack.c.bf16 %v3428, %v3426
        %v3491 = vpack.c.bf16 %v3431, %v3429
        %v3492 = vpack.c.bf16 %v3432, %v3430
        %v3493 = vpack.c.bf16 %v3435, %v3433
        %v3494 = vpack.c.bf16 %v3436, %v3434
        %v3495 = vpack.c.bf16 %v3439, %v3437
        %v3496 = vpack.c.bf16 %v3440, %v3438
        %v3497 = vpack.c.bf16 %v3443, %v3441
        %v3498 = vpack.c.bf16 %v3444, %v3442
        %v3499 = vpack.c.bf16 %v3447, %v3445
        %v3500 = vpack.c.bf16 %v3448, %v3446
        %v3501 = vpack.c.bf16 %v3451, %v3449
        %v3502 = vpack.c.bf16 %v3452, %v3450
        %v3503 = vpack.c.bf16 %v3455, %v3453
        %v3504 = vpack.c.bf16 %v3456, %v3454
        %v3505 = vpack.c.bf16 %v3459, %v3457
        %v3506 = vpack.c.bf16 %v3460, %v3458
        %v3507 = vpack.c.bf16 %v3463, %v3461
        %v3508 = vpack.c.bf16 %v3464, %v3462
        %v3509 = vpack.c.bf16 %v3467, %v3465
        %v3510 = vpack.c.bf16 %v3468, %v3466
        %v3511 = vpack.c.bf16 %v3471, %v3469
        %v3512 = vpack.c.bf16 %v3472, %v3470
        %v3513 = vpack.c.bf16 %v3475, %v3473
        %v3514 = vpack.c.bf16 %v3476, %v3474
        %v3515 = vpack.c.bf16 %v3479, %v3477
        %v3516 = vpack.c.bf16 %v3480, %v3478
        %v3517 = vpack.c.bf16 %v3483, %v3481
        %v3518 = vpack.c.bf16 %v3484, %v3482
        %v3519 = vpack.c.bf16 %v3487, %v3485
        %v3520 = vpack.c.bf16 %v3488, %v3486
        %s3521 = scalar_lea.vmem [#allocation3], 768
        %v3522 = vld [vmem:[%s3521] sm:$0xff]
        %v3523 = vld [vmem:[%s3521 + $0x8] sm:$0xff]
        %v3524 = vld [vmem:[%s3521 + $0x10] sm:$0xff]
        %v3525 = vld [vmem:[%s3521 + $0x18] sm:$0xff]
        %v3526 = vld [vmem:[%s3521 + $0x20] sm:$0xff]
        %v3527 = vld [vmem:[%s3521 + $0x28] sm:$0xff]
        %v3528 = vld [vmem:[%s3521 + $0x30] sm:$0xff]
        %v3529 = vld [vmem:[%s3521 + $0x38] sm:$0xff]
        %v3530 = vld [vmem:[%s3521 + $0x40] sm:$0xff]
        %v3531 = vld [vmem:[%s3521 + $0x48] sm:$0xff]
        %v3532 = vld [vmem:[%s3521 + $0x50] sm:$0xff]
        %v3533 = vld [vmem:[%s3521 + $0x58] sm:$0xff]
        %v3534 = vld [vmem:[%s3521 + $0x60] sm:$0xff]
        %v3535 = vld [vmem:[%s3521 + $0x68] sm:$0xff]
        %v3536 = vld [vmem:[%s3521 + $0x70] sm:$0xff]
        %v3537 = vld [vmem:[%s3521 + $0x78] sm:$0xff]
        %v3538 = vld [vmem:[%s3521 + $0x80] sm:$0xff]
        %v3539 = vld [vmem:[%s3521 + $0x88] sm:$0xff]
        %v3540 = vld [vmem:[%s3521 + $0x90] sm:$0xff]
        %v3541 = vld [vmem:[%s3521 + $0x98] sm:$0xff]
        %v3542 = vld [vmem:[%s3521 + $0xa0] sm:$0xff]
        %v3543 = vld [vmem:[%s3521 + $0xa8] sm:$0xff]
        %v3544 = vld [vmem:[%s3521 + $0xb0] sm:$0xff]
        %v3545 = vld [vmem:[%s3521 + $0xb8] sm:$0xff]
        %v3546 = vld [vmem:[%s3521 + $0xc0] sm:$0xff]
        %v3547 = vld [vmem:[%s3521 + $0xc8] sm:$0xff]
        %v3548 = vld [vmem:[%s3521 + $0xd0] sm:$0xff]
        %v3549 = vld [vmem:[%s3521 + $0xd8] sm:$0xff]
        %v3550 = vld [vmem:[%s3521 + $0xe0] sm:$0xff]
        %v3551 = vld [vmem:[%s3521 + $0xe8] sm:$0xff]
        %v3552 = vld [vmem:[%s3521 + $0xf0] sm:$0xff]
        %v3553 = vld [vmem:[%s3521 + $0xf8] sm:$0xff]
        %3554 = vset.pattern.permute.xlu0 4
        %3555 = vperm.xlu0 %3554, %v1340
        %v3556 = vpop.permute.xlu0 %3555
        %3558 = vset.pattern.permute.xlu0 4
        %3559 = vperm.xlu0 %3558, %v1341
        %v3560 = vpop.permute.xlu0 %3559
        %3562 = vset.pattern.permute.xlu0 4
        %3563 = vperm.xlu0 %3562, %v1342
        %v3564 = vpop.permute.xlu0 %3563
        %3566 = vset.pattern.permute.xlu0 4
        %3567 = vperm.xlu0 %3566, %v1343
        %v3568 = vpop.permute.xlu0 %3567
        %3570 = vset.pattern.permute.xlu0 4
        %3571 = vperm.xlu0 %3570, %v1344
        %v3572 = vpop.permute.xlu0 %3571
        %3574 = vset.pattern.permute.xlu0 4
        %3575 = vperm.xlu0 %3574, %v1345
        %v3576 = vpop.permute.xlu0 %3575
        %3578 = vset.pattern.permute.xlu0 4
        %3579 = vperm.xlu0 %3578, %v1346
        %v3580 = vpop.permute.xlu0 %3579
        %3582 = vset.pattern.permute.xlu0 4
        %3583 = vperm.xlu0 %3582, %v1347
        %v3584 = vpop.permute.xlu0 %3583
        %3586 = vset.pattern.permute.xlu0 4
        %3587 = vperm.xlu0 %3586, %v1348
        %v3588 = vpop.permute.xlu0 %3587
        %3590 = vset.pattern.permute.xlu0 4
        %3591 = vperm.xlu0 %3590, %v1349
        %v3592 = vpop.permute.xlu0 %3591
        %3594 = vset.pattern.permute.xlu0 4
        %3595 = vperm.xlu0 %3594, %v1350
        %v3596 = vpop.permute.xlu0 %3595
        %3598 = vset.pattern.permute.xlu0 4
        %3599 = vperm.xlu0 %3598, %v1351
        %v3600 = vpop.permute.xlu0 %3599
        %3602 = vset.pattern.permute.xlu0 4
        %3603 = vperm.xlu0 %3602, %v1352
        %v3604 = vpop.permute.xlu0 %3603
        %3606 = vset.pattern.permute.xlu0 4
        %3607 = vperm.xlu0 %3606, %v1353
        %v3608 = vpop.permute.xlu0 %3607
        %3610 = vset.pattern.permute.xlu0 4
        %3611 = vperm.xlu0 %3610, %v1354
        %v3612 = vpop.permute.xlu0 %3611
        %3614 = vset.pattern.permute.xlu0 4
        %3615 = vperm.xlu0 %3614, %v1355
        %v3616 = vpop.permute.xlu0 %3615
        %3618 = vset.pattern.permute.xlu0 4
        %3619 = vperm.xlu0 %3618, %v1356
        %v3620 = vpop.permute.xlu0 %3619
        %3622 = vset.pattern.permute.xlu0 4
        %3623 = vperm.xlu0 %3622, %v1357
        %v3624 = vpop.permute.xlu0 %3623
        %3626 = vset.pattern.permute.xlu0 4
        %3627 = vperm.xlu0 %3626, %v1358
        %v3628 = vpop.permute.xlu0 %3627
        %3630 = vset.pattern.permute.xlu0 4
        %3631 = vperm.xlu0 %3630, %v1359
        %v3632 = vpop.permute.xlu0 %3631
        %3634 = vset.pattern.permute.xlu0 4
        %3635 = vperm.xlu0 %3634, %v1360
        %v3636 = vpop.permute.xlu0 %3635
        %3638 = vset.pattern.permute.xlu0 4
        %3639 = vperm.xlu0 %3638, %v1361
        %v3640 = vpop.permute.xlu0 %3639
        %3642 = vset.pattern.permute.xlu0 4
        %3643 = vperm.xlu0 %3642, %v1362
        %v3644 = vpop.permute.xlu0 %3643
        %3646 = vset.pattern.permute.xlu0 4
        %3647 = vperm.xlu0 %3646, %v1363
        %v3648 = vpop.permute.xlu0 %3647
        %3650 = vset.pattern.permute.xlu0 4
        %3651 = vperm.xlu0 %3650, %v1364
        %v3652 = vpop.permute.xlu0 %3651
        %3654 = vset.pattern.permute.xlu0 4
        %3655 = vperm.xlu0 %3654, %v1365
        %v3656 = vpop.permute.xlu0 %3655
        %3658 = vset.pattern.permute.xlu0 4
        %3659 = vperm.xlu0 %3658, %v1366
        %v3660 = vpop.permute.xlu0 %3659
        %3662 = vset.pattern.permute.xlu0 4
        %3663 = vperm.xlu0 %3662, %v1367
        %v3664 = vpop.permute.xlu0 %3663
        %3666 = vset.pattern.permute.xlu0 4
        %3667 = vperm.xlu0 %3666, %v1368
        %v3668 = vpop.permute.xlu0 %3667
        %3670 = vset.pattern.permute.xlu0 4
        %3671 = vperm.xlu0 %3670, %v1369
        %v3672 = vpop.permute.xlu0 %3671
        %3674 = vset.pattern.permute.xlu0 4
        %3675 = vperm.xlu0 %3674, %v1370
        %v3676 = vpop.permute.xlu0 %3675
        %3678 = vset.pattern.permute.xlu0 4
        %3679 = vperm.xlu0 %3678, %v1371
        %v3680 = vpop.permute.xlu0 %3679
        %v3714 = vunpack.c.l.b16 %v3522
        %v3715 = vunpack.c.h.b16 %v3522
        %v3716 = vunpack.c.l.b16 %v3523
        %v3717 = vunpack.c.h.b16 %v3523
        %v3718 = vunpack.c.l.b16 %v3524
        %v3719 = vunpack.c.h.b16 %v3524
        %v3720 = vunpack.c.l.b16 %v3525
        %v3721 = vunpack.c.h.b16 %v3525
        %v3722 = vunpack.c.l.b16 %v3526
        %v3723 = vunpack.c.h.b16 %v3526
        %v3724 = vunpack.c.l.b16 %v3527
        %v3725 = vunpack.c.h.b16 %v3527
        %v3726 = vunpack.c.l.b16 %v3528
        %v3727 = vunpack.c.h.b16 %v3528
        %v3728 = vunpack.c.l.b16 %v3529
        %v3729 = vunpack.c.h.b16 %v3529
        %v3730 = vunpack.c.l.b16 %v3530
        %v3731 = vunpack.c.h.b16 %v3530
        %v3732 = vunpack.c.l.b16 %v3531
        %v3733 = vunpack.c.h.b16 %v3531
        %v3734 = vunpack.c.l.b16 %v3532
        %v3735 = vunpack.c.h.b16 %v3532
        %v3736 = vunpack.c.l.b16 %v3533
        %v3737 = vunpack.c.h.b16 %v3533
        %v3738 = vunpack.c.l.b16 %v3534
        %v3739 = vunpack.c.h.b16 %v3534
        %v3740 = vunpack.c.l.b16 %v3535
        %v3741 = vunpack.c.h.b16 %v3535
        %v3742 = vunpack.c.l.b16 %v3536
        %v3743 = vunpack.c.h.b16 %v3536
        %v3744 = vunpack.c.l.b16 %v3537
        %v3745 = vunpack.c.h.b16 %v3537
        %v3746 = vunpack.c.l.b16 %v3538
        %v3747 = vunpack.c.h.b16 %v3538
        %v3748 = vunpack.c.l.b16 %v3539
        %v3749 = vunpack.c.h.b16 %v3539
        %v3750 = vunpack.c.l.b16 %v3540
        %v3751 = vunpack.c.h.b16 %v3540
        %v3752 = vunpack.c.l.b16 %v3541
        %v3753 = vunpack.c.h.b16 %v3541
        %v3754 = vunpack.c.l.b16 %v3542
        %v3755 = vunpack.c.h.b16 %v3542
        %v3756 = vunpack.c.l.b16 %v3543
        %v3757 = vunpack.c.h.b16 %v3543
        %v3758 = vunpack.c.l.b16 %v3544
        %v3759 = vunpack.c.h.b16 %v3544
        %v3760 = vunpack.c.l.b16 %v3545
        %v3761 = vunpack.c.h.b16 %v3545
        %v3762 = vunpack.c.l.b16 %v3546
        %v3763 = vunpack.c.h.b16 %v3546
        %v3764 = vunpack.c.l.b16 %v3547
        %v3765 = vunpack.c.h.b16 %v3547
        %v3766 = vunpack.c.l.b16 %v3548
        %v3767 = vunpack.c.h.b16 %v3548
        %v3768 = vunpack.c.l.b16 %v3549
        %v3769 = vunpack.c.h.b16 %v3549
        %v3770 = vunpack.c.l.b16 %v3550
        %v3771 = vunpack.c.h.b16 %v3550
        %v3772 = vunpack.c.l.b16 %v3551
        %v3773 = vunpack.c.h.b16 %v3551
        %v3774 = vunpack.c.l.b16 %v3552
        %v3775 = vunpack.c.h.b16 %v3552
        %v3776 = vunpack.c.l.b16 %v3553
        %v3777 = vunpack.c.h.b16 %v3553
        %v3778 = vpack.c.b16 %v3716, %v3714
        %v3779 = vpack.c.b16 %v3717, %v3715
        %v3780 = vpack.c.b16 %v3720, %v3718
        %v3781 = vpack.c.b16 %v3721, %v3719
        %v3782 = vpack.c.b16 %v3724, %v3722
        %v3783 = vpack.c.b16 %v3725, %v3723
        %v3784 = vpack.c.b16 %v3728, %v3726
        %v3785 = vpack.c.b16 %v3729, %v3727
        %v3786 = vpack.c.b16 %v3732, %v3730
        %v3787 = vpack.c.b16 %v3733, %v3731
        %v3788 = vpack.c.b16 %v3736, %v3734
        %v3789 = vpack.c.b16 %v3737, %v3735
        %v3790 = vpack.c.b16 %v3740, %v3738
        %v3791 = vpack.c.b16 %v3741, %v3739
        %v3792 = vpack.c.b16 %v3744, %v3742
        %v3793 = vpack.c.b16 %v3745, %v3743
        %v3794 = vpack.c.b16 %v3748, %v3746
        %v3795 = vpack.c.b16 %v3749, %v3747
        %v3796 = vpack.c.b16 %v3752, %v3750
        %v3797 = vpack.c.b16 %v3753, %v3751
        %v3798 = vpack.c.b16 %v3756, %v3754
        %v3799 = vpack.c.b16 %v3757, %v3755
        %v3800 = vpack.c.b16 %v3760, %v3758
        %v3801 = vpack.c.b16 %v3761, %v3759
        %v3802 = vpack.c.b16 %v3764, %v3762
        %v3803 = vpack.c.b16 %v3765, %v3763
        %v3804 = vpack.c.b16 %v3768, %v3766
        %v3805 = vpack.c.b16 %v3769, %v3767
        %v3806 = vpack.c.b16 %v3772, %v3770
        %v3807 = vpack.c.b16 %v3773, %v3771
        %v3808 = vpack.c.b16 %v3776, %v3774
        %v3809 = vpack.c.b16 %v3777, %v3775
        %3842 = vmatprep.subr.bf16.mxu0 %v3490
        %3843 = vmatpush1.bf16.msra.mxu0 %v3489
        %3844 = vmatprep.subr.bf16.mxu0 %v3492
        %3845 = vmatpush1.bf16.msra.mxu0 %v3491
        %3846 = vmatprep.subr.bf16.mxu0 %v3494
        %3847 = vmatpush1.bf16.msra.mxu0 %v3493
        %3848 = vmatprep.subr.bf16.mxu0 %v3496
        %3849 = vmatpush1.bf16.msra.mxu0 %v3495
        %3850 = vmatprep.subr.bf16.mxu0 %v3498
        %3851 = vmatpush1.bf16.msra.mxu0 %v3497
        %3852 = vmatprep.subr.bf16.mxu0 %v3500
        %3853 = vmatpush1.bf16.msra.mxu0 %v3499
        %3854 = vmatprep.subr.bf16.mxu0 %v3502
        %3855 = vmatpush1.bf16.msra.mxu0 %v3501
        %3856 = vmatprep.subr.bf16.mxu0 %v3504
        %3857 = vmatpush1.bf16.msra.mxu0 %v3503
        %3858 = vmatprep.subr.bf16.mxu0 %v3506
        %3859 = vmatpush1.bf16.msra.mxu0 %v3505
        %3860 = vmatprep.subr.bf16.mxu0 %v3508
        %3861 = vmatpush1.bf16.msra.mxu0 %v3507
        %3862 = vmatprep.subr.bf16.mxu0 %v3510
        %3863 = vmatpush1.bf16.msra.mxu0 %v3509
        %3864 = vmatprep.subr.bf16.mxu0 %v3512
        %3865 = vmatpush1.bf16.msra.mxu0 %v3511
        %3866 = vmatprep.subr.bf16.mxu0 %v3514
        %3867 = vmatpush1.bf16.msra.mxu0 %v3513
        %3868 = vmatprep.subr.bf16.mxu0 %v3516
        %3869 = vmatpush1.bf16.msra.mxu0 %v3515
        %3870 = vmatprep.subr.bf16.mxu0 %v3518
        %3871 = vmatpush1.bf16.msra.mxu0 %v3517
        %3872 = vmatprep.subr.bf16.mxu0 %v3520
        %3873 = vmatpush1.bf16.msra.mxu0 %v3519
        %3874 = vmatprep.mubr.bf16.mxu0 %v3779
        %3875 = vmatmul.mubr.bf16.gmra.mrb[0].mxu0 %v3778
        %v3876 = vpop.f32.mrb[0].mxu0
        %v3877 = vadd.f32 %v3556, %v3876
        %v3878 = vpop.f32.mrb[0].mxu0
        %v3879 = vadd.f32 %v3556, %v3878
        %v3880 = vpop.f32.mrb[0].mxu0
        %v3881 = vadd.f32 %v3560, %v3880
        %v3882 = vpop.f32.mrb[0].mxu0
        %v3883 = vadd.f32 %v3560, %v3882
        %3884 = vmatprep.mubr.bf16.mxu0 %v3781
        %3885 = vmatmul.mubr.bf16.gmra.mrb[0].mxu0 %v3780
        %v3886 = vpop.f32.mrb[0].mxu0
        %v3887 = vadd.f32 %v3564, %v3886
        %v3888 = vpop.f32.mrb[0].mxu0
        %v3889 = vadd.f32 %v3564, %v3888
        %v3890 = vpop.f32.mrb[0].mxu0
        %v3891 = vadd.f32 %v3568, %v3890
        %v3892 = vpop.f32.mrb[0].mxu0
        %v3893 = vadd.f32 %v3568, %v3892
        %3894 = vmatprep.mubr.bf16.mxu0 %v3783
        %3895 = vmatmul.mubr.bf16.gmra.mrb[0].mxu0 %v3782
        %v3896 = vpop.f32.mrb[0].mxu0
        %v3897 = vadd.f32 %v3572, %v3896
        %v3898 = vpop.f32.mrb[0].mxu0
        %v3899 = vadd.f32 %v3572, %v3898
        %v3900 = vpop.f32.mrb[0].mxu0
        %v3901 = vadd.f32 %v3576, %v3900
        %v3902 = vpop.f32.mrb[0].mxu0
        %v3903 = vadd.f32 %v3576, %v3902
        %3904 = vmatprep.mubr.bf16.mxu0 %v3785
        %3905 = vmatmul.mubr.bf16.gmra.mrb[0].mxu0 %v3784
        %v3906 = vpop.f32.mrb[0].mxu0
        %v3907 = vadd.f32 %v3580, %v3906
        %v3908 = vpop.f32.mrb[0].mxu0
        %v3909 = vadd.f32 %v3580, %v3908
        %v3910 = vpop.f32.mrb[0].mxu0
        %v3911 = vadd.f32 %v3584, %v3910
        %v3912 = vpop.f32.mrb[0].mxu0
        %v3913 = vadd.f32 %v3584, %v3912
        %3914 = vmatprep.mubr.bf16.mxu0 %v3787
        %3915 = vmatmul.mubr.bf16.gmra.mrb[0].mxu0 %v3786
        %v3916 = vpop.f32.mrb[0].mxu0
        %v3917 = vadd.f32 %v3588, %v3916
        %v3918 = vpop.f32.mrb[0].mxu0
        %v3919 = vadd.f32 %v3588, %v3918
        %v3920 = vpop.f32.mrb[0].mxu0
        %v3921 = vadd.f32 %v3592, %v3920
        %v3922 = vpop.f32.mrb[0].mxu0
        %v3923 = vadd.f32 %v3592, %v3922
        %3924 = vmatprep.mubr.bf16.mxu0 %v3789
        %3925 = vmatmul.mubr.bf16.gmra.mrb[0].mxu0 %v3788
        %v3926 = vpop.f32.mrb[0].mxu0
        %v3927 = vadd.f32 %v3596, %v3926
        %v3928 = vpop.f32.mrb[0].mxu0
        %v3929 = vadd.f32 %v3596, %v3928
        %v3930 = vpop.f32.mrb[0].mxu0
        %v3931 = vadd.f32 %v3600, %v3930
        %v3932 = vpop.f32.mrb[0].mxu0
        %v3933 = vadd.f32 %v3600, %v3932
        %3934 = vmatprep.mubr.bf16.mxu0 %v3791
        %3935 = vmatmul.mubr.bf16.gmra.mrb[0].mxu0 %v3790
        %v3936 = vpop.f32.mrb[0].mxu0
        %v3937 = vadd.f32 %v3604, %v3936
        %v3938 = vpop.f32.mrb[0].mxu0
        %v3939 = vadd.f32 %v3604, %v3938
        %v3940 = vpop.f32.mrb[0].mxu0
        %v3941 = vadd.f32 %v3608, %v3940
        %v3942 = vpop.f32.mrb[0].mxu0
        %v3943 = vadd.f32 %v3608, %v3942
        %3944 = vmatprep.mubr.bf16.mxu0 %v3793
        %3945 = vmatmul.mubr.bf16.gmra.mrb[0].mxu0 %v3792
        %v3946 = vpop.f32.mrb[0].mxu0
        %v3947 = vadd.f32 %v3612, %v3946
        %v3948 = vpop.f32.mrb[0].mxu0
        %v3949 = vadd.f32 %v3612, %v3948
        %v3950 = vpop.f32.mrb[0].mxu0
        %v3951 = vadd.f32 %v3616, %v3950
        %v3952 = vpop.f32.mrb[0].mxu0
        %v3953 = vadd.f32 %v3616, %v3952
        %3954 = vmatprep.mubr.bf16.mxu0 %v3795
        %3955 = vmatmul.mubr.bf16.gmra.mrb[0].mxu0 %v3794
        %v3956 = vpop.f32.mrb[0].mxu0
        %v3957 = vadd.f32 %v3620, %v3956
        %v3958 = vpop.f32.mrb[0].mxu0
        %v3959 = vadd.f32 %v3620, %v3958
        %v3960 = vpop.f32.mrb[0].mxu0
        %v3961 = vadd.f32 %v3624, %v3960
        %v3962 = vpop.f32.mrb[0].mxu0
        %v3963 = vadd.f32 %v3624, %v3962
        %3964 = vmatprep.mubr.bf16.mxu0 %v3797
        %3965 = vmatmul.mubr.bf16.gmra.mrb[0].mxu0 %v3796
        %v3966 = vpop.f32.mrb[0].mxu0
        %v3967 = vadd.f32 %v3628, %v3966
        %v3968 = vpop.f32.mrb[0].mxu0
        %v3969 = vadd.f32 %v3628, %v3968
        %v3970 = vpop.f32.mrb[0].mxu0
        %v3971 = vadd.f32 %v3632, %v3970
        %v3972 = vpop.f32.mrb[0].mxu0
        %v3973 = vadd.f32 %v3632, %v3972
        %3974 = vmatprep.mubr.bf16.mxu0 %v3799
        %3975 = vmatmul.mubr.bf16.gmra.mrb[0].mxu0 %v3798
        %v3976 = vpop.f32.mrb[0].mxu0
        %v3977 = vadd.f32 %v3636, %v3976
        %v3978 = vpop.f32.mrb[0].mxu0
        %v3979 = vadd.f32 %v3636, %v3978
        %v3980 = vpop.f32.mrb[0].mxu0
        %v3981 = vadd.f32 %v3640, %v3980
        %v3982 = vpop.f32.mrb[0].mxu0
        %v3983 = vadd.f32 %v3640, %v3982
        %3984 = vmatprep.mubr.bf16.mxu0 %v3801
        %3985 = vmatmul.mubr.bf16.gmra.mrb[0].mxu0 %v3800
        %v3986 = vpop.f32.mrb[0].mxu0
        %v3987 = vadd.f32 %v3644, %v3986
        %v3988 = vpop.f32.mrb[0].mxu0
        %v3989 = vadd.f32 %v3644, %v3988
        %v3990 = vpop.f32.mrb[0].mxu0
        %v3991 = vadd.f32 %v3648, %v3990
        %v3992 = vpop.f32.mrb[0].mxu0
        %v3993 = vadd.f32 %v3648, %v3992
        %3994 = vmatprep.mubr.bf16.mxu0 %v3803
        %3995 = vmatmul.mubr.bf16.gmra.mrb[0].mxu0 %v3802
        %v3996 = vpop.f32.mrb[0].mxu0
        %v3997 = vadd.f32 %v3652, %v3996
        %v3998 = vpop.f32.mrb[0].mxu0
        %v3999 = vadd.f32 %v3652, %v3998
        %v4000 = vpop.f32.mrb[0].mxu0
        %v4001 = vadd.f32 %v3656, %v4000
        %v4002 = vpop.f32.mrb[0].mxu0
        %v4003 = vadd.f32 %v3656, %v4002
        %4004 = vmatprep.mubr.bf16.mxu0 %v3805
        %4005 = vmatmul.mubr.bf16.gmra.mrb[0].mxu0 %v3804
        %v4006 = vpop.f32.mrb[0].mxu0
        %v4007 = vadd.f32 %v3660, %v4006
        %v4008 = vpop.f32.mrb[0].mxu0
        %v4009 = vadd.f32 %v3660, %v4008
        %v4010 = vpop.f32.mrb[0].mxu0
        %v4011 = vadd.f32 %v3664, %v4010
        %v4012 = vpop.f32.mrb[0].mxu0
        %v4013 = vadd.f32 %v3664, %v4012
        %4014 = vmatprep.mubr.bf16.mxu0 %v3807
        %4015 = vmatmul.mubr.bf16.gmra.mrb[0].mxu0 %v3806
        %v4016 = vpop.f32.mrb[0].mxu0
        %v4017 = vadd.f32 %v3668, %v4016
        %v4018 = vpop.f32.mrb[0].mxu0
        %v4019 = vadd.f32 %v3668, %v4018
        %v4020 = vpop.f32.mrb[0].mxu0
        %v4021 = vadd.f32 %v3672, %v4020
        %v4022 = vpop.f32.mrb[0].mxu0
        %v4023 = vadd.f32 %v3672, %v4022
        %4024 = vmatprep.mubr.bf16.mxu0 %v3809
        %4025 = vmatmul.mubr.bf16.gmra.mrb[0].mxu0 %v3808
        %v4026 = vpop.f32.mrb[0].mxu0
        %v4027 = vadd.f32 %v3676, %v4026
        %v4028 = vpop.f32.mrb[0].mxu0
        %v4029 = vadd.f32 %v3676, %v4028
        %v4030 = vpop.f32.mrb[0].mxu0
        %v4031 = vadd.f32 %v3680, %v4030
        %v4032 = vpop.f32.mrb[0].mxu0
        %v4033 = vadd.f32 %v3680, %v4032
        %4034 = vdwg.mxu0
        %v4035 = vmax.f32 %v3877, 0.0
        %v4036 = vmax.f32 %v3879, 0.0
        %v4037 = vmax.f32 %v3881, 0.0
        %v4038 = vmax.f32 %v3883, 0.0
        %v4039 = vmax.f32 %v3887, 0.0
        %v4040 = vmax.f32 %v3889, 0.0
        %v4041 = vmax.f32 %v3891, 0.0
        %v4042 = vmax.f32 %v3893, 0.0
        %v4043 = vmax.f32 %v3897, 0.0
        %v4044 = vmax.f32 %v3899, 0.0
        %v4045 = vmax.f32 %v3901, 0.0
        %v4046 = vmax.f32 %v3903, 0.0
        %v4047 = vmax.f32 %v3907, 0.0
        %v4048 = vmax.f32 %v3909, 0.0
        %v4049 = vmax.f32 %v3911, 0.0
        %v4050 = vmax.f32 %v3913, 0.0
        %v4051 = vmax.f32 %v3917, 0.0
        %v4052 = vmax.f32 %v3919, 0.0
        %v4053 = vmax.f32 %v3921, 0.0
        %v4054 = vmax.f32 %v3923, 0.0
        %v4055 = vmax.f32 %v3927, 0.0
        %v4056 = vmax.f32 %v3929, 0.0
        %v4057 = vmax.f32 %v3931, 0.0
        %v4058 = vmax.f32 %v3933, 0.0
        %v4059 = vmax.f32 %v3937, 0.0
        %v4060 = vmax.f32 %v3939, 0.0
        %v4061 = vmax.f32 %v3941, 0.0
        %v4062 = vmax.f32 %v3943, 0.0
        %v4063 = vmax.f32 %v3947, 0.0
        %v4064 = vmax.f32 %v3949, 0.0
        %v4065 = vmax.f32 %v3951, 0.0
        %v4066 = vmax.f32 %v3953, 0.0
        %v4067 = vmax.f32 %v3957, 0.0
        %v4068 = vmax.f32 %v3959, 0.0
        %v4069 = vmax.f32 %v3961, 0.0
        %v4070 = vmax.f32 %v3963, 0.0
        %v4071 = vmax.f32 %v3967, 0.0
        %v4072 = vmax.f32 %v3969, 0.0
        %v4073 = vmax.f32 %v3971, 0.0
        %v4074 = vmax.f32 %v3973, 0.0
        %v4075 = vmax.f32 %v3977, 0.0
        %v4076 = vmax.f32 %v3979, 0.0
        %v4077 = vmax.f32 %v3981, 0.0
        %v4078 = vmax.f32 %v3983, 0.0
        %v4079 = vmax.f32 %v3987, 0.0
        %v4080 = vmax.f32 %v3989, 0.0
        %v4081 = vmax.f32 %v3991, 0.0
        %v4082 = vmax.f32 %v3993, 0.0
        %v4083 = vmax.f32 %v3997, 0.0
        %v4084 = vmax.f32 %v3999, 0.0
        %v4085 = vmax.f32 %v4001, 0.0
        %v4086 = vmax.f32 %v4003, 0.0
        %v4087 = vmax.f32 %v4007, 0.0
        %v4088 = vmax.f32 %v4009, 0.0
        %v4089 = vmax.f32 %v4011, 0.0
        %v4090 = vmax.f32 %v4013, 0.0
        %v4091 = vmax.f32 %v4017, 0.0
        %v4092 = vmax.f32 %v4019, 0.0
        %v4093 = vmax.f32 %v4021, 0.0
        %v4094 = vmax.f32 %v4023, 0.0
        %v4095 = vmax.f32 %v4027, 0.0
        %v4096 = vmax.f32 %v4029, 0.0
        %v4097 = vmax.f32 %v4031, 0.0
        %v4098 = vmax.f32 %v4033, 0.0
        %v4099 = vpack.c.bf16 %v4037, %v4035
        %v4100 = vpack.c.bf16 %v4038, %v4036
        %v4101 = vpack.c.bf16 %v4041, %v4039
        %v4102 = vpack.c.bf16 %v4042, %v4040
        %v4103 = vpack.c.bf16 %v4045, %v4043
        %v4104 = vpack.c.bf16 %v4046, %v4044
        %v4105 = vpack.c.bf16 %v4049, %v4047
        %v4106 = vpack.c.bf16 %v4050, %v4048
        %v4107 = vpack.c.bf16 %v4053, %v4051
        %v4108 = vpack.c.bf16 %v4054, %v4052
        %v4109 = vpack.c.bf16 %v4057, %v4055
        %v4110 = vpack.c.bf16 %v4058, %v4056
        %v4111 = vpack.c.bf16 %v4061, %v4059
        %v4112 = vpack.c.bf16 %v4062, %v4060
        %v4113 = vpack.c.bf16 %v4065, %v4063
        %v4114 = vpack.c.bf16 %v4066, %v4064
        %v4115 = vpack.c.bf16 %v4069, %v4067
        %v4116 = vpack.c.bf16 %v4070, %v4068
        %v4117 = vpack.c.bf16 %v4073, %v4071
        %v4118 = vpack.c.bf16 %v4074, %v4072
        %v4119 = vpack.c.bf16 %v4077, %v4075
        %v4120 = vpack.c.bf16 %v4078, %v4076
        %v4121 = vpack.c.bf16 %v4081, %v4079
        %v4122 = vpack.c.bf16 %v4082, %v4080
        %v4123 = vpack.c.bf16 %v4085, %v4083
        %v4124 = vpack.c.bf16 %v4086, %v4084
        %v4125 = vpack.c.bf16 %v4089, %v4087
        %v4126 = vpack.c.bf16 %v4090, %v4088
        %v4127 = vpack.c.bf16 %v4093, %v4091
        %v4128 = vpack.c.bf16 %v4094, %v4092
        %v4129 = vpack.c.bf16 %v4097, %v4095
        %v4130 = vpack.c.bf16 %v4098, %v4096
        %s4131 = scalar_lea.vmem [#allocation3], 1024
        %v4132 = vld [vmem:[%s4131] sm:$0xff]
        %v4133 = vld [vmem:[%s4131 + $0x8] sm:$0xff]
        %v4134 = vld [vmem:[%s4131 + $0x10] sm:$0xff]
        %v4135 = vld [vmem:[%s4131 + $0x18] sm:$0xff]
        %v4136 = vld [vmem:[%s4131 + $0x20] sm:$0xff]
        %v4137 = vld [vmem:[%s4131 + $0x28] sm:$0xff]
        %v4138 = vld [vmem:[%s4131 + $0x30] sm:$0xff]
        %v4139 = vld [vmem:[%s4131 + $0x38] sm:$0xff]
        %v4140 = vld [vmem:[%s4131 + $0x40] sm:$0xff]
        %v4141 = vld [vmem:[%s4131 + $0x48] sm:$0xff]
        %v4142 = vld [vmem:[%s4131 + $0x50] sm:$0xff]
        %v4143 = vld [vmem:[%s4131 + $0x58] sm:$0xff]
        %v4144 = vld [vmem:[%s4131 + $0x60] sm:$0xff]
        %v4145 = vld [vmem:[%s4131 + $0x68] sm:$0xff]
        %v4146 = vld [vmem:[%s4131 + $0x70] sm:$0xff]
        %v4147 = vld [vmem:[%s4131 + $0x78] sm:$0xff]
        %v4148 = vld [vmem:[%s4131 + $0x80] sm:$0xff]
        %v4149 = vld [vmem:[%s4131 + $0x88] sm:$0xff]
        %v4150 = vld [vmem:[%s4131 + $0x90] sm:$0xff]
        %v4151 = vld [vmem:[%s4131 + $0x98] sm:$0xff]
        %v4152 = vld [vmem:[%s4131 + $0xa0] sm:$0xff]
        %v4153 = vld [vmem:[%s4131 + $0xa8] sm:$0xff]
        %v4154 = vld [vmem:[%s4131 + $0xb0] sm:$0xff]
        %v4155 = vld [vmem:[%s4131 + $0xb8] sm:$0xff]
        %v4156 = vld [vmem:[%s4131 + $0xc0] sm:$0xff]
        %v4157 = vld [vmem:[%s4131 + $0xc8] sm:$0xff]
        %v4158 = vld [vmem:[%s4131 + $0xd0] sm:$0xff]
        %v4159 = vld [vmem:[%s4131 + $0xd8] sm:$0xff]
        %v4160 = vld [vmem:[%s4131 + $0xe0] sm:$0xff]
        %v4161 = vld [vmem:[%s4131 + $0xe8] sm:$0xff]
        %v4162 = vld [vmem:[%s4131 + $0xf0] sm:$0xff]
        %v4163 = vld [vmem:[%s4131 + $0xf8] sm:$0xff]
        %4164 = vset.pattern.permute.xlu0 5
        %4165 = vperm.xlu0 %4164, %v1340
        %v4166 = vpop.permute.xlu0 %4165
        %4168 = vset.pattern.permute.xlu0 5
        %4169 = vperm.xlu0 %4168, %v1341
        %v4170 = vpop.permute.xlu0 %4169
        %4172 = vset.pattern.permute.xlu0 5
        %4173 = vperm.xlu0 %4172, %v1342
        %v4174 = vpop.permute.xlu0 %4173
        %4176 = vset.pattern.permute.xlu0 5
        %4177 = vperm.xlu0 %4176, %v1343
        %v4178 = vpop.permute.xlu0 %4177
        %4180 = vset.pattern.permute.xlu0 5
        %4181 = vperm.xlu0 %4180, %v1344
        %v4182 = vpop.permute.xlu0 %4181
        %4184 = vset.pattern.permute.xlu0 5
        %4185 = vperm.xlu0 %4184, %v1345
        %v4186 = vpop.permute.xlu0 %4185
        %4188 = vset.pattern.permute.xlu0 5
        %4189 = vperm.xlu0 %4188, %v1346
        %v4190 = vpop.permute.xlu0 %4189
        %4192 = vset.pattern.permute.xlu0 5
        %4193 = vperm.xlu0 %4192, %v1347
        %v4194 = vpop.permute.xlu0 %4193
        %4196 = vset.pattern.permute.xlu0 5
        %4197 = vperm.xlu0 %4196, %v1348
        %v4198 = vpop.permute.xlu0 %4197
        %4200 = vset.pattern.permute.xlu0 5
        %4201 = vperm.xlu0 %4200, %v1349
        %v4202 = vpop.permute.xlu0 %4201
        %4204 = vset.pattern.permute.xlu0 5
        %4205 = vperm.xlu0 %4204, %v1350
        %v4206 = vpop.permute.xlu0 %4205
        %4208 = vset.pattern.permute.xlu0 5
        %4209 = vperm.xlu0 %4208, %v1351
        %v4210 = vpop.permute.xlu0 %4209
        %4212 = vset.pattern.permute.xlu0 5
        %4213 = vperm.xlu0 %4212, %v1352
        %v4214 = vpop.permute.xlu0 %4213
        %4216 = vset.pattern.permute.xlu0 5
        %4217 = vperm.xlu0 %4216, %v1353
        %v4218 = vpop.permute.xlu0 %4217
        %4220 = vset.pattern.permute.xlu0 5
        %4221 = vperm.xlu0 %4220, %v1354
        %v4222 = vpop.permute.xlu0 %4221
        %4224 = vset.pattern.permute.xlu0 5
        %4225 = vperm.xlu0 %4224, %v1355
        %v4226 = vpop.permute.xlu0 %4225
        %4228 = vset.pattern.permute.xlu0 5
        %4229 = vperm.xlu0 %4228, %v1356
        %v4230 = vpop.permute.xlu0 %4229
        %4232 = vset.pattern.permute.xlu0 5
        %4233 = vperm.xlu0 %4232, %v1357
        %v4234 = vpop.permute.xlu0 %4233
        %4236 = vset.pattern.permute.xlu0 5
        %4237 = vperm.xlu0 %4236, %v1358
        %v4238 = vpop.permute.xlu0 %4237
        %4240 = vset.pattern.permute.xlu0 5
        %4241 = vperm.xlu0 %4240, %v1359
        %v4242 = vpop.permute.xlu0 %4241
        %4244 = vset.pattern.permute.xlu0 5
        %4245 = vperm.xlu0 %4244, %v1360
        %v4246 = vpop.permute.xlu0 %4245
        %4248 = vset.pattern.permute.xlu0 5
        %4249 = vperm.xlu0 %4248, %v1361
        %v4250 = vpop.permute.xlu0 %4249
        %4252 = vset.pattern.permute.xlu0 5
        %4253 = vperm.xlu0 %4252, %v1362
        %v4254 = vpop.permute.xlu0 %4253
        %4256 = vset.pattern.permute.xlu0 5
        %4257 = vperm.xlu0 %4256, %v1363
        %v4258 = vpop.permute.xlu0 %4257
        %4260 = vset.pattern.permute.xlu0 5
        %4261 = vperm.xlu0 %4260, %v1364
        %v4262 = vpop.permute.xlu0 %4261
        %4264 = vset.pattern.permute.xlu0 5
        %4265 = vperm.xlu0 %4264, %v1365
        %v4266 = vpop.permute.xlu0 %4265
        %4268 = vset.pattern.permute.xlu0 5
        %4269 = vperm.xlu0 %4268, %v1366
        %v4270 = vpop.permute.xlu0 %4269
        %4272 = vset.pattern.permute.xlu0 5
        %4273 = vperm.xlu0 %4272, %v1367
        %v4274 = vpop.permute.xlu0 %4273
        %4276 = vset.pattern.permute.xlu0 5
        %4277 = vperm.xlu0 %4276, %v1368
        %v4278 = vpop.permute.xlu0 %4277
        %4280 = vset.pattern.permute.xlu0 5
        %4281 = vperm.xlu0 %4280, %v1369
        %v4282 = vpop.permute.xlu0 %4281
        %4284 = vset.pattern.permute.xlu0 5
        %4285 = vperm.xlu0 %4284, %v1370
        %v4286 = vpop.permute.xlu0 %4285
        %4288 = vset.pattern.permute.xlu0 5
        %4289 = vperm.xlu0 %4288, %v1371
        %v4290 = vpop.permute.xlu0 %4289
        %v4324 = vunpack.c.l.b16 %v4132
        %v4325 = vunpack.c.h.b16 %v4132
        %v4326 = vunpack.c.l.b16 %v4133
        %v4327 = vunpack.c.h.b16 %v4133
        %v4328 = vunpack.c.l.b16 %v4134
        %v4329 = vunpack.c.h.b16 %v4134
        %v4330 = vunpack.c.l.b16 %v4135
        %v4331 = vunpack.c.h.b16 %v4135
        %v4332 = vunpack.c.l.b16 %v4136
        %v4333 = vunpack.c.h.b16 %v4136
        %v4334 = vunpack.c.l.b16 %v4137
        %v4335 = vunpack.c.h.b16 %v4137
        %v4336 = vunpack.c.l.b16 %v4138
        %v4337 = vunpack.c.h.b16 %v4138
        %v4338 = vunpack.c.l.b16 %v4139
        %v4339 = vunpack.c.h.b16 %v4139
        %v4340 = vunpack.c.l.b16 %v4140
        %v4341 = vunpack.c.h.b16 %v4140
        %v4342 = vunpack.c.l.b16 %v4141
        %v4343 = vunpack.c.h.b16 %v4141
        %v4344 = vunpack.c.l.b16 %v4142
        %v4345 = vunpack.c.h.b16 %v4142
        %v4346 = vunpack.c.l.b16 %v4143
        %v4347 = vunpack.c.h.b16 %v4143
        %v4348 = vunpack.c.l.b16 %v4144
        %v4349 = vunpack.c.h.b16 %v4144
        %v4350 = vunpack.c.l.b16 %v4145
        %v4351 = vunpack.c.h.b16 %v4145
        %v4352 = vunpack.c.l.b16 %v4146
        %v4353 = vunpack.c.h.b16 %v4146
        %v4354 = vunpack.c.l.b16 %v4147
        %v4355 = vunpack.c.h.b16 %v4147
        %v4356 = vunpack.c.l.b16 %v4148
        %v4357 = vunpack.c.h.b16 %v4148
        %v4358 = vunpack.c.l.b16 %v4149
        %v4359 = vunpack.c.h.b16 %v4149
        %v4360 = vunpack.c.l.b16 %v4150
        %v4361 = vunpack.c.h.b16 %v4150
        %v4362 = vunpack.c.l.b16 %v4151
        %v4363 = vunpack.c.h.b16 %v4151
        %v4364 = vunpack.c.l.b16 %v4152
        %v4365 = vunpack.c.h.b16 %v4152
        %v4366 = vunpack.c.l.b16 %v4153
        %v4367 = vunpack.c.h.b16 %v4153
        %v4368 = vunpack.c.l.b16 %v4154
        %v4369 = vunpack.c.h.b16 %v4154
        %v4370 = vunpack.c.l.b16 %v4155
        %v4371 = vunpack.c.h.b16 %v4155
        %v4372 = vunpack.c.l.b16 %v4156
        %v4373 = vunpack.c.h.b16 %v4156
        %v4374 = vunpack.c.l.b16 %v4157
        %v4375 = vunpack.c.h.b16 %v4157
        %v4376 = vunpack.c.l.b16 %v4158
        %v4377 = vunpack.c.h.b16 %v4158
        %v4378 = vunpack.c.l.b16 %v4159
        %v4379 = vunpack.c.h.b16 %v4159
        %v4380 = vunpack.c.l.b16 %v4160
        %v4381 = vunpack.c.h.b16 %v4160
        %v4382 = vunpack.c.l.b16 %v4161
        %v4383 = vunpack.c.h.b16 %v4161
        %v4384 = vunpack.c.l.b16 %v4162
        %v4385 = vunpack.c.h.b16 %v4162
        %v4386 = vunpack.c.l.b16 %v4163
        %v4387 = vunpack.c.h.b16 %v4163
        %v4388 = vpack.c.b16 %v4326, %v4324
        %v4389 = vpack.c.b16 %v4327, %v4325
        %v4390 = vpack.c.b16 %v4330, %v4328
        %v4391 = vpack.c.b16 %v4331, %v4329
        %v4392 = vpack.c.b16 %v4334, %v4332
        %v4393 = vpack.c.b16 %v4335, %v4333
        %v4394 = vpack.c.b16 %v4338, %v4336
        %v4395 = vpack.c.b16 %v4339, %v4337
        %v4396 = vpack.c.b16 %v4342, %v4340
        %v4397 = vpack.c.b16 %v4343, %v4341
        %v4398 = vpack.c.b16 %v4346, %v4344
        %v4399 = vpack.c.b16 %v4347, %v4345
        %v4400 = vpack.c.b16 %v4350, %v4348
        %v4401 = vpack.c.b16 %v4351, %v4349
        %v4402 = vpack.c.b16 %v4354, %v4352
        %v4403 = vpack.c.b16 %v4355, %v4353
        %v4404 = vpack.c.b16 %v4358, %v4356
        %v4405 = vpack.c.b16 %v4359, %v4357
        %v4406 = vpack.c.b16 %v4362, %v4360
        %v4407 = vpack.c.b16 %v4363, %v4361
        %v4408 = vpack.c.b16 %v4366, %v4364
        %v4409 = vpack.c.b16 %v4367, %v4365
        %v4410 = vpack.c.b16 %v4370, %v4368
        %v4411 = vpack.c.b16 %v4371, %v4369
        %v4412 = vpack.c.b16 %v4374, %v4372
        %v4413 = vpack.c.b16 %v4375, %v4373
        %v4414 = vpack.c.b16 %v4378, %v4376
        %v4415 = vpack.c.b16 %v4379, %v4377
        %v4416 = vpack.c.b16 %v4382, %v4380
        %v4417 = vpack.c.b16 %v4383, %v4381
        %v4418 = vpack.c.b16 %v4386, %v4384
        %v4419 = vpack.c.b16 %v4387, %v4385
        %4452 = vmatprep.subr.bf16.mxu0 %v4100
        %4453 = vmatpush1.bf16.msra.mxu0 %v4099
        %4454 = vmatprep.subr.bf16.mxu0 %v4102
        %4455 = vmatpush1.bf16.msra.mxu0 %v4101
        %4456 = vmatprep.subr.bf16.mxu0 %v4104
        %4457 = vmatpush1.bf16.msra.mxu0 %v4103
        %4458 = vmatprep.subr.bf16.mxu0 %v4106
        %4459 = vmatpush1.bf16.msra.mxu0 %v4105
        %4460 = vmatprep.subr.bf16.mxu0 %v4108
        %4461 = vmatpush1.bf16.msra.mxu0 %v4107
        %4462 = vmatprep.subr.bf16.mxu0 %v4110
        %4463 = vmatpush1.bf16.msra.mxu0 %v4109
        %4464 = vmatprep.subr.bf16.mxu0 %v4112
        %4465 = vmatpush1.bf16.msra.mxu0 %v4111
        %4466 = vmatprep.subr.bf16.mxu0 %v4114
        %4467 = vmatpush1.bf16.msra.mxu0 %v4113
        %4468 = vmatprep.subr.bf16.mxu0 %v4116
        %4469 = vmatpush1.bf16.msra.mxu0 %v4115
        %4470 = vmatprep.subr.bf16.mxu0 %v4118
        %4471 = vmatpush1.bf16.msra.mxu0 %v4117
        %4472 = vmatprep.subr.bf16.mxu0 %v4120
        %4473 = vmatpush1.bf16.msra.mxu0 %v4119
        %4474 = vmatprep.subr.bf16.mxu0 %v4122
        %4475 = vmatpush1.bf16.msra.mxu0 %v4121
        %4476 = vmatprep.subr.bf16.mxu0 %v4124
        %4477 = vmatpush1.bf16.msra.mxu0 %v4123
        %4478 = vmatprep.subr.bf16.mxu0 %v4126
        %4479 = vmatpush1.bf16.msra.mxu0 %v4125
        %4480 = vmatprep.subr.bf16.mxu0 %v4128
        %4481 = vmatpush1.bf16.msra.mxu0 %v4127
        %4482 = vmatprep.subr.bf16.mxu0 %v4130
        %4483 = vmatpush1.bf16.msra.mxu0 %v4129
        %4484 = vmatprep.mubr.bf16.mxu0 %v4389
        %4485 = vmatmul.mubr.bf16.gmra.mrb[0].mxu0 %v4388
        %v4486 = vpop.f32.mrb[0].mxu0
        %v4487 = vadd.f32 %v4166, %v4486
        %v4488 = vpop.f32.mrb[0].mxu0
        %v4489 = vadd.f32 %v4166, %v4488
        %v4490 = vpop.f32.mrb[0].mxu0
        %v4491 = vadd.f32 %v4170, %v4490
        %v4492 = vpop.f32.mrb[0].mxu0
        %v4493 = vadd.f32 %v4170, %v4492
        %4494 = vmatprep.mubr.bf16.mxu0 %v4391
        %4495 = vmatmul.mubr.bf16.gmra.mrb[0].mxu0 %v4390
        %v4496 = vpop.f32.mrb[0].mxu0
        %v4497 = vadd.f32 %v4174, %v4496
        %v4498 = vpop.f32.mrb[0].mxu0
        %v4499 = vadd.f32 %v4174, %v4498
        %v4500 = vpop.f32.mrb[0].mxu0
        %v4501 = vadd.f32 %v4178, %v4500
        %v4502 = vpop.f32.mrb[0].mxu0
        %v4503 = vadd.f32 %v4178, %v4502
        %4504 = vmatprep.mubr.bf16.mxu0 %v4393
        %4505 = vmatmul.mubr.bf16.gmra.mrb[0].mxu0 %v4392
        %v4506 = vpop.f32.mrb[0].mxu0
        %v4507 = vadd.f32 %v4182, %v4506
        %v4508 = vpop.f32.mrb[0].mxu0
        %v4509 = vadd.f32 %v4182, %v4508
        %v4510 = vpop.f32.mrb[0].mxu0
        %v4511 = vadd.f32 %v4186, %v4510
        %v4512 = vpop.f32.mrb[0].mxu0
        %v4513 = vadd.f32 %v4186, %v4512
        %4514 = vmatprep.mubr.bf16.mxu0 %v4395
        %4515 = vmatmul.mubr.bf16.gmra.mrb[0].mxu0 %v4394
        %v4516 = vpop.f32.mrb[0].mxu0
        %v4517 = vadd.f32 %v4190, %v4516
        %v4518 = vpop.f32.mrb[0].mxu0
        %v4519 = vadd.f32 %v4190, %v4518
        %v4520 = vpop.f32.mrb[0].mxu0
        %v4521 = vadd.f32 %v4194, %v4520
        %v4522 = vpop.f32.mrb[0].mxu0
        %v4523 = vadd.f32 %v4194, %v4522
        %4524 = vmatprep.mubr.bf16.mxu0 %v4397
        %4525 = vmatmul.mubr.bf16.gmra.mrb[0].mxu0 %v4396
        %v4526 = vpop.f32.mrb[0].mxu0
        %v4527 = vadd.f32 %v4198, %v4526
        %v4528 = vpop.f32.mrb[0].mxu0
        %v4529 = vadd.f32 %v4198, %v4528
        %v4530 = vpop.f32.mrb[0].mxu0
        %v4531 = vadd.f32 %v4202, %v4530
        %v4532 = vpop.f32.mrb[0].mxu0
        %v4533 = vadd.f32 %v4202, %v4532
        %4534 = vmatprep.mubr.bf16.mxu0 %v4399
        %4535 = vmatmul.mubr.bf16.gmra.mrb[0].mxu0 %v4398
        %v4536 = vpop.f32.mrb[0].mxu0
        %v4537 = vadd.f32 %v4206, %v4536
        %v4538 = vpop.f32.mrb[0].mxu0
        %v4539 = vadd.f32 %v4206, %v4538
        %v4540 = vpop.f32.mrb[0].mxu0
        %v4541 = vadd.f32 %v4210, %v4540
        %v4542 = vpop.f32.mrb[0].mxu0
        %v4543 = vadd.f32 %v4210, %v4542
        %4544 = vmatprep.mubr.bf16.mxu0 %v4401
        %4545 = vmatmul.mubr.bf16.gmra.mrb[0].mxu0 %v4400
        %v4546 = vpop.f32.mrb[0].mxu0
        %v4547 = vadd.f32 %v4214, %v4546
        %v4548 = vpop.f32.mrb[0].mxu0
        %v4549 = vadd.f32 %v4214, %v4548
        %v4550 = vpop.f32.mrb[0].mxu0
        %v4551 = vadd.f32 %v4218, %v4550
        %v4552 = vpop.f32.mrb[0].mxu0
        %v4553 = vadd.f32 %v4218, %v4552
        %4554 = vmatprep.mubr.bf16.mxu0 %v4403
        %4555 = vmatmul.mubr.bf16.gmra.mrb[0].mxu0 %v4402
        %v4556 = vpop.f32.mrb[0].mxu0
        %v4557 = vadd.f32 %v4222, %v4556
        %v4558 = vpop.f32.mrb[0].mxu0
        %v4559 = vadd.f32 %v4222, %v4558
        %v4560 = vpop.f32.mrb[0].mxu0
        %v4561 = vadd.f32 %v4226, %v4560
        %v4562 = vpop.f32.mrb[0].mxu0
        %v4563 = vadd.f32 %v4226, %v4562
        %4564 = vmatprep.mubr.bf16.mxu0 %v4405
        %4565 = vmatmul.mubr.bf16.gmra.mrb[0].mxu0 %v4404
        %v4566 = vpop.f32.mrb[0].mxu0
        %v4567 = vadd.f32 %v4230, %v4566
        %v4568 = vpop.f32.mrb[0].mxu0
        %v4569 = vadd.f32 %v4230, %v4568
        %v4570 = vpop.f32.mrb[0].mxu0
        %v4571 = vadd.f32 %v4234, %v4570
        %v4572 = vpop.f32.mrb[0].mxu0
        %v4573 = vadd.f32 %v4234, %v4572
        %4574 = vmatprep.mubr.bf16.mxu0 %v4407
        %4575 = vmatmul.mubr.bf16.gmra.mrb[0].mxu0 %v4406
        %v4576 = vpop.f32.mrb[0].mxu0
        %v4577 = vadd.f32 %v4238, %v4576
        %v4578 = vpop.f32.mrb[0].mxu0
        %v4579 = vadd.f32 %v4238, %v4578
        %v4580 = vpop.f32.mrb[0].mxu0
        %v4581 = vadd.f32 %v4242, %v4580
        %v4582 = vpop.f32.mrb[0].mxu0
        %v4583 = vadd.f32 %v4242, %v4582
        %4584 = vmatprep.mubr.bf16.mxu0 %v4409
        %4585 = vmatmul.mubr.bf16.gmra.mrb[0].mxu0 %v4408
        %v4586 = vpop.f32.mrb[0].mxu0
        %v4587 = vadd.f32 %v4246, %v4586
        %v4588 = vpop.f32.mrb[0].mxu0
        %v4589 = vadd.f32 %v4246, %v4588
        %v4590 = vpop.f32.mrb[0].mxu0
        %v4591 = vadd.f32 %v4250, %v4590
        %v4592 = vpop.f32.mrb[0].mxu0
        %v4593 = vadd.f32 %v4250, %v4592
        %4594 = vmatprep.mubr.bf16.mxu0 %v4411
        %4595 = vmatmul.mubr.bf16.gmra.mrb[0].mxu0 %v4410
        %v4596 = vpop.f32.mrb[0].mxu0
        %v4597 = vadd.f32 %v4254, %v4596
        %v4598 = vpop.f32.mrb[0].mxu0
        %v4599 = vadd.f32 %v4254, %v4598
        %v4600 = vpop.f32.mrb[0].mxu0
        %v4601 = vadd.f32 %v4258, %v4600
        %v4602 = vpop.f32.mrb[0].mxu0
        %v4603 = vadd.f32 %v4258, %v4602
        %4604 = vmatprep.mubr.bf16.mxu0 %v4413
        %4605 = vmatmul.mubr.bf16.gmra.mrb[0].mxu0 %v4412
        %v4606 = vpop.f32.mrb[0].mxu0
        %v4607 = vadd.f32 %v4262, %v4606
        %v4608 = vpop.f32.mrb[0].mxu0
        %v4609 = vadd.f32 %v4262, %v4608
        %v4610 = vpop.f32.mrb[0].mxu0
        %v4611 = vadd.f32 %v4266, %v4610
        %v4612 = vpop.f32.mrb[0].mxu0
        %v4613 = vadd.f32 %v4266, %v4612
        %4614 = vmatprep.mubr.bf16.mxu0 %v4415
        %4615 = vmatmul.mubr.bf16.gmra.mrb[0].mxu0 %v4414
        %v4616 = vpop.f32.mrb[0].mxu0
        %v4617 = vadd.f32 %v4270, %v4616
        %v4618 = vpop.f32.mrb[0].mxu0
        %v4619 = vadd.f32 %v4270, %v4618
        %v4620 = vpop.f32.mrb[0].mxu0
        %v4621 = vadd.f32 %v4274, %v4620
        %v4622 = vpop.f32.mrb[0].mxu0
        %v4623 = vadd.f32 %v4274, %v4622
        %4624 = vmatprep.mubr.bf16.mxu0 %v4417
        %4625 = vmatmul.mubr.bf16.gmra.mrb[0].mxu0 %v4416
        %v4626 = vpop.f32.mrb[0].mxu0
        %v4627 = vadd.f32 %v4278, %v4626
        %v4628 = vpop.f32.mrb[0].mxu0
        %v4629 = vadd.f32 %v4278, %v4628
        %v4630 = vpop.f32.mrb[0].mxu0
        %v4631 = vadd.f32 %v4282, %v4630
        %v4632 = vpop.f32.mrb[0].mxu0
        %v4633 = vadd.f32 %v4282, %v4632
        %4634 = vmatprep.mubr.bf16.mxu0 %v4419
        %4635 = vmatmul.mubr.bf16.gmra.mrb[0].mxu0 %v4418
        %v4636 = vpop.f32.mrb[0].mxu0
        %v4637 = vadd.f32 %v4286, %v4636
        %v4638 = vpop.f32.mrb[0].mxu0
        %v4639 = vadd.f32 %v4286, %v4638
        %v4640 = vpop.f32.mrb[0].mxu0
        %v4641 = vadd.f32 %v4290, %v4640
        %v4642 = vpop.f32.mrb[0].mxu0
        %v4643 = vadd.f32 %v4290, %v4642
        %4644 = vdwg.mxu0
        %v4645 = vmax.f32 %v4487, 0.0
        %v4646 = vmax.f32 %v4489, 0.0
        %v4647 = vmax.f32 %v4491, 0.0
        %v4648 = vmax.f32 %v4493, 0.0
        %v4649 = vmax.f32 %v4497, 0.0
        %v4650 = vmax.f32 %v4499, 0.0
        %v4651 = vmax.f32 %v4501, 0.0
        %v4652 = vmax.f32 %v4503, 0.0
        %v4653 = vmax.f32 %v4507, 0.0
        %v4654 = vmax.f32 %v4509, 0.0
        %v4655 = vmax.f32 %v4511, 0.0
        %v4656 = vmax.f32 %v4513, 0.0
        %v4657 = vmax.f32 %v4517, 0.0
        %v4658 = vmax.f32 %v4519, 0.0
        %v4659 = vmax.f32 %v4521, 0.0
        %v4660 = vmax.f32 %v4523, 0.0
        %v4661 = vmax.f32 %v4527, 0.0
        %v4662 = vmax.f32 %v4529, 0.0
        %v4663 = vmax.f32 %v4531, 0.0
        %v4664 = vmax.f32 %v4533, 0.0
        %v4665 = vmax.f32 %v4537, 0.0
        %v4666 = vmax.f32 %v4539, 0.0
        %v4667 = vmax.f32 %v4541, 0.0
        %v4668 = vmax.f32 %v4543, 0.0
        %v4669 = vmax.f32 %v4547, 0.0
        %v4670 = vmax.f32 %v4549, 0.0
        %v4671 = vmax.f32 %v4551, 0.0
        %v4672 = vmax.f32 %v4553, 0.0
        %v4673 = vmax.f32 %v4557, 0.0
        %v4674 = vmax.f32 %v4559, 0.0
        %v4675 = vmax.f32 %v4561, 0.0
        %v4676 = vmax.f32 %v4563, 0.0
        %v4677 = vmax.f32 %v4567, 0.0
        %v4678 = vmax.f32 %v4569, 0.0
        %v4679 = vmax.f32 %v4571, 0.0
        %v4680 = vmax.f32 %v4573, 0.0
        %v4681 = vmax.f32 %v4577, 0.0
        %v4682 = vmax.f32 %v4579, 0.0
        %v4683 = vmax.f32 %v4581, 0.0
        %v4684 = vmax.f32 %v4583, 0.0
        %v4685 = vmax.f32 %v4587, 0.0
        %v4686 = vmax.f32 %v4589, 0.0
        %v4687 = vmax.f32 %v4591, 0.0
        %v4688 = vmax.f32 %v4593, 0.0
        %v4689 = vmax.f32 %v4597, 0.0
        %v4690 = vmax.f32 %v4599, 0.0
        %v4691 = vmax.f32 %v4601, 0.0
        %v4692 = vmax.f32 %v4603, 0.0
        %v4693 = vmax.f32 %v4607, 0.0
        %v4694 = vmax.f32 %v4609, 0.0
        %v4695 = vmax.f32 %v4611, 0.0
        %v4696 = vmax.f32 %v4613, 0.0
        %v4697 = vmax.f32 %v4617, 0.0
        %v4698 = vmax.f32 %v4619, 0.0
        %v4699 = vmax.f32 %v4621, 0.0
        %v4700 = vmax.f32 %v4623, 0.0
        %v4701 = vmax.f32 %v4627, 0.0
        %v4702 = vmax.f32 %v4629, 0.0
        %v4703 = vmax.f32 %v4631, 0.0
        %v4704 = vmax.f32 %v4633, 0.0
        %v4705 = vmax.f32 %v4637, 0.0
        %v4706 = vmax.f32 %v4639, 0.0
        %v4707 = vmax.f32 %v4641, 0.0
        %v4708 = vmax.f32 %v4643, 0.0
        %v4709 = vpack.c.bf16 %v4647, %v4645
        %v4710 = vpack.c.bf16 %v4648, %v4646
        %v4711 = vpack.c.bf16 %v4651, %v4649
        %v4712 = vpack.c.bf16 %v4652, %v4650
        %v4713 = vpack.c.bf16 %v4655, %v4653
        %v4714 = vpack.c.bf16 %v4656, %v4654
        %v4715 = vpack.c.bf16 %v4659, %v4657
        %v4716 = vpack.c.bf16 %v4660, %v4658
        %v4717 = vpack.c.bf16 %v4663, %v4661
        %v4718 = vpack.c.bf16 %v4664, %v4662
        %v4719 = vpack.c.bf16 %v4667, %v4665
        %v4720 = vpack.c.bf16 %v4668, %v4666
        %v4721 = vpack.c.bf16 %v4671, %v4669
        %v4722 = vpack.c.bf16 %v4672, %v4670
        %v4723 = vpack.c.bf16 %v4675, %v4673
        %v4724 = vpack.c.bf16 %v4676, %v4674
        %v4725 = vpack.c.bf16 %v4679, %v4677
        %v4726 = vpack.c.bf16 %v4680, %v4678
        %v4727 = vpack.c.bf16 %v4683, %v4681
        %v4728 = vpack.c.bf16 %v4684, %v4682
        %v4729 = vpack.c.bf16 %v4687, %v4685
        %v4730 = vpack.c.bf16 %v4688, %v4686
        %v4731 = vpack.c.bf16 %v4691, %v4689
        %v4732 = vpack.c.bf16 %v4692, %v4690
        %v4733 = vpack.c.bf16 %v4695, %v4693
        %v4734 = vpack.c.bf16 %v4696, %v4694
        %v4735 = vpack.c.bf16 %v4699, %v4697
        %v4736 = vpack.c.bf16 %v4700, %v4698
        %v4737 = vpack.c.bf16 %v4703, %v4701
        %v4738 = vpack.c.bf16 %v4704, %v4702
        %v4739 = vpack.c.bf16 %v4707, %v4705
        %v4740 = vpack.c.bf16 %v4708, %v4706
        %s4741 = scalar_lea.vmem [#allocation3], 1280
        %v4742 = vld [vmem:[%s4741] sm:$0xff]
        %v4743 = vld [vmem:[%s4741 + $0x8] sm:$0xff]
        %v4744 = vld [vmem:[%s4741 + $0x10] sm:$0xff]
        %v4745 = vld [vmem:[%s4741 + $0x18] sm:$0xff]
        %v4746 = vld [vmem:[%s4741 + $0x20] sm:$0xff]
        %v4747 = vld [vmem:[%s4741 + $0x28] sm:$0xff]
        %v4748 = vld [vmem:[%s4741 + $0x30] sm:$0xff]
        %v4749 = vld [vmem:[%s4741 + $0x38] sm:$0xff]
        %v4750 = vld [vmem:[%s4741 + $0x40] sm:$0xff]
        %v4751 = vld [vmem:[%s4741 + $0x48] sm:$0xff]
        %v4752 = vld [vmem:[%s4741 + $0x50] sm:$0xff]
        %v4753 = vld [vmem:[%s4741 + $0x58] sm:$0xff]
        %v4754 = vld [vmem:[%s4741 + $0x60] sm:$0xff]
        %v4755 = vld [vmem:[%s4741 + $0x68] sm:$0xff]
        %v4756 = vld [vmem:[%s4741 + $0x70] sm:$0xff]
        %v4757 = vld [vmem:[%s4741 + $0x78] sm:$0xff]
        %v4758 = vld [vmem:[%s4741 + $0x80] sm:$0xff]
        %v4759 = vld [vmem:[%s4741 + $0x88] sm:$0xff]
        %v4760 = vld [vmem:[%s4741 + $0x90] sm:$0xff]
        %v4761 = vld [vmem:[%s4741 + $0x98] sm:$0xff]
        %v4762 = vld [vmem:[%s4741 + $0xa0] sm:$0xff]
        %v4763 = vld [vmem:[%s4741 + $0xa8] sm:$0xff]
        %v4764 = vld [vmem:[%s4741 + $0xb0] sm:$0xff]
        %v4765 = vld [vmem:[%s4741 + $0xb8] sm:$0xff]
        %v4766 = vld [vmem:[%s4741 + $0xc0] sm:$0xff]
        %v4767 = vld [vmem:[%s4741 + $0xc8] sm:$0xff]
        %v4768 = vld [vmem:[%s4741 + $0xd0] sm:$0xff]
        %v4769 = vld [vmem:[%s4741 + $0xd8] sm:$0xff]
        %v4770 = vld [vmem:[%s4741 + $0xe0] sm:$0xff]
        %v4771 = vld [vmem:[%s4741 + $0xe8] sm:$0xff]
        %v4772 = vld [vmem:[%s4741 + $0xf0] sm:$0xff]
        %v4773 = vld [vmem:[%s4741 + $0xf8] sm:$0xff]
        %4774 = vset.pattern.permute.xlu0 6
        %4775 = vperm.xlu0 %4774, %v1340
        %v4776 = vpop.permute.xlu0 %4775
        %4778 = vset.pattern.permute.xlu0 6
        %4779 = vperm.xlu0 %4778, %v1341
        %v4780 = vpop.permute.xlu0 %4779
        %4782 = vset.pattern.permute.xlu0 6
        %4783 = vperm.xlu0 %4782, %v1342
        %v4784 = vpop.permute.xlu0 %4783
        %4786 = vset.pattern.permute.xlu0 6
        %4787 = vperm.xlu0 %4786, %v1343
        %v4788 = vpop.permute.xlu0 %4787
        %4790 = vset.pattern.permute.xlu0 6
        %4791 = vperm.xlu0 %4790, %v1344
        %v4792 = vpop.permute.xlu0 %4791
        %4794 = vset.pattern.permute.xlu0 6
        %4795 = vperm.xlu0 %4794, %v1345
        %v4796 = vpop.permute.xlu0 %4795
        %4798 = vset.pattern.permute.xlu0 6
        %4799 = vperm.xlu0 %4798, %v1346
        %v4800 = vpop.permute.xlu0 %4799
        %4802 = vset.pattern.permute.xlu0 6
        %4803 = vperm.xlu0 %4802, %v1347
        %v4804 = vpop.permute.xlu0 %4803
        %4806 = vset.pattern.permute.xlu0 6
        %4807 = vperm.xlu0 %4806, %v1348
        %v4808 = vpop.permute.xlu0 %4807
        %4810 = vset.pattern.permute.xlu0 6
        %4811 = vperm.xlu0 %4810, %v1349
        %v4812 = vpop.permute.xlu0 %4811
        %4814 = vset.pattern.permute.xlu0 6
        %4815 = vperm.xlu0 %4814, %v1350
        %v4816 = vpop.permute.xlu0 %4815
        %4818 = vset.pattern.permute.xlu0 6
        %4819 = vperm.xlu0 %4818, %v1351
        %v4820 = vpop.permute.xlu0 %4819
        %4822 = vset.pattern.permute.xlu0 6
        %4823 = vperm.xlu0 %4822, %v1352
        %v4824 = vpop.permute.xlu0 %4823
        %4826 = vset.pattern.permute.xlu0 6
        %4827 = vperm.xlu0 %4826, %v1353
        %v4828 = vpop.permute.xlu0 %4827
        %4830 = vset.pattern.permute.xlu0 6
        %4831 = vperm.xlu0 %4830, %v1354
        %v4832 = vpop.permute.xlu0 %4831
        %4834 = vset.pattern.permute.xlu0 6
        %4835 = vperm.xlu0 %4834, %v1355
        %v4836 = vpop.permute.xlu0 %4835
        %4838 = vset.pattern.permute.xlu0 6
        %4839 = vperm.xlu0 %4838, %v1356
        %v4840 = vpop.permute.xlu0 %4839
        %4842 = vset.pattern.permute.xlu0 6
        %4843 = vperm.xlu0 %4842, %v1357
        %v4844 = vpop.permute.xlu0 %4843
        %4846 = vset.pattern.permute.xlu0 6
        %4847 = vperm.xlu0 %4846, %v1358
        %v4848 = vpop.permute.xlu0 %4847
        %4850 = vset.pattern.permute.xlu0 6
        %4851 = vperm.xlu0 %4850, %v1359
        %v4852 = vpop.permute.xlu0 %4851
        %4854 = vset.pattern.permute.xlu0 6
        %4855 = vperm.xlu0 %4854, %v1360
        %v4856 = vpop.permute.xlu0 %4855
        %4858 = vset.pattern.permute.xlu0 6
        %4859 = vperm.xlu0 %4858, %v1361
        %v4860 = vpop.permute.xlu0 %4859
        %4862 = vset.pattern.permute.xlu0 6
        %4863 = vperm.xlu0 %4862, %v1362
        %v4864 = vpop.permute.xlu0 %4863
        %4866 = vset.pattern.permute.xlu0 6
        %4867 = vperm.xlu0 %4866, %v1363
        %v4868 = vpop.permute.xlu0 %4867
        %4870 = vset.pattern.permute.xlu0 6
        %4871 = vperm.xlu0 %4870, %v1364
        %v4872 = vpop.permute.xlu0 %4871
        %4874 = vset.pattern.permute.xlu0 6
        %4875 = vperm.xlu0 %4874, %v1365
        %v4876 = vpop.permute.xlu0 %4875
        %4878 = vset.pattern.permute.xlu0 6
        %4879 = vperm.xlu0 %4878, %v1366
        %v4880 = vpop.permute.xlu0 %4879
        %4882 = vset.pattern.permute.xlu0 6
        %4883 = vperm.xlu0 %4882, %v1367
        %v4884 = vpop.permute.xlu0 %4883
        %4886 = vset.pattern.permute.xlu0 6
        %4887 = vperm.xlu0 %4886, %v1368
        %v4888 = vpop.permute.xlu0 %4887
        %4890 = vset.pattern.permute.xlu0 6
        %4891 = vperm.xlu0 %4890, %v1369
        %v4892 = vpop.permute.xlu0 %4891
        %4894 = vset.pattern.permute.xlu0 6
        %4895 = vperm.xlu0 %4894, %v1370
        %v4896 = vpop.permute.xlu0 %4895
        %4898 = vset.pattern.permute.xlu0 6
        %4899 = vperm.xlu0 %4898, %v1371
        %v4900 = vpop.permute.xlu0 %4899
        %v4934 = vunpack.c.l.b16 %v4742
        %v4935 = vunpack.c.h.b16 %v4742
        %v4936 = vunpack.c.l.b16 %v4743
        %v4937 = vunpack.c.h.b16 %v4743
        %v4938 = vunpack.c.l.b16 %v4744
        %v4939 = vunpack.c.h.b16 %v4744
        %v4940 = vunpack.c.l.b16 %v4745
        %v4941 = vunpack.c.h.b16 %v4745
        %v4942 = vunpack.c.l.b16 %v4746
        %v4943 = vunpack.c.h.b16 %v4746
        %v4944 = vunpack.c.l.b16 %v4747
        %v4945 = vunpack.c.h.b16 %v4747
        %v4946 = vunpack.c.l.b16 %v4748
        %v4947 = vunpack.c.h.b16 %v4748
        %v4948 = vunpack.c.l.b16 %v4749
        %v4949 = vunpack.c.h.b16 %v4749
        %v4950 = vunpack.c.l.b16 %v4750
        %v4951 = vunpack.c.h.b16 %v4750
        %v4952 = vunpack.c.l.b16 %v4751
        %v4953 = vunpack.c.h.b16 %v4751
        %v4954 = vunpack.c.l.b16 %v4752
        %v4955 = vunpack.c.h.b16 %v4752
        %v4956 = vunpack.c.l.b16 %v4753
        %v4957 = vunpack.c.h.b16 %v4753
        %v4958 = vunpack.c.l.b16 %v4754
        %v4959 = vunpack.c.h.b16 %v4754
        %v4960 = vunpack.c.l.b16 %v4755
        %v4961 = vunpack.c.h.b16 %v4755
        %v4962 = vunpack.c.l.b16 %v4756
        %v4963 = vunpack.c.h.b16 %v4756
        %v4964 = vunpack.c.l.b16 %v4757
        %v4965 = vunpack.c.h.b16 %v4757
        %v4966 = vunpack.c.l.b16 %v4758
        %v4967 = vunpack.c.h.b16 %v4758
        %v4968 = vunpack.c.l.b16 %v4759
        %v4969 = vunpack.c.h.b16 %v4759
        %v4970 = vunpack.c.l.b16 %v4760
        %v4971 = vunpack.c.h.b16 %v4760
        %v4972 = vunpack.c.l.b16 %v4761
        %v4973 = vunpack.c.h.b16 %v4761
        %v4974 = vunpack.c.l.b16 %v4762
        %v4975 = vunpack.c.h.b16 %v4762
        %v4976 = vunpack.c.l.b16 %v4763
        %v4977 = vunpack.c.h.b16 %v4763
        %v4978 = vunpack.c.l.b16 %v4764
        %v4979 = vunpack.c.h.b16 %v4764
        %v4980 = vunpack.c.l.b16 %v4765
        %v4981 = vunpack.c.h.b16 %v4765
        %v4982 = vunpack.c.l.b16 %v4766
        %v4983 = vunpack.c.h.b16 %v4766
        %v4984 = vunpack.c.l.b16 %v4767
        %v4985 = vunpack.c.h.b16 %v4767
        %v4986 = vunpack.c.l.b16 %v4768
        %v4987 = vunpack.c.h.b16 %v4768
        %v4988 = vunpack.c.l.b16 %v4769
        %v4989 = vunpack.c.h.b16 %v4769
        %v4990 = vunpack.c.l.b16 %v4770
        %v4991 = vunpack.c.h.b16 %v4770
        %v4992 = vunpack.c.l.b16 %v4771
        %v4993 = vunpack.c.h.b16 %v4771
        %v4994 = vunpack.c.l.b16 %v4772
        %v4995 = vunpack.c.h.b16 %v4772
        %v4996 = vunpack.c.l.b16 %v4773
        %v4997 = vunpack.c.h.b16 %v4773
        %v4998 = vpack.c.b16 %v4936, %v4934
        %v4999 = vpack.c.b16 %v4937, %v4935
        %v5000 = vpack.c.b16 %v4940, %v4938
        %v5001 = vpack.c.b16 %v4941, %v4939
        %v5002 = vpack.c.b16 %v4944, %v4942
        %v5003 = vpack.c.b16 %v4945, %v4943
        %v5004 = vpack.c.b16 %v4948, %v4946
        %v5005 = vpack.c.b16 %v4949, %v4947
        %v5006 = vpack.c.b16 %v4952, %v4950
        %v5007 = vpack.c.b16 %v4953, %v4951
        %v5008 = vpack.c.b16 %v4956, %v4954
        %v5009 = vpack.c.b16 %v4957, %v4955
        %v5010 = vpack.c.b16 %v4960, %v4958
        %v5011 = vpack.c.b16 %v4961, %v4959
        %v5012 = vpack.c.b16 %v4964, %v4962
        %v5013 = vpack.c.b16 %v4965, %v4963
        %v5014 = vpack.c.b16 %v4968, %v4966
        %v5015 = vpack.c.b16 %v4969, %v4967
        %v5016 = vpack.c.b16 %v4972, %v4970
        %v5017 = vpack.c.b16 %v4973, %v4971
        %v5018 = vpack.c.b16 %v4976, %v4974
        %v5019 = vpack.c.b16 %v4977, %v4975
        %v5020 = vpack.c.b16 %v4980, %v4978
        %v5021 = vpack.c.b16 %v4981, %v4979
        %v5022 = vpack.c.b16 %v4984, %v4982
        %v5023 = vpack.c.b16 %v4985, %v4983
        %v5024 = vpack.c.b16 %v4988, %v4986
        %v5025 = vpack.c.b16 %v4989, %v4987
        %v5026 = vpack.c.b16 %v4992, %v4990
        %v5027 = vpack.c.b16 %v4993, %v4991
        %v5028 = vpack.c.b16 %v4996, %v4994
        %v5029 = vpack.c.b16 %v4997, %v4995
        %5062 = vmatprep.subr.bf16.mxu0 %v4710
        %5063 = vmatpush1.bf16.msra.mxu0 %v4709
        %5064 = vmatprep.subr.bf16.mxu0 %v4712
        %5065 = vmatpush1.bf16.msra.mxu0 %v4711
        %5066 = vmatprep.subr.bf16.mxu0 %v4714
        %5067 = vmatpush1.bf16.msra.mxu0 %v4713
        %5068 = vmatprep.subr.bf16.mxu0 %v4716
        %5069 = vmatpush1.bf16.msra.mxu0 %v4715
        %5070 = vmatprep.subr.bf16.mxu0 %v4718
        %5071 = vmatpush1.bf16.msra.mxu0 %v4717
        %5072 = vmatprep.subr.bf16.mxu0 %v4720
        %5073 = vmatpush1.bf16.msra.mxu0 %v4719
        %5074 = vmatprep.subr.bf16.mxu0 %v4722
        %5075 = vmatpush1.bf16.msra.mxu0 %v4721
        %5076 = vmatprep.subr.bf16.mxu0 %v4724
        %5077 = vmatpush1.bf16.msra.mxu0 %v4723
        %5078 = vmatprep.subr.bf16.mxu0 %v4726
        %5079 = vmatpush1.bf16.msra.mxu0 %v4725
        %5080 = vmatprep.subr.bf16.mxu0 %v4728
        %5081 = vmatpush1.bf16.msra.mxu0 %v4727
        %5082 = vmatprep.subr.bf16.mxu0 %v4730
        %5083 = vmatpush1.bf16.msra.mxu0 %v4729
        %5084 = vmatprep.subr.bf16.mxu0 %v4732
        %5085 = vmatpush1.bf16.msra.mxu0 %v4731
        %5086 = vmatprep.subr.bf16.mxu0 %v4734
        %5087 = vmatpush1.bf16.msra.mxu0 %v4733
        %5088 = vmatprep.subr.bf16.mxu0 %v4736
        %5089 = vmatpush1.bf16.msra.mxu0 %v4735
        %5090 = vmatprep.subr.bf16.mxu0 %v4738
        %5091 = vmatpush1.bf16.msra.mxu0 %v4737
        %5092 = vmatprep.subr.bf16.mxu0 %v4740
        %5093 = vmatpush1.bf16.msra.mxu0 %v4739
        %5094 = vmatprep.mubr.bf16.mxu0 %v4999
        %5095 = vmatmul.mubr.bf16.gmra.mrb[0].mxu0 %v4998
        %v5096 = vpop.f32.mrb[0].mxu0
        %v5097 = vadd.f32 %v4776, %v5096
        %v5098 = vpop.f32.mrb[0].mxu0
        %v5099 = vadd.f32 %v4776, %v5098
        %v5100 = vpop.f32.mrb[0].mxu0
        %v5101 = vadd.f32 %v4780, %v5100
        %v5102 = vpop.f32.mrb[0].mxu0
        %v5103 = vadd.f32 %v4780, %v5102
        %5104 = vmatprep.mubr.bf16.mxu0 %v5001
        %5105 = vmatmul.mubr.bf16.gmra.mrb[0].mxu0 %v5000
        %v5106 = vpop.f32.mrb[0].mxu0
        %v5107 = vadd.f32 %v4784, %v5106
        %v5108 = vpop.f32.mrb[0].mxu0
        %v5109 = vadd.f32 %v4784, %v5108
        %v5110 = vpop.f32.mrb[0].mxu0
        %v5111 = vadd.f32 %v4788, %v5110
        %v5112 = vpop.f32.mrb[0].mxu0
        %v5113 = vadd.f32 %v4788, %v5112
        %5114 = vmatprep.mubr.bf16.mxu0 %v5003
        %5115 = vmatmul.mubr.bf16.gmra.mrb[0].mxu0 %v5002
        %v5116 = vpop.f32.mrb[0].mxu0
        %v5117 = vadd.f32 %v4792, %v5116
        %v5118 = vpop.f32.mrb[0].mxu0
        %v5119 = vadd.f32 %v4792, %v5118
        %v5120 = vpop.f32.mrb[0].mxu0
        %v5121 = vadd.f32 %v4796, %v5120
        %v5122 = vpop.f32.mrb[0].mxu0
        %v5123 = vadd.f32 %v4796, %v5122
        %5124 = vmatprep.mubr.bf16.mxu0 %v5005
        %5125 = vmatmul.mubr.bf16.gmra.mrb[0].mxu0 %v5004
        %v5126 = vpop.f32.mrb[0].mxu0
        %v5127 = vadd.f32 %v4800, %v5126
        %v5128 = vpop.f32.mrb[0].mxu0
        %v5129 = vadd.f32 %v4800, %v5128
        %v5130 = vpop.f32.mrb[0].mxu0
        %v5131 = vadd.f32 %v4804, %v5130
        %v5132 = vpop.f32.mrb[0].mxu0
        %v5133 = vadd.f32 %v4804, %v5132
        %5134 = vmatprep.mubr.bf16.mxu0 %v5007
        %5135 = vmatmul.mubr.bf16.gmra.mrb[0].mxu0 %v5006
        %v5136 = vpop.f32.mrb[0].mxu0
        %v5137 = vadd.f32 %v4808, %v5136
        %v5138 = vpop.f32.mrb[0].mxu0
        %v5139 = vadd.f32 %v4808, %v5138
        %v5140 = vpop.f32.mrb[0].mxu0
        %v5141 = vadd.f32 %v4812, %v5140
        %v5142 = vpop.f32.mrb[0].mxu0
        %v5143 = vadd.f32 %v4812, %v5142
        %5144 = vmatprep.mubr.bf16.mxu0 %v5009
        %5145 = vmatmul.mubr.bf16.gmra.mrb[0].mxu0 %v5008
        %v5146 = vpop.f32.mrb[0].mxu0
        %v5147 = vadd.f32 %v4816, %v5146
        %v5148 = vpop.f32.mrb[0].mxu0
        %v5149 = vadd.f32 %v4816, %v5148
        %v5150 = vpop.f32.mrb[0].mxu0
        %v5151 = vadd.f32 %v4820, %v5150
        %v5152 = vpop.f32.mrb[0].mxu0
        %v5153 = vadd.f32 %v4820, %v5152
        %5154 = vmatprep.mubr.bf16.mxu0 %v5011
        %5155 = vmatmul.mubr.bf16.gmra.mrb[0].mxu0 %v5010
        %v5156 = vpop.f32.mrb[0].mxu0
        %v5157 = vadd.f32 %v4824, %v5156
        %v5158 = vpop.f32.mrb[0].mxu0
        %v5159 = vadd.f32 %v4824, %v5158
        %v5160 = vpop.f32.mrb[0].mxu0
        %v5161 = vadd.f32 %v4828, %v5160
        %v5162 = vpop.f32.mrb[0].mxu0
        %v5163 = vadd.f32 %v4828, %v5162
        %5164 = vmatprep.mubr.bf16.mxu0 %v5013
        %5165 = vmatmul.mubr.bf16.gmra.mrb[0].mxu0 %v5012
        %v5166 = vpop.f32.mrb[0].mxu0
        %v5167 = vadd.f32 %v4832, %v5166
        %v5168 = vpop.f32.mrb[0].mxu0
        %v5169 = vadd.f32 %v4832, %v5168
        %v5170 = vpop.f32.mrb[0].mxu0
        %v5171 = vadd.f32 %v4836, %v5170
        %v5172 = vpop.f32.mrb[0].mxu0
        %v5173 = vadd.f32 %v4836, %v5172
        %5174 = vmatprep.mubr.bf16.mxu0 %v5015
        %5175 = vmatmul.mubr.bf16.gmra.mrb[0].mxu0 %v5014
        %v5176 = vpop.f32.mrb[0].mxu0
        %v5177 = vadd.f32 %v4840, %v5176
        %v5178 = vpop.f32.mrb[0].mxu0
        %v5179 = vadd.f32 %v4840, %v5178
        %v5180 = vpop.f32.mrb[0].mxu0
        %v5181 = vadd.f32 %v4844, %v5180
        %v5182 = vpop.f32.mrb[0].mxu0
        %v5183 = vadd.f32 %v4844, %v5182
        %5184 = vmatprep.mubr.bf16.mxu0 %v5017
        %5185 = vmatmul.mubr.bf16.gmra.mrb[0].mxu0 %v5016
        %v5186 = vpop.f32.mrb[0].mxu0
        %v5187 = vadd.f32 %v4848, %v5186
        %v5188 = vpop.f32.mrb[0].mxu0
        %v5189 = vadd.f32 %v4848, %v5188
        %v5190 = vpop.f32.mrb[0].mxu0
        %v5191 = vadd.f32 %v4852, %v5190
        %v5192 = vpop.f32.mrb[0].mxu0
        %v5193 = vadd.f32 %v4852, %v5192
        %5194 = vmatprep.mubr.bf16.mxu0 %v5019
        %5195 = vmatmul.mubr.bf16.gmra.mrb[0].mxu0 %v5018
        %v5196 = vpop.f32.mrb[0].mxu0
        %v5197 = vadd.f32 %v4856, %v5196
        %v5198 = vpop.f32.mrb[0].mxu0
        %v5199 = vadd.f32 %v4856, %v5198
        %v5200 = vpop.f32.mrb[0].mxu0
        %v5201 = vadd.f32 %v4860, %v5200
        %v5202 = vpop.f32.mrb[0].mxu0
        %v5203 = vadd.f32 %v4860, %v5202
        %5204 = vmatprep.mubr.bf16.mxu0 %v5021
        %5205 = vmatmul.mubr.bf16.gmra.mrb[0].mxu0 %v5020
        %v5206 = vpop.f32.mrb[0].mxu0
        %v5207 = vadd.f32 %v4864, %v5206
        %v5208 = vpop.f32.mrb[0].mxu0
        %v5209 = vadd.f32 %v4864, %v5208
        %v5210 = vpop.f32.mrb[0].mxu0
        %v5211 = vadd.f32 %v4868, %v5210
        %v5212 = vpop.f32.mrb[0].mxu0
        %v5213 = vadd.f32 %v4868, %v5212
        %5214 = vmatprep.mubr.bf16.mxu0 %v5023
        %5215 = vmatmul.mubr.bf16.gmra.mrb[0].mxu0 %v5022
        %v5216 = vpop.f32.mrb[0].mxu0
        %v5217 = vadd.f32 %v4872, %v5216
        %v5218 = vpop.f32.mrb[0].mxu0
        %v5219 = vadd.f32 %v4872, %v5218
        %v5220 = vpop.f32.mrb[0].mxu0
        %v5221 = vadd.f32 %v4876, %v5220
        %v5222 = vpop.f32.mrb[0].mxu0
        %v5223 = vadd.f32 %v4876, %v5222
        %5224 = vmatprep.mubr.bf16.mxu0 %v5025
        %5225 = vmatmul.mubr.bf16.gmra.mrb[0].mxu0 %v5024
        %v5226 = vpop.f32.mrb[0].mxu0
        %v5227 = vadd.f32 %v4880, %v5226
        %v5228 = vpop.f32.mrb[0].mxu0
        %v5229 = vadd.f32 %v4880, %v5228
        %v5230 = vpop.f32.mrb[0].mxu0
        %v5231 = vadd.f32 %v4884, %v5230
        %v5232 = vpop.f32.mrb[0].mxu0
        %v5233 = vadd.f32 %v4884, %v5232
        %5234 = vmatprep.mubr.bf16.mxu0 %v5027
        %5235 = vmatmul.mubr.bf16.gmra.mrb[0].mxu0 %v5026
        %v5236 = vpop.f32.mrb[0].mxu0
        %v5237 = vadd.f32 %v4888, %v5236
        %v5238 = vpop.f32.mrb[0].mxu0
        %v5239 = vadd.f32 %v4888, %v5238
        %v5240 = vpop.f32.mrb[0].mxu0
        %v5241 = vadd.f32 %v4892, %v5240
        %v5242 = vpop.f32.mrb[0].mxu0
        %v5243 = vadd.f32 %v4892, %v5242
        %5244 = vmatprep.mubr.bf16.mxu0 %v5029
        %5245 = vmatmul.mubr.bf16.gmra.mrb[0].mxu0 %v5028
        %v5246 = vpop.f32.mrb[0].mxu0
        %v5247 = vadd.f32 %v4896, %v5246
        %v5248 = vpop.f32.mrb[0].mxu0
        %v5249 = vadd.f32 %v4896, %v5248
        %v5250 = vpop.f32.mrb[0].mxu0
        %v5251 = vadd.f32 %v4900, %v5250
        %v5252 = vpop.f32.mrb[0].mxu0
        %v5253 = vadd.f32 %v4900, %v5252
        %5254 = vdwg.mxu0
        %v5255 = vmax.f32 %v5097, 0.0
        %v5256 = vmax.f32 %v5099, 0.0
        %v5257 = vmax.f32 %v5101, 0.0
        %v5258 = vmax.f32 %v5103, 0.0
        %v5259 = vmax.f32 %v5107, 0.0
        %v5260 = vmax.f32 %v5109, 0.0
        %v5261 = vmax.f32 %v5111, 0.0
        %v5262 = vmax.f32 %v5113, 0.0
        %v5263 = vmax.f32 %v5117, 0.0
        %v5264 = vmax.f32 %v5119, 0.0
        %v5265 = vmax.f32 %v5121, 0.0
        %v5266 = vmax.f32 %v5123, 0.0
        %v5267 = vmax.f32 %v5127, 0.0
        %v5268 = vmax.f32 %v5129, 0.0
        %v5269 = vmax.f32 %v5131, 0.0
        %v5270 = vmax.f32 %v5133, 0.0
        %v5271 = vmax.f32 %v5137, 0.0
        %v5272 = vmax.f32 %v5139, 0.0
        %v5273 = vmax.f32 %v5141, 0.0
        %v5274 = vmax.f32 %v5143, 0.0
        %v5275 = vmax.f32 %v5147, 0.0
        %v5276 = vmax.f32 %v5149, 0.0
        %v5277 = vmax.f32 %v5151, 0.0
        %v5278 = vmax.f32 %v5153, 0.0
        %v5279 = vmax.f32 %v5157, 0.0
        %v5280 = vmax.f32 %v5159, 0.0
        %v5281 = vmax.f32 %v5161, 0.0
        %v5282 = vmax.f32 %v5163, 0.0
        %v5283 = vmax.f32 %v5167, 0.0
        %v5284 = vmax.f32 %v5169, 0.0
        %v5285 = vmax.f32 %v5171, 0.0
        %v5286 = vmax.f32 %v5173, 0.0
        %v5287 = vmax.f32 %v5177, 0.0
        %v5288 = vmax.f32 %v5179, 0.0
        %v5289 = vmax.f32 %v5181, 0.0
        %v5290 = vmax.f32 %v5183, 0.0
        %v5291 = vmax.f32 %v5187, 0.0
        %v5292 = vmax.f32 %v5189, 0.0
        %v5293 = vmax.f32 %v5191, 0.0
        %v5294 = vmax.f32 %v5193, 0.0
        %v5295 = vmax.f32 %v5197, 0.0
        %v5296 = vmax.f32 %v5199, 0.0
        %v5297 = vmax.f32 %v5201, 0.0
        %v5298 = vmax.f32 %v5203, 0.0
        %v5299 = vmax.f32 %v5207, 0.0
        %v5300 = vmax.f32 %v5209, 0.0
        %v5301 = vmax.f32 %v5211, 0.0
        %v5302 = vmax.f32 %v5213, 0.0
        %v5303 = vmax.f32 %v5217, 0.0
        %v5304 = vmax.f32 %v5219, 0.0
        %v5305 = vmax.f32 %v5221, 0.0
        %v5306 = vmax.f32 %v5223, 0.0
        %v5307 = vmax.f32 %v5227, 0.0
        %v5308 = vmax.f32 %v5229, 0.0
        %v5309 = vmax.f32 %v5231, 0.0
        %v5310 = vmax.f32 %v5233, 0.0
        %v5311 = vmax.f32 %v5237, 0.0
        %v5312 = vmax.f32 %v5239, 0.0
        %v5313 = vmax.f32 %v5241, 0.0
        %v5314 = vmax.f32 %v5243, 0.0
        %v5315 = vmax.f32 %v5247, 0.0
        %v5316 = vmax.f32 %v5249, 0.0
        %v5317 = vmax.f32 %v5251, 0.0
        %v5318 = vmax.f32 %v5253, 0.0
        %5319 = vset.pattern.permute.xlu0 7
        %5320 = vperm.xlu0 %5319, %v1340
        %v5321 = vpop.permute.xlu0 %5320
        %5323 = vset.pattern.permute.xlu0 7
        %5324 = vperm.xlu0 %5323, %v1341
        %v5325 = vpop.permute.xlu0 %5324
        %5327 = vset.pattern.permute.xlu0 7
        %5328 = vperm.xlu0 %5327, %v1342
        %v5329 = vpop.permute.xlu0 %5328
        %5331 = vset.pattern.permute.xlu0 7
        %5332 = vperm.xlu0 %5331, %v1343
        %v5333 = vpop.permute.xlu0 %5332
        %5335 = vset.pattern.permute.xlu0 7
        %5336 = vperm.xlu0 %5335, %v1344
        %v5337 = vpop.permute.xlu0 %5336
        %5339 = vset.pattern.permute.xlu0 7
        %5340 = vperm.xlu0 %5339, %v1345
        %v5341 = vpop.permute.xlu0 %5340
        %5343 = vset.pattern.permute.xlu0 7
        %5344 = vperm.xlu0 %5343, %v1346
        %v5345 = vpop.permute.xlu0 %5344
        %5347 = vset.pattern.permute.xlu0 7
        %5348 = vperm.xlu0 %5347, %v1347
        %v5349 = vpop.permute.xlu0 %5348
        %5351 = vset.pattern.permute.xlu0 7
        %5352 = vperm.xlu0 %5351, %v1348
        %v5353 = vpop.permute.xlu0 %5352
        %5355 = vset.pattern.permute.xlu0 7
        %5356 = vperm.xlu0 %5355, %v1349
        %v5357 = vpop.permute.xlu0 %5356
        %5359 = vset.pattern.permute.xlu0 7
        %5360 = vperm.xlu0 %5359, %v1350
        %v5361 = vpop.permute.xlu0 %5360
        %5363 = vset.pattern.permute.xlu0 7
        %5364 = vperm.xlu0 %5363, %v1351
        %v5365 = vpop.permute.xlu0 %5364
        %5367 = vset.pattern.permute.xlu0 7
        %5368 = vperm.xlu0 %5367, %v1352
        %v5369 = vpop.permute.xlu0 %5368
        %5371 = vset.pattern.permute.xlu0 7
        %5372 = vperm.xlu0 %5371, %v1353
        %v5373 = vpop.permute.xlu0 %5372
        %5375 = vset.pattern.permute.xlu0 7
        %5376 = vperm.xlu0 %5375, %v1354
        %v5377 = vpop.permute.xlu0 %5376
        %5379 = vset.pattern.permute.xlu0 7
        %5380 = vperm.xlu0 %5379, %v1355
        %v5381 = vpop.permute.xlu0 %5380
        %5383 = vset.pattern.permute.xlu0 7
        %5384 = vperm.xlu0 %5383, %v1356
        %v5385 = vpop.permute.xlu0 %5384
        %5387 = vset.pattern.permute.xlu0 7
        %5388 = vperm.xlu0 %5387, %v1357
        %v5389 = vpop.permute.xlu0 %5388
        %5391 = vset.pattern.permute.xlu0 7
        %5392 = vperm.xlu0 %5391, %v1358
        %v5393 = vpop.permute.xlu0 %5392
        %5395 = vset.pattern.permute.xlu0 7
        %5396 = vperm.xlu0 %5395, %v1359
        %v5397 = vpop.permute.xlu0 %5396
        %5399 = vset.pattern.permute.xlu0 7
        %5400 = vperm.xlu0 %5399, %v1360
        %v5401 = vpop.permute.xlu0 %5400
        %5403 = vset.pattern.permute.xlu0 7
        %5404 = vperm.xlu0 %5403, %v1361
        %v5405 = vpop.permute.xlu0 %5404
        %5407 = vset.pattern.permute.xlu0 7
        %5408 = vperm.xlu0 %5407, %v1362
        %v5409 = vpop.permute.xlu0 %5408
        %5411 = vset.pattern.permute.xlu0 7
        %5412 = vperm.xlu0 %5411, %v1363
        %v5413 = vpop.permute.xlu0 %5412
        %5415 = vset.pattern.permute.xlu0 7
        %5416 = vperm.xlu0 %5415, %v1364
        %v5417 = vpop.permute.xlu0 %5416
        %5419 = vset.pattern.permute.xlu0 7
        %5420 = vperm.xlu0 %5419, %v1365
        %v5421 = vpop.permute.xlu0 %5420
        %5423 = vset.pattern.permute.xlu0 7
        %5424 = vperm.xlu0 %5423, %v1366
        %v5425 = vpop.permute.xlu0 %5424
        %5427 = vset.pattern.permute.xlu0 7
        %5428 = vperm.xlu0 %5427, %v1367
        %v5429 = vpop.permute.xlu0 %5428
        %5431 = vset.pattern.permute.xlu0 7
        %5432 = vperm.xlu0 %5431, %v1368
        %v5433 = vpop.permute.xlu0 %5432
        %5435 = vset.pattern.permute.xlu0 7
        %5436 = vperm.xlu0 %5435, %v1369
        %v5437 = vpop.permute.xlu0 %5436
        %5439 = vset.pattern.permute.xlu0 7
        %5440 = vperm.xlu0 %5439, %v1370
        %v5441 = vpop.permute.xlu0 %5440
        %5443 = vset.pattern.permute.xlu0 7
        %5444 = vperm.xlu0 %5443, %v1371
        %v5445 = vpop.permute.xlu0 %5444
        %v5447 = vmul.f32 %v5255, %v5321
        %v5448 = vmul.f32 %v5256, %v5321
        %v5449 = vmul.f32 %v5257, %v5325
        %v5450 = vmul.f32 %v5258, %v5325
        %v5451 = vmul.f32 %v5259, %v5329
        %v5452 = vmul.f32 %v5260, %v5329
        %v5453 = vmul.f32 %v5261, %v5333
        %v5454 = vmul.f32 %v5262, %v5333
        %v5455 = vmul.f32 %v5263, %v5337
        %v5456 = vmul.f32 %v5264, %v5337
        %v5457 = vmul.f32 %v5265, %v5341
        %v5458 = vmul.f32 %v5266, %v5341
        %v5459 = vmul.f32 %v5267, %v5345
        %v5460 = vmul.f32 %v5268, %v5345
        %v5461 = vmul.f32 %v5269, %v5349
        %v5462 = vmul.f32 %v5270, %v5349
        %v5463 = vmul.f32 %v5271, %v5353
        %v5464 = vmul.f32 %v5272, %v5353
        %v5465 = vmul.f32 %v5273, %v5357
        %v5466 = vmul.f32 %v5274, %v5357
        %v5467 = vmul.f32 %v5275, %v5361
        %v5468 = vmul.f32 %v5276, %v5361
        %v5469 = vmul.f32 %v5277, %v5365
        %v5470 = vmul.f32 %v5278, %v5365
        %v5471 = vmul.f32 %v5279, %v5369
        %v5472 = vmul.f32 %v5280, %v5369
        %v5473 = vmul.f32 %v5281, %v5373
        %v5474 = vmul.f32 %v5282, %v5373
        %v5475 = vmul.f32 %v5283, %v5377
        %v5476 = vmul.f32 %v5284, %v5377
        %v5477 = vmul.f32 %v5285, %v5381
        %v5478 = vmul.f32 %v5286, %v5381
        %v5479 = vmul.f32 %v5287, %v5385
        %v5480 = vmul.f32 %v5288, %v5385
        %v5481 = vmul.f32 %v5289, %v5389
        %v5482 = vmul.f32 %v5290, %v5389
        %v5483 = vmul.f32 %v5291, %v5393
        %v5484 = vmul.f32 %v5292, %v5393
        %v5485 = vmul.f32 %v5293, %v5397
        %v5486 = vmul.f32 %v5294, %v5397
        %v5487 = vmul.f32 %v5295, %v5401
        %v5488 = vmul.f32 %v5296, %v5401
        %v5489 = vmul.f32 %v5297, %v5405
        %v5490 = vmul.f32 %v5298, %v5405
        %v5491 = vmul.f32 %v5299, %v5409
        %v5492 = vmul.f32 %v5300, %v5409
        %v5493 = vmul.f32 %v5301, %v5413
        %v5494 = vmul.f32 %v5302, %v5413
        %v5495 = vmul.f32 %v5303, %v5417
        %v5496 = vmul.f32 %v5304, %v5417
        %v5497 = vmul.f32 %v5305, %v5421
        %v5498 = vmul.f32 %v5306, %v5421
        %v5499 = vmul.f32 %v5307, %v5425
        %v5500 = vmul.f32 %v5308, %v5425
        %v5501 = vmul.f32 %v5309, %v5429
        %v5502 = vmul.f32 %v5310, %v5429
        %v5503 = vmul.f32 %v5311, %v5433
        %v5504 = vmul.f32 %v5312, %v5433
        %v5505 = vmul.f32 %v5313, %v5437
        %v5506 = vmul.f32 %v5314, %v5437
        %v5507 = vmul.f32 %v5315, %v5441
        %v5508 = vmul.f32 %v5316, %v5441
        %v5509 = vmul.f32 %v5317, %v5445
        %v5510 = vmul.f32 %v5318, %v5445
        %v5511 = vadd.f32 %v5447, %v5449
        %v5512 = vadd.f32 %v5511, %v5451
        %v5513 = vadd.f32 %v5512, %v5453
        %v5514 = vadd.f32 %v5513, %v5455
        %v5515 = vadd.f32 %v5514, %v5457
        %v5516 = vadd.f32 %v5515, %v5459
        %v5517 = vadd.f32 %v5516, %v5461
        %v5518 = vadd.f32 %v5517, %v5463
        %v5519 = vadd.f32 %v5518, %v5465
        %v5520 = vadd.f32 %v5519, %v5467
        %v5521 = vadd.f32 %v5520, %v5469
        %v5522 = vadd.f32 %v5521, %v5471
        %v5523 = vadd.f32 %v5522, %v5473
        %v5524 = vadd.f32 %v5523, %v5475
        %v5525 = vadd.f32 %v5524, %v5477
        %v5526 = vadd.f32 %v5525, %v5479
        %v5527 = vadd.f32 %v5526, %v5481
        %v5528 = vadd.f32 %v5527, %v5483
        %v5529 = vadd.f32 %v5528, %v5485
        %v5530 = vadd.f32 %v5529, %v5487
        %v5531 = vadd.f32 %v5530, %v5489
        %v5532 = vadd.f32 %v5531, %v5491
        %v5533 = vadd.f32 %v5532, %v5493
        %v5534 = vadd.f32 %v5533, %v5495
        %v5535 = vadd.f32 %v5534, %v5497
        %v5536 = vadd.f32 %v5535, %v5499
        %v5537 = vadd.f32 %v5536, %v5501
        %v5538 = vadd.f32 %v5537, %v5503
        %v5539 = vadd.f32 %v5538, %v5505
        %v5540 = vadd.f32 %v5539, %v5507
        %v5541 = vadd.f32 %v5540, %v5509
        %v5542 = vrot.slane %v5541, 4
        %v5543 = vadd.f32 %v5541, %v5542
        %v5544 = vrot.slane %v5543, 2
        %v5545 = vadd.f32 %v5543, %v5544
        %v5546 = vrot.slane %v5545, 1
        %v5547 = vadd.f32 %v5545, %v5546
        %v5548 = vadd.f32 %v5448, %v5450
        %v5549 = vadd.f32 %v5548, %v5452
        %v5550 = vadd.f32 %v5549, %v5454
        %v5551 = vadd.f32 %v5550, %v5456
        %v5552 = vadd.f32 %v5551, %v5458
        %v5553 = vadd.f32 %v5552, %v5460
        %v5554 = vadd.f32 %v5553, %v5462
        %v5555 = vadd.f32 %v5554, %v5464
        %v5556 = vadd.f32 %v5555, %v5466
        %v5557 = vadd.f32 %v5556, %v5468
        %v5558 = vadd.f32 %v5557, %v5470
        %v5559 = vadd.f32 %v5558, %v5472
        %v5560 = vadd.f32 %v5559, %v5474
        %v5561 = vadd.f32 %v5560, %v5476
        %v5562 = vadd.f32 %v5561, %v5478
        %v5563 = vadd.f32 %v5562, %v5480
        %v5564 = vadd.f32 %v5563, %v5482
        %v5565 = vadd.f32 %v5564, %v5484
        %v5566 = vadd.f32 %v5565, %v5486
        %v5567 = vadd.f32 %v5566, %v5488
        %v5568 = vadd.f32 %v5567, %v5490
        %v5569 = vadd.f32 %v5568, %v5492
        %v5570 = vadd.f32 %v5569, %v5494
        %v5571 = vadd.f32 %v5570, %v5496
        %v5572 = vadd.f32 %v5571, %v5498
        %v5573 = vadd.f32 %v5572, %v5500
        %v5574 = vadd.f32 %v5573, %v5502
        %v5575 = vadd.f32 %v5574, %v5504
        %v5576 = vadd.f32 %v5575, %v5506
        %v5577 = vadd.f32 %v5576, %v5508
        %v5578 = vadd.f32 %v5577, %v5510
        %v5579 = vrot.slane %v5578, 4
        %v5580 = vadd.f32 %v5578, %v5579
        %v5581 = vrot.slane %v5580, 2
        %v5582 = vadd.f32 %v5580, %v5581
        %v5583 = vrot.slane %v5582, 1
        %v5584 = vadd.f32 %v5582, %v5583
        %s5585 = sld [smem:[#allocation2]]
        %v5586 = vstv %s5585
        %v5587 = vadd.f32 %v5547, %v5586
        %v5588 = vadd.f32 %v5584, %v5586
        %v5591 = vcombine.low %v5587, %v5588
        %v5593 = vunpack.c.l.s4 1966171168
        %v5594 = vunpack.c.0.s8 %v5593
        %v5595 = vlaneseq
        %v5596 = vshrl.u32 %v5595, 7
        %v5597 = vsub.s32 %v5594, %v5596
        %v5598 = vrot.slane %v5591, %v5597
        %v5600 = vunpack.c.l.s4 1966171168
        %v5601 = vunpack.c.0.s8 %v5600
        %v5602 = vlaneseq
        %v5603 = vshrl.u32 %v5602, 7
        %v5604 = vsub.s32 %v5601, %v5603
        %v5605 = vrot.slane %v5598, %v5604
        %v5607 = vlaneseq
        %vm5608 = vcmp.ge.s32.totalorder %v5607, 0
        %vm5609 = vcmp.lt.s32.totalorder %v5607, 256
        %vm5610 = vmand %vm5608, %vm5609
        %5611 = vst.msk [vmem:[%s240] sm:$0x3] %vm5610, %v5605
        %s5612 = smul.u32 2, %s18
        %p5613 = scmp.lt.s32.totalorder %s5612, 3
        %s5614 = scalar_select %p5613, %s5612, 3
        %s5615 = scalar_lea.vmem %s5, %s5614
        // Predicated region
        $region45: #{model_forward.1} parent=39 // pred_check
          %p5616 = pneg %p146
        $region46: #{model_forward.1} parent=39 // pred_check_branch
          %5618 = sbr.rel (%p5616) target = $region48
        $region47: #{model_forward.1} parent=39 // pred_region
          %s5619 = smul.u32 2, %s18
        $region48: #{model_forward.1} parent=39 // pred_fallthru
          _
      $region40: #{model_forward.1} parent=5 // pred_fallthru
        _
      %p5620 = scmp.le.s32.totalorder 2, %s13
      // Predicated region
      $region49: #{model_forward.1} parent=5 // pred_check
        %p5621 = pneg %p5620
      $region50: #{model_forward.1} parent=5 // pred_check_branch
        %5623 = sbr.rel (%p5621) target = $region52
      $region51: #{model_forward.1} parent=5 // pred_region
        %s5624 = ssub.s32 %s13, 2
        // Predicated region
        $region53: #{model_forward.1} parent=51 // pred_check
          %p5625 = pneg %p152
        $region54: #{model_forward.1} parent=51 // pred_check_branch
          %5627 = sbr.rel (%p5625) target = $region56
        $region55: #{model_forward.1} parent=51 // pred_region
          %s5628 = smul.u32 2, %s19
          %p5629 = scmp.lt.s32.totalorder %s5628, 3
          %s5630 = scalar_select %p5629, %s5628, 3
          %s5631 = scalar_lea.vmem %s5, %s5630
        $region56: #{model_forward.1} parent=51 // pred_fallthru
          _
      $region52: #{model_forward.1} parent=5 // pred_fallthru
        _
    $region6: #{model_forward.1} parent=1 // loop_footer
      %s17 = sadd.s32 1, %s13
    $region7: #{model_forward.1} parent=1 // loop_footer_branch
      %12 = sbr.rel target = $region3
    $region8: #{model_forward.1} parent=1 // loop_exit
      _
    %5632 = vsyncpa [#allocation4], 1
    %s5633 = scalar_lea.sflag [#allocation4], 1
    %5634 = vsyncpa %s5633, 1

</llo_original>
